<compile_context>
chip_gen: v5e
topology: v5e:2x2
jax: 0.10.0
libtpu: 0.0.40
codegen_flags: <defaults>
</compile_context>

<pallas_src>
import functools

import jax
import jax.numpy as jnp
from jax.experimental import pallas as pl
from jax.experimental.pallas import tpu as pltpu


def _rmsnorm_kernel(x_ref, w_ref, o_ref, *, eps):
    # x_ref: (TR, D) row tile; w_ref: (1, D) f32 weight; o_ref: (TR, D)
    x = x_ref[...].astype(jnp.float32)
    w = w_ref[...]  # already f32 (pre-cast once in the wrapper)

    # mean(x**2) along the lane (last) dim, keepdim -> (TR, 1)
    ms = jnp.mean(x * x, axis=-1, keepdims=True)

    # Per-row exact reciprocal instead of a per-element divide.  norm = x * r
    # is still exactly 0 wherever x == 0, so the second divide keeps the
    # module's 0/0 -> NaN behavior.  We intentionally do NOT simplify to
    # (ms + eps) * w.
    r = pl.reciprocal(ms + eps, approx=False)   # (TR, 1)
    norm = x * r                                # (TR, D)
    out = (x / norm) * w                        # (TR, D)

    o_ref[...] = out.astype(o_ref.dtype)


def _sublane_multiple(dtype):
    # Sub-32-bit dtypes pack along sublanes: f32 -> 8, bf16 -> 16, int8/fp8 -> 32.
    itemsize = jnp.dtype(dtype).itemsize
    return max(8, 32 // max(1, itemsize))


def _vmem_budget_bytes():
    """Generation-aware scratch budget for the pipelined tiles + temps."""
    try:
        cap = pltpu.get_tpu_info().vmem_capacity_bytes
    except Exception:
        cap = 64 * 1024 * 1024  # conservative fallback (v7x per-TC VMEM)
    if cap >= 128 * 1024 * 1024:      # v5e / v6e (128 MiB physical)
        return 24 * 1024 * 1024, cap
    return 16 * 1024 * 1024, cap      # v7x (64 MiB physical per TC)


def _pick_row_tile(rows, dmodel, dtype, vmem_budget_bytes,
                   target_tile_bytes=3 * 1024 * 1024):
    """Row tile: dtype-sublane multiple, ~1-4 MiB x tiles, >=2 grid steps."""
    itemsize = jnp.dtype(dtype).itemsize
    sub = _sublane_multiple(dtype)
    if rows <= sub:
        return rows  # block equals full first dim -> always legal

    # Live VMEM per tile row:
    #   double-buffered input + double-buffered output (input dtype)
    #   + ~3 f32 elementwise temps (x_f32, norm, pre-cast out)
    per_row_bytes = 4 * dmodel * itemsize + 3 * dmodel * 4
    by_budget = max(sub, vmem_budget_bytes // max(1, per_row_bytes))
    # ~3 MiB x tiles: measured ~86% of HBM roofline at 1-4 MiB, amortizes the
    # ~0.35 us per-grid-step overhead.
    by_target = max(sub, target_tile_bytes // max(1, dmodel * itemsize))

    tr = min(rows, by_budget, by_target)
    # Keep >= 2 row tiles so the "parallel" axis can shard across both
    # TensorCores on v7x (no effect on single-TC v5e/v6e correctness).
    if tr > (rows + 1) // 2 and rows >= 2 * sub:
        tr = (rows + 1) // 2
    tr = max(sub, (tr // sub) * sub)
    return tr


def rms_norm(x, weight, eps=1e-05, row_tile=None):
    """x: (rows, dmodel); weight: (dmodel,)."""
    rows, dmodel = x.shape
    itemsize = jnp.dtype(x.dtype).itemsize
    w2d = weight.reshape(1, dmodel).astype(jnp.float32)  # hoist cast out of kernel

    budget, vmem_cap = _vmem_budget_bytes()
    if row_tile is None:
        row_tile = _pick_row_tile(rows, dmodel, x.dtype, budget)
    grid = (pl.cdiv(rows, row_tile),)

    kernel = functools.partial(_rmsnorm_kernel, eps=float(eps))

    cost = pl.CostEstimate(
        flops=5 * rows * dmodel + rows,               # sq, reduce, mul, div, mul (+recip/row)
        transcendentals=0,
        bytes_accessed=2 * rows * dmodel * itemsize + dmodel * 4,
    )

    # Explicit scoped-VMEM limit with headroom over the tiling budget, capped
    # below physical capacity.
    vmem_limit = int(min(vmem_cap, budget + 8 * 1024 * 1024))

    return pl.pallas_call(
        kernel,
        out_shape=jax.ShapeDtypeStruct((rows, dmodel), x.dtype),
        grid_spec=pltpu.PrefetchScalarGridSpec(
            num_scalar_prefetch=0,
            grid=grid,
            in_specs=[
                pl.BlockSpec((row_tile, dmodel), lambda i: (i, 0)),   # x row tile
                pl.BlockSpec((1, dmodel), lambda i: (0, 0)),          # weight (constant block)
            ],
            out_specs=pl.BlockSpec((row_tile, dmodel), lambda i: (i, 0)),
        ),
        compiler_params=pltpu.CompilerParams(
            dimension_semantics=("parallel",),        # row tiles are independent
            vmem_limit_bytes=vmem_limit,
        ),
        cost_estimate=cost,
    )(x, w2d)


def rms_norm_ref(x, weight, eps=1e-05):
    """Pure-JAX reference with identical semantics to the PyTorch module."""
    ms = jnp.mean(x * x, axis=-1, keepdims=True)
    norm = x / (ms + eps)
    return x / norm * weight


if __name__ == "__main__":
    key = jax.random.PRNGKey(0)
    k1, k2 = jax.random.split(key)

    # Lane-dense dmodel (multiple of 128 -> unmasked full-lane stores) with
    # enough rows that the row-tiled grid has >= 2 steps (uses both TCs on v7x).
    rows, dmodel = 2048, 128
    x = jax.random.normal(k1, (rows, dmodel), dtype=jnp.float32)
    weight = jnp.ones((dmodel,), dtype=jnp.float32)  # nn.Parameter(torch.ones(dmodel))

    out = jax.block_until_ready(rms_norm(x, weight))
    ref = rms_norm_ref(x, weight)
    assert out.shape == (rows, dmodel)
    assert jnp.allclose(out, ref, atol=1e-5, rtol=1e-5)

    # The module's literal toy regime (few rows, narrow dmodel); the block
    # then equals the full array dims, which is also legal.
    xs = jax.random.normal(k2, (8, 32), dtype=jnp.float32)
    ws = jnp.ones((32,), dtype=jnp.float32)
    outs = jax.block_until_ready(rms_norm(xs, ws))
    assert jnp.allclose(outs, rms_norm_ref(xs, ws), atol=1e-5, rtol=1e-5)

    print("KERNEL_OK")
</pallas_src>

<mosaic_0001>
module attributes {stable_mosaic.version = 11 : i64} {
  func.func @_rmsnorm_kernel(%arg0: i32, %arg1: memref<1024x128xf32, #tpu.memory_space<vmem>>, %arg2: memref<1x128xf32, #tpu.memory_space<vmem>>, %arg3: memref<1024x128xf32, #tpu.memory_space<vmem>>) attributes {dimension_semantics = [#tpu.dimension_semantics<parallel>], iteration_bounds = array<i64: 2>, scalar_prefetch = 0 : i64, scratch_operands = 0 : i64, tpu.core_type = #tpu.core_type<tc>, window_params = [{transform_indices = @transform_0, window_bounds = array<i64: 1024, 128>}, {pipeline_mode = #tpu.pipeline_mode<synchronous>, transform_indices = @transform_1, window_bounds = array<i64: 1, 128>}, {transform_indices = @transform_2, window_bounds = array<i64: 1024, 128>}]} {
    %c0 = arith.constant 0 : index
    %c0_0 = arith.constant 0 : index
    %0 = vector.load %arg1[%c0, %c0_0] : memref<1024x128xf32, #tpu.memory_space<vmem>>, vector<1024x128xf32>
    %c0_1 = arith.constant 0 : index
    %c0_2 = arith.constant 0 : index
    %1 = vector.load %arg2[%c0_1, %c0_2] : memref<1x128xf32, #tpu.memory_space<vmem>>, vector<1x128xf32>
    %2 = arith.mulf %0, %0 : vector<1024x128xf32>
    %cst = arith.constant dense<0.000000e+00> : vector<1024xf32>
    %3 = vector.multi_reduction <add>, %2, %cst [1] : vector<1024x128xf32> to vector<1024xf32>
    %4 = vector.shape_cast %3 : vector<1024xf32> to vector<1024x1xf32>
    %cst_3 = arith.constant 1.280000e+02 : f32
    %5 = vector.broadcast %cst_3 : f32 to vector<1024x1xf32>
    %6 = arith.divf %4, %5 : vector<1024x1xf32>
    %cst_4 = arith.constant 9.99999974E-6 : f32
    %7 = vector.broadcast %cst_4 : f32 to vector<1024x1xf32>
    %8 = arith.addf %6, %7 : vector<1024x1xf32>
    %9 = tpu.reciprocal %8 : vector<1024x1xf32> -> vector<1024x1xf32>
    %10 = vector.broadcast %9 : vector<1024x1xf32> to vector<1024x128xf32>
    %11 = arith.mulf %0, %10 : vector<1024x128xf32>
    %12 = arith.divf %0, %11 : vector<1024x128xf32>
    %13 = vector.broadcast %1 : vector<1x128xf32> to vector<1024x128xf32>
    %14 = arith.mulf %12, %13 : vector<1024x128xf32>
    %c0_5 = arith.constant 0 : index
    %c0_6 = arith.constant 0 : index
    %15 = vector.load %arg3[%c0_5, %c0_6] : memref<1024x128xf32, #tpu.memory_space<vmem>>, vector<1024x128xf32>
    tpu.vector_store %arg3[%c0_5, %c0_6], %14 {strides = array<i32>} : memref<1024x128xf32, #tpu.memory_space<vmem>>, vector<1024x128xf32>,
    return
  }
  func.func @transform_0(%arg0: i32) -> (i32, i32) {
    %c0_i32 = arith.constant 0 : i32
    %c0_i32_0 = arith.constant 0 : i32
    return %arg0, %c0_i32 : i32, i32
  }
  func.func @transform_1(%arg0: i32) -> (i32, i32) {
    %c0_i32 = arith.constant 0 : i32
    %c0_i32_0 = arith.constant 0 : i32
    %c0_i32_1 = arith.constant 0 : i32
    return %c0_i32, %c0_i32_0 : i32, i32
  }
  func.func @transform_2(%arg0: i32) -> (i32, i32) {
    %c0_i32 = arith.constant 0 : i32
    %c0_i32_0 = arith.constant 0 : i32
    return %arg0, %c0_i32 : i32, i32
  }
}

</mosaic_0001>

<llo_original>
// kernel: tpu_custom_call.1
$region0: #{tpu_custom_call.1}
  #allocation0 [shape = 'u32[]', space=smem, size = 0x4, offset = 0x4, fixed_abs, tag = 'smem constant byte address 0x4 - core index']
  #allocation1 [shape = 'u32[72,128]{1,0:T(1,128)}', space=vmem, size = 0x9000, scoped, tag = 'internal scratch']
  %s0 = inlined_call_operand.hbm [shape: f32[2048,128], index: 0, kind: input, shape index: {}]
  %s1 = inlined_call_operand.hbm [shape: f32[1,128], index: 1, kind: input, shape index: {}]
  %s2 = inlined_call_operand.hbm [shape: f32[2048,128], index: 2, kind: output, shape index: {}]
  %s3 = sld [smem:[#allocation0]]
  $region49: #{tpu_custom_call.1} parent=0
    _
  %s5 = ssub.s32 1, %s3
  %s6 = scalar_select 0, %s5, %s3
  $region1: #{tpu_custom_call.1} parent=0
    #allocation2 [shape = 'u8[1048576]{0}', space=vmem, size = 0x100000, scoped, tag = 'input window, operand 0']
    #allocation3 [shape = 's32[2]{0}', space=sflag, size = 0x8, scoped, tag = 'scoped memory for tpu_custom_call.1']
    #allocation4 [shape = 's32[2]{0}', space=sflag, size = 0x8, scoped, tag = 'scoped memory for tpu_custom_call.1']
    #allocation5 [shape = 'u8[512]{0}', space=vmem, size = 0x400, scoped, tag = 'input window, operand 1, single buffered']
    #allocation6 [shape = 's32[1]{0}', space=sflag, size = 0x4, scoped, tag = 'scoped memory for tpu_custom_call.1']
    #allocation7 [shape = 'u8[1048576]{0}', space=vmem, size = 0x100000, scoped, tag = 'output window, operand 0']
    %7 = vsyncpa [#allocation3], 0
    %s8 = scalar_lea.sflag [#allocation3], 1
    %9 = vsyncpa %s8, 0
    %10 = vsyncpa [#allocation6], 0
    %11 = vsyncpa [#allocation4], 0
    %s12 = scalar_lea.sflag [#allocation4], 1
    %13 = vsyncpa %s12, 0
    loop: start=0, step=1, limit=4
    $region2: #{tpu_custom_call.1} parent=1 // loop_pre_header
      _
    $region3: #{tpu_custom_call.1} parent=1 // loop_header
      %s15 = sphi 0, %s19
      %p16 = scmp.ge.s32.totalorder %s15, 4
      %s25 = sphi 0, %s27
      %s28 = sphi 0, %s25
      %s29 = sphi 0, %s28
      %s45 = sphi 0, %s29
      %s49 = sphi 0, %s49
      %s51 = sphi 0, %s49
      %s52 = sphi 0, %s51
      %s66 = sphi 0, %s52
      %s72 = sphi 0, %s74
      %s75 = sphi 0, %s72
      %s76 = sphi 0, %s75
      %s92 = sphi 0, %s76
    $region4: #{tpu_custom_call.1} parent=1 // loop_header_branch
      %18 = sbr.rel (%p16) target = $region8
    $region5: #{tpu_custom_call.1} parent=1 // loop_body
      %s20 = ssub.s32 %s15, 1
      %s21 = ssub.s32 %s15, 2
      %s22 = sadd.s32 %s15, 1
      %s23 = ssub.s32 %s15, %s22
      %p24 = scmp.eq.s32.totalorder %s23, 0
      %s26 = sadd.s32 %s25, 1
      %s27 = scalar_select %p24, %s25, %s26
      %p30 = pneg %p24
      %p31 = scmp.eq.s32.totalorder %s15, 1
      %p32 = por %p30, %p31
      %p33 = scmp.ne.s32.totalorder %s25, %s28
      %p34 = scmp.eq.s32.totalorder %s15, 0
      %p35 = por %p33, %p34
      %p36 = scmp.ne.s32.totalorder %s25, %s28
      %p37 = scmp.eq.s32.totalorder %s20, 1
      %p38 = por %p36, %p37
      %p39 = scmp.ne.s32.totalorder %s28, %s29
      %p40 = scmp.eq.s32.totalorder %s20, 0
      %p41 = por %p39, %p40
      %p42 = scmp.ne.s32.totalorder %s28, %s29
      %p43 = scmp.eq.s32.totalorder %s21, 1
      %p44 = por %p42, %p43
      %p46 = scmp.ne.s32.totalorder %s29, %s45
      %p47 = scmp.eq.s32.totalorder %s21, 0
      %p48 = por %p46, %p47
      %s50 = sadd.s32 %s49, 1
      %p53 = scmp.eq.s32.totalorder %s15, 1
      %p54 = scmp.ne.s32.totalorder %s49, %s51
      %p55 = scmp.eq.s32.totalorder %s15, 0
      %p56 = por %p54, %p55
      %p57 = scmp.ne.s32.totalorder %s49, %s51
      %p58 = scmp.eq.s32.totalorder %s20, 1
      %p59 = por %p57, %p58
      %p60 = scmp.ne.s32.totalorder %s51, %s52
      %p61 = scmp.eq.s32.totalorder %s20, 0
      %p62 = por %p60, %p61
      %p63 = scmp.ne.s32.totalorder %s51, %s52
      %p64 = scmp.eq.s32.totalorder %s21, 1
      %p65 = por %p63, %p64
      %p67 = scmp.ne.s32.totalorder %s52, %s66
      %p68 = scmp.eq.s32.totalorder %s21, 0
      %p69 = por %p67, %p68
      %s70 = ssub.s32 %s15, %s22
      %p71 = scmp.eq.s32.totalorder %s70, 0
      %s73 = sadd.s32 %s72, 1
      %s74 = scalar_select %p71, %s72, %s73
      %p77 = pneg %p71
      %p78 = scmp.eq.s32.totalorder %s15, 1
      %p79 = por %p77, %p78
      %p80 = scmp.ne.s32.totalorder %s72, %s75
      %p81 = scmp.eq.s32.totalorder %s15, 0
      %p82 = por %p80, %p81
      %p83 = scmp.ne.s32.totalorder %s72, %s75
      %p84 = scmp.eq.s32.totalorder %s20, 1
      %p85 = por %p83, %p84
      %p86 = scmp.ne.s32.totalorder %s75, %s76
      %p87 = scmp.eq.s32.totalorder %s20, 0
      %p88 = por %p86, %p87
      %p89 = scmp.ne.s32.totalorder %s75, %s76
      %p90 = scmp.eq.s32.totalorder %s21, 1
      %p91 = por %p89, %p90
      %p93 = scmp.ne.s32.totalorder %s76, %s92
      %p94 = scmp.eq.s32.totalorder %s21, 0
      %p95 = por %p93, %p94
      %p96 = scmp.le.s32.totalorder 1, %s15
      %p97 = scmp.lt.s32.totalorder %s15, 3
      %p98 = pnand %p96, %p97
      %p99 = pneg %p98
      // Predicated region
      $region9: #{tpu_custom_call.1} parent=5 // pred_check
        _
      $region10: #{tpu_custom_call.1} parent=5 // pred_check_branch
        %101 = sbr.rel (%p98) target = $region12
      $region11: #{tpu_custom_call.1} parent=5 // pred_region
        %s102 = ssub.s32 %s15, 1
        // Predicated region
        $region13: #{tpu_custom_call.1} parent=11 // pred_check
          %p103 = pneg %p62
        $region14: #{tpu_custom_call.1} parent=11 // pred_check_branch
          %105 = sbr.rel (%p103) target = $region16
        $region15: #{tpu_custom_call.1} parent=11 // pred_region
          %107 = vsyncadd [#allocation6], 0
          %s109 = sshll.u32 %s1, 4
          %s110 = int_to_ptr.hbm [resolvable:$true] %s109
          %s111 = sshll.u32 [#allocation5], 4
          %s112 = int_to_ptr.vmem [resolvable:$true] %s111
          %114 = dma.hbm_to_vmem [thread:$0]  %s110, 16, %s112, [#allocation6]
        $region16: #{tpu_custom_call.1} parent=11 // pred_fallthru
          _
      $region12: #{tpu_custom_call.1} parent=5 // pred_fallthru
        _
      %p115 = scmp.lt.s32.totalorder %s15, 2
      // Predicated region
      $region17: #{tpu_custom_call.1} parent=5 // pred_check
        %p116 = pneg %p115
      $region18: #{tpu_custom_call.1} parent=5 // pred_check_branch
        %118 = sbr.rel (%p116) target = $region20
      $region19: #{tpu_custom_call.1} parent=5 // pred_region
        // Predicated region
        $region21: #{tpu_custom_call.1} parent=19 // pred_check
          %p119 = pneg %p35
        $region22: #{tpu_custom_call.1} parent=19 // pred_check_branch
          %121 = sbr.rel (%p119) target = $region24
        $region23: #{tpu_custom_call.1} parent=19 // pred_region
          %s122 = sand.u32 %s25, 1
          %s123 = scalar_lea.sflag [#allocation3], %s122
          %s124 = sand.u32 %s25, 1
          %s125 = smul.addr %s124, 1024
          %s126 = scalar_lea.vmem [#allocation2], %s125
          %s127 = smul.u32 128, %s15
          %129 = vsyncadd %s123, 0
          %s130 = smul.addr %s127, 8
          %s131 = scalar_lea.hbm %s0, %s130
          %s132 = sshll.u32 %s131, 4
          %s133 = int_to_ptr.hbm [resolvable:$true] %s132
          %s134 = sshll.u32 %s126, 4
          %s135 = int_to_ptr.vmem [resolvable:$true] %s134
          %140 = dma.hbm_to_vmem [thread:$0]  %s133, 16384, %s135, %s123, 128, 128, 8
        $region24: #{tpu_custom_call.1} parent=19 // pred_fallthru
          _
      $region20: #{tpu_custom_call.1} parent=5 // pred_fallthru
        _
      %p141 = scmp.le.s32.totalorder 1, %s15
      %p142 = scmp.lt.s32.totalorder %s15, 3
      %p143 = pnand %p141, %p142
      %p144 = pneg %p143
      // Predicated region
      $region25: #{tpu_custom_call.1} parent=5 // pred_check
        _
      $region26: #{tpu_custom_call.1} parent=5 // pred_check_branch
        %146 = sbr.rel (%p143) target = $region28
      $region27: #{tpu_custom_call.1} parent=5 // pred_region
        %s147 = ssub.s32 %s15, 1
        %s148 = sand.u32 %s28, 1
        %s149 = scalar_lea.sflag [#allocation3], %s148
        %s150 = sand.u32 %s28, 1
        %s151 = smul.addr %s150, 1024
        %s152 = scalar_lea.vmem [#allocation2], %s151
        // Predicated region
        $region29: #{tpu_custom_call.1} parent=27 // pred_check
          %p153 = pneg %p41
        $region30: #{tpu_custom_call.1} parent=27 // pred_check_branch
          %155 = sbr.rel (%p153) target = $region32
        $region31: #{tpu_custom_call.1} parent=27 // pred_region
          %157 = dma.done %s149, 16384
        $region32: #{tpu_custom_call.1} parent=27 // pred_fallthru
          _
        // Predicated region
        $region33: #{tpu_custom_call.1} parent=27 // pred_check
          %p158 = pneg %p62
        $region34: #{tpu_custom_call.1} parent=27 // pred_check_branch
          %160 = sbr.rel (%p158) target = $region36
        $region35: #{tpu_custom_call.1} parent=27 // pred_region
          %162 = dma.done [#allocation6], 16
        $region36: #{tpu_custom_call.1} parent=27 // pred_fallthru
          _
        %s163 = sand.u32 %s28, 1
        %s164 = scalar_lea.sflag [#allocation3], %s163
        %s165 = sand.u32 %s28, 1
        %s166 = smul.addr %s165, 1024
        %s167 = scalar_lea.vmem [#allocation2], %s166
        %p168 = pneg %p41
        %p169 = pneg %p38
        %p170 = pneg %p62
        %p171 = pneg %p59
        %p172 = pneg %p88
        %p173 = pneg %p85
        %s174 = sand.u32 %s75, 1
        %s175 = scalar_lea.sflag [#allocation4], %s174
        %s176 = sand.u32 %s75, 1
        %s177 = smul.addr %s176, 1024
        %s178 = scalar_lea.vmem [#allocation7], %s177
        %s179 = smul.u32 128, %s20
        %s180 = smul.u32 128, %s20
        %v181 = vld [vmem:[%s152] sm:$0xff]
        %v182 = vld [vmem:[%s152 + $0x8] sm:$0xff]
        %v183 = vld [vmem:[%s152 + $0x10] sm:$0xff]
        %v184 = vld [vmem:[%s152 + $0x18] sm:$0xff]
        %v185 = vld [vmem:[%s152 + $0x20] sm:$0xff]
        %v186 = vld [vmem:[%s152 + $0x28] sm:$0xff]
        %v187 = vld [vmem:[%s152 + $0x30] sm:$0xff]
        %v188 = vld [vmem:[%s152 + $0x38] sm:$0xff]
        %v189 = vld [vmem:[%s152 + $0x40] sm:$0xff]
        %v190 = vld [vmem:[%s152 + $0x48] sm:$0xff]
        %v191 = vld [vmem:[%s152 + $0x50] sm:$0xff]
        %v192 = vld [vmem:[%s152 + $0x58] sm:$0xff]
        %v193 = vld [vmem:[%s152 + $0x60] sm:$0xff]
        %v194 = vld [vmem:[%s152 + $0x68] sm:$0xff]
        %v195 = vld [vmem:[%s152 + $0x70] sm:$0xff]
        %v196 = vld [vmem:[%s152 + $0x78] sm:$0xff]
        %v197 = vld [vmem:[%s152 + $0x80] sm:$0xff]
        %v198 = vld [vmem:[%s152 + $0x88] sm:$0xff]
        %v199 = vld [vmem:[%s152 + $0x90] sm:$0xff]
        %v200 = vld [vmem:[%s152 + $0x98] sm:$0xff]
        %v201 = vld [vmem:[%s152 + $0xa0] sm:$0xff]
        %v202 = vld [vmem:[%s152 + $0xa8] sm:$0xff]
        %v203 = vld [vmem:[%s152 + $0xb0] sm:$0xff]
        %v204 = vld [vmem:[%s152 + $0xb8] sm:$0xff]
        %v205 = vld [vmem:[%s152 + $0xc0] sm:$0xff]
        %v206 = vld [vmem:[%s152 + $0xc8] sm:$0xff]
        %v207 = vld [vmem:[%s152 + $0xd0] sm:$0xff]
        %v208 = vld [vmem:[%s152 + $0xd8] sm:$0xff]
        %v209 = vld [vmem:[%s152 + $0xe0] sm:$0xff]
        %v210 = vld [vmem:[%s152 + $0xe8] sm:$0xff]
        %v211 = vld [vmem:[%s152 + $0xf0] sm:$0xff]
        %v212 = vld [vmem:[%s152 + $0xf8] sm:$0xff]
        %v213 = vld [vmem:[%s152 + $0x100] sm:$0xff]
        %v214 = vld [vmem:[%s152 + $0x108] sm:$0xff]
        %v215 = vld [vmem:[%s152 + $0x110] sm:$0xff]
        %v216 = vld [vmem:[%s152 + $0x118] sm:$0xff]
        %v217 = vld [vmem:[%s152 + $0x120] sm:$0xff]
        %v218 = vld [vmem:[%s152 + $0x128] sm:$0xff]
        %v219 = vld [vmem:[%s152 + $0x130] sm:$0xff]
        %v220 = vld [vmem:[%s152 + $0x138] sm:$0xff]
        %v221 = vld [vmem:[%s152 + $0x140] sm:$0xff]
        %v222 = vld [vmem:[%s152 + $0x148] sm:$0xff]
        %v223 = vld [vmem:[%s152 + $0x150] sm:$0xff]
        %v224 = vld [vmem:[%s152 + $0x158] sm:$0xff]
        %v225 = vld [vmem:[%s152 + $0x160] sm:$0xff]
        %v226 = vld [vmem:[%s152 + $0x168] sm:$0xff]
        %v227 = vld [vmem:[%s152 + $0x170] sm:$0xff]
        %v228 = vld [vmem:[%s152 + $0x178] sm:$0xff]
        %v229 = vld [vmem:[%s152 + $0x180] sm:$0xff]
        %v230 = vld [vmem:[%s152 + $0x188] sm:$0xff]
        %v231 = vld [vmem:[%s152 + $0x190] sm:$0xff]
        %v232 = vld [vmem:[%s152 + $0x198] sm:$0xff]
        %v233 = vld [vmem:[%s152 + $0x1a0] sm:$0xff]
        %v234 = vld [vmem:[%s152 + $0x1a8] sm:$0xff]
        %v235 = vld [vmem:[%s152 + $0x1b0] sm:$0xff]
        %v236 = vld [vmem:[%s152 + $0x1b8] sm:$0xff]
        %v237 = vld [vmem:[%s152 + $0x1c0] sm:$0xff]
        %v238 = vld [vmem:[%s152 + $0x1c8] sm:$0xff]
        %v239 = vld [vmem:[%s152 + $0x1d0] sm:$0xff]
        %v240 = vld [vmem:[%s152 + $0x1d8] sm:$0xff]
        %v241 = vld [vmem:[%s152 + $0x1e0] sm:$0xff]
        %v242 = vld [vmem:[%s152 + $0x1e8] sm:$0xff]
        %v243 = vld [vmem:[%s152 + $0x1f0] sm:$0xff]
        %v244 = vld [vmem:[%s152 + $0x1f8] sm:$0xff]
        %v245 = vld [vmem:[%s152 + $0x200] sm:$0xff]
        %v246 = vld [vmem:[%s152 + $0x208] sm:$0xff]
        %v247 = vld [vmem:[%s152 + $0x210] sm:$0xff]
        %v248 = vld [vmem:[%s152 + $0x218] sm:$0xff]
        %v249 = vld [vmem:[%s152 + $0x220] sm:$0xff]
        %v250 = vld [vmem:[%s152 + $0x228] sm:$0xff]
        %v251 = vld [vmem:[%s152 + $0x230] sm:$0xff]
        %v252 = vld [vmem:[%s152 + $0x238] sm:$0xff]
        %v253 = vld [vmem:[%s152 + $0x240] sm:$0xff]
        %v254 = vld [vmem:[%s152 + $0x248] sm:$0xff]
        %v255 = vld [vmem:[%s152 + $0x250] sm:$0xff]
        %v256 = vld [vmem:[%s152 + $0x258] sm:$0xff]
        %v257 = vld [vmem:[%s152 + $0x260] sm:$0xff]
        %v258 = vld [vmem:[%s152 + $0x268] sm:$0xff]
        %v259 = vld [vmem:[%s152 + $0x270] sm:$0xff]
        %v260 = vld [vmem:[%s152 + $0x278] sm:$0xff]
        %v261 = vld [vmem:[%s152 + $0x280] sm:$0xff]
        %v262 = vld [vmem:[%s152 + $0x288] sm:$0xff]
        %v263 = vld [vmem:[%s152 + $0x290] sm:$0xff]
        %v264 = vld [vmem:[%s152 + $0x298] sm:$0xff]
        %v265 = vld [vmem:[%s152 + $0x2a0] sm:$0xff]
        %v266 = vld [vmem:[%s152 + $0x2a8] sm:$0xff]
        %v267 = vld [vmem:[%s152 + $0x2b0] sm:$0xff]
        %v268 = vld [vmem:[%s152 + $0x2b8] sm:$0xff]
        %v269 = vld [vmem:[%s152 + $0x2c0] sm:$0xff]
        %v270 = vld [vmem:[%s152 + $0x2c8] sm:$0xff]
        %v271 = vld [vmem:[%s152 + $0x2d0] sm:$0xff]
        %v272 = vld [vmem:[%s152 + $0x2d8] sm:$0xff]
        %v273 = vld [vmem:[%s152 + $0x2e0] sm:$0xff]
        %v274 = vld [vmem:[%s152 + $0x2e8] sm:$0xff]
        %v275 = vld [vmem:[%s152 + $0x2f0] sm:$0xff]
        %v276 = vld [vmem:[%s152 + $0x2f8] sm:$0xff]
        %v277 = vld [vmem:[%s152 + $0x300] sm:$0xff]
        %v278 = vld [vmem:[%s152 + $0x308] sm:$0xff]
        %v279 = vld [vmem:[%s152 + $0x310] sm:$0xff]
        %v280 = vld [vmem:[%s152 + $0x318] sm:$0xff]
        %v281 = vld [vmem:[%s152 + $0x320] sm:$0xff]
        %v282 = vld [vmem:[%s152 + $0x328] sm:$0xff]
        %v283 = vld [vmem:[%s152 + $0x330] sm:$0xff]
        %v284 = vld [vmem:[%s152 + $0x338] sm:$0xff]
        %v285 = vld [vmem:[%s152 + $0x340] sm:$0xff]
        %v286 = vld [vmem:[%s152 + $0x348] sm:$0xff]
        %v287 = vld [vmem:[%s152 + $0x350] sm:$0xff]
        %v288 = vld [vmem:[%s152 + $0x358] sm:$0xff]
        %v289 = vld [vmem:[%s152 + $0x360] sm:$0xff]
        %v290 = vld [vmem:[%s152 + $0x368] sm:$0xff]
        %v291 = vld [vmem:[%s152 + $0x370] sm:$0xff]
        %v292 = vld [vmem:[%s152 + $0x378] sm:$0xff]
        %v293 = vld [vmem:[%s152 + $0x380] sm:$0xff]
        %v294 = vld [vmem:[%s152 + $0x388] sm:$0xff]
        %v295 = vld [vmem:[%s152 + $0x390] sm:$0xff]
        %v296 = vld [vmem:[%s152 + $0x398] sm:$0xff]
        %v297 = vld [vmem:[%s152 + $0x3a0] sm:$0xff]
        %v298 = vld [vmem:[%s152 + $0x3a8] sm:$0xff]
        %v299 = vld [vmem:[%s152 + $0x3b0] sm:$0xff]
        %v300 = vld [vmem:[%s152 + $0x3b8] sm:$0xff]
        %v301 = vld [vmem:[%s152 + $0x3c0] sm:$0xff]
        %v302 = vld [vmem:[%s152 + $0x3c8] sm:$0xff]
        %v303 = vld [vmem:[%s152 + $0x3d0] sm:$0xff]
        %v304 = vld [vmem:[%s152 + $0x3d8] sm:$0xff]
        %v305 = vld [vmem:[%s152 + $0x3e0] sm:$0xff]
        %v306 = vld [vmem:[%s152 + $0x3e8] sm:$0xff]
        %v307 = vld [vmem:[%s152 + $0x3f0] sm:$0xff]
        %v308 = vld [vmem:[%s152 + $0x3f8] sm:$0xff]
        %v309 = vld [vmem:[#allocation5] sm:$0x1]
        %v310 = vmul.f32 %v181, %v181
        %v311 = vmul.f32 %v182, %v182
        %v312 = vmul.f32 %v183, %v183
        %v313 = vmul.f32 %v184, %v184
        %v314 = vmul.f32 %v185, %v185
        %v315 = vmul.f32 %v186, %v186
        %v316 = vmul.f32 %v187, %v187
        %v317 = vmul.f32 %v188, %v188
        %v318 = vmul.f32 %v189, %v189
        %v319 = vmul.f32 %v190, %v190
        %v320 = vmul.f32 %v191, %v191
        %v321 = vmul.f32 %v192, %v192
        %v322 = vmul.f32 %v193, %v193
        %v323 = vmul.f32 %v194, %v194
        %v324 = vmul.f32 %v195, %v195
        %v325 = vmul.f32 %v196, %v196
        %v326 = vmul.f32 %v197, %v197
        %v327 = vmul.f32 %v198, %v198
        %v328 = vmul.f32 %v199, %v199
        %v329 = vmul.f32 %v200, %v200
        %v330 = vmul.f32 %v201, %v201
        %v331 = vmul.f32 %v202, %v202
        %v332 = vmul.f32 %v203, %v203
        %v333 = vmul.f32 %v204, %v204
        %v334 = vmul.f32 %v205, %v205
        %v335 = vmul.f32 %v206, %v206
        %v336 = vmul.f32 %v207, %v207
        %v337 = vmul.f32 %v208, %v208
        %v338 = vmul.f32 %v209, %v209
        %v339 = vmul.f32 %v210, %v210
        %v340 = vmul.f32 %v211, %v211
        %v341 = vmul.f32 %v212, %v212
        %v342 = vmul.f32 %v213, %v213
        %v343 = vmul.f32 %v214, %v214
        %v344 = vmul.f32 %v215, %v215
        %v345 = vmul.f32 %v216, %v216
        %v346 = vmul.f32 %v217, %v217
        %v347 = vmul.f32 %v218, %v218
        %v348 = vmul.f32 %v219, %v219
        %v349 = vmul.f32 %v220, %v220
        %v350 = vmul.f32 %v221, %v221
        %v351 = vmul.f32 %v222, %v222
        %v352 = vmul.f32 %v223, %v223
        %v353 = vmul.f32 %v224, %v224
        %v354 = vmul.f32 %v225, %v225
        %v355 = vmul.f32 %v226, %v226
        %v356 = vmul.f32 %v227, %v227
        %v357 = vmul.f32 %v228, %v228
        %v358 = vmul.f32 %v229, %v229
        %v359 = vmul.f32 %v230, %v230
        %v360 = vmul.f32 %v231, %v231
        %v361 = vmul.f32 %v232, %v232
        %v362 = vmul.f32 %v233, %v233
        %v363 = vmul.f32 %v234, %v234
        %v364 = vmul.f32 %v235, %v235
        %v365 = vmul.f32 %v236, %v236
        %v366 = vmul.f32 %v237, %v237
        %v367 = vmul.f32 %v238, %v238
        %v368 = vmul.f32 %v239, %v239
        %v369 = vmul.f32 %v240, %v240
        %v370 = vmul.f32 %v241, %v241
        %v371 = vmul.f32 %v242, %v242
        %v372 = vmul.f32 %v243, %v243
        %v373 = vmul.f32 %v244, %v244
        %v374 = vmul.f32 %v245, %v245
        %v375 = vmul.f32 %v246, %v246
        %v376 = vmul.f32 %v247, %v247
        %v377 = vmul.f32 %v248, %v248
        %v378 = vmul.f32 %v249, %v249
        %v379 = vmul.f32 %v250, %v250
        %v380 = vmul.f32 %v251, %v251
        %v381 = vmul.f32 %v252, %v252
        %v382 = vmul.f32 %v253, %v253
        %v383 = vmul.f32 %v254, %v254
        %v384 = vmul.f32 %v255, %v255
        %v385 = vmul.f32 %v256, %v256
        %v386 = vmul.f32 %v257, %v257
        %v387 = vmul.f32 %v258, %v258
        %v388 = vmul.f32 %v259, %v259
        %v389 = vmul.f32 %v260, %v260
        %v390 = vmul.f32 %v261, %v261
        %v391 = vmul.f32 %v262, %v262
        %v392 = vmul.f32 %v263, %v263
        %v393 = vmul.f32 %v264, %v264
        %v394 = vmul.f32 %v265, %v265
        %v395 = vmul.f32 %v266, %v266
        %v396 = vmul.f32 %v267, %v267
        %v397 = vmul.f32 %v268, %v268
        %v398 = vmul.f32 %v269, %v269
        %v399 = vmul.f32 %v270, %v270
        %v400 = vmul.f32 %v271, %v271
        %v401 = vmul.f32 %v272, %v272
        %v402 = vmul.f32 %v273, %v273
        %v403 = vmul.f32 %v274, %v274
        %v404 = vmul.f32 %v275, %v275
        %v405 = vmul.f32 %v276, %v276
        %v406 = vmul.f32 %v277, %v277
        %v407 = vmul.f32 %v278, %v278
        %v408 = vmul.f32 %v279, %v279
        %v409 = vmul.f32 %v280, %v280
        %v410 = vmul.f32 %v281, %v281
        %v411 = vmul.f32 %v282, %v282
        %v412 = vmul.f32 %v283, %v283
        %v413 = vmul.f32 %v284, %v284
        %v414 = vmul.f32 %v285, %v285
        %v415 = vmul.f32 %v286, %v286
        %v416 = vmul.f32 %v287, %v287
        %v417 = vmul.f32 %v288, %v288
        %v418 = vmul.f32 %v289, %v289
        %v419 = vmul.f32 %v290, %v290
        %v420 = vmul.f32 %v291, %v291
        %v421 = vmul.f32 %v292, %v292
        %v422 = vmul.f32 %v293, %v293
        %v423 = vmul.f32 %v294, %v294
        %v424 = vmul.f32 %v295, %v295
        %v425 = vmul.f32 %v296, %v296
        %v426 = vmul.f32 %v297, %v297
        %v427 = vmul.f32 %v298, %v298
        %v428 = vmul.f32 %v299, %v299
        %v429 = vmul.f32 %v300, %v300
        %v430 = vmul.f32 %v301, %v301
        %v431 = vmul.f32 %v302, %v302
        %v432 = vmul.f32 %v303, %v303
        %v433 = vmul.f32 %v304, %v304
        %v434 = vmul.f32 %v305, %v305
        %v435 = vmul.f32 %v306, %v306
        %v436 = vmul.f32 %v307, %v307
        %v437 = vmul.f32 %v308, %v308
        %438 = vadd.xlane.f32.xlu0 %v310
        %v439 = vpop.xlane.xlu0 %438
        %440 = vadd.xlane.f32.xlu0 %v311
        %v441 = vpop.xlane.xlu0 %440
        %442 = vadd.xlane.f32.xlu0 %v312
        %v443 = vpop.xlane.xlu0 %442
        %444 = vadd.xlane.f32.xlu0 %v313
        %v445 = vpop.xlane.xlu0 %444
        %446 = vadd.xlane.f32.xlu0 %v314
        %v447 = vpop.xlane.xlu0 %446
        %448 = vadd.xlane.f32.xlu0 %v315
        %v449 = vpop.xlane.xlu0 %448
        %450 = vadd.xlane.f32.xlu0 %v316
        %v451 = vpop.xlane.xlu0 %450
        %452 = vadd.xlane.f32.xlu0 %v317
        %v453 = vpop.xlane.xlu0 %452
        %454 = vadd.xlane.f32.xlu0 %v318
        %v455 = vpop.xlane.xlu0 %454
        %456 = vadd.xlane.f32.xlu0 %v319
        %v457 = vpop.xlane.xlu0 %456
        %458 = vadd.xlane.f32.xlu0 %v320
        %v459 = vpop.xlane.xlu0 %458
        %460 = vadd.xlane.f32.xlu0 %v321
        %v461 = vpop.xlane.xlu0 %460
        %462 = vadd.xlane.f32.xlu0 %v322
        %v463 = vpop.xlane.xlu0 %462
        %464 = vadd.xlane.f32.xlu0 %v323
        %v465 = vpop.xlane.xlu0 %464
        %466 = vadd.xlane.f32.xlu0 %v324
        %v467 = vpop.xlane.xlu0 %466
        %468 = vadd.xlane.f32.xlu0 %v325
        %v469 = vpop.xlane.xlu0 %468
        %470 = vadd.xlane.f32.xlu0 %v326
        %v471 = vpop.xlane.xlu0 %470
        %472 = vadd.xlane.f32.xlu0 %v327
        %v473 = vpop.xlane.xlu0 %472
        %474 = vadd.xlane.f32.xlu0 %v328
        %v475 = vpop.xlane.xlu0 %474
        %476 = vadd.xlane.f32.xlu0 %v329
        %v477 = vpop.xlane.xlu0 %476
        %478 = vadd.xlane.f32.xlu0 %v330
        %v479 = vpop.xlane.xlu0 %478
        %480 = vadd.xlane.f32.xlu0 %v331
        %v481 = vpop.xlane.xlu0 %480
        %482 = vadd.xlane.f32.xlu0 %v332
        %v483 = vpop.xlane.xlu0 %482
        %484 = vadd.xlane.f32.xlu0 %v333
        %v485 = vpop.xlane.xlu0 %484
        %486 = vadd.xlane.f32.xlu0 %v334
        %v487 = vpop.xlane.xlu0 %486
        %488 = vadd.xlane.f32.xlu0 %v335
        %v489 = vpop.xlane.xlu0 %488
        %490 = vadd.xlane.f32.xlu0 %v336
        %v491 = vpop.xlane.xlu0 %490
        %492 = vadd.xlane.f32.xlu0 %v337
        %v493 = vpop.xlane.xlu0 %492
        %494 = vadd.xlane.f32.xlu0 %v338
        %v495 = vpop.xlane.xlu0 %494
        %496 = vadd.xlane.f32.xlu0 %v339
        %v497 = vpop.xlane.xlu0 %496
        %498 = vadd.xlane.f32.xlu0 %v340
        %v499 = vpop.xlane.xlu0 %498
        %500 = vadd.xlane.f32.xlu0 %v341
        %v501 = vpop.xlane.xlu0 %500
        %502 = vadd.xlane.f32.xlu0 %v342
        %v503 = vpop.xlane.xlu0 %502
        %504 = vadd.xlane.f32.xlu0 %v343
        %v505 = vpop.xlane.xlu0 %504
        %506 = vadd.xlane.f32.xlu0 %v344
        %v507 = vpop.xlane.xlu0 %506
        %508 = vadd.xlane.f32.xlu0 %v345
        %v509 = vpop.xlane.xlu0 %508
        %510 = vadd.xlane.f32.xlu0 %v346
        %v511 = vpop.xlane.xlu0 %510
        %512 = vadd.xlane.f32.xlu0 %v347
        %v513 = vpop.xlane.xlu0 %512
        %514 = vadd.xlane.f32.xlu0 %v348
        %v515 = vpop.xlane.xlu0 %514
        %516 = vadd.xlane.f32.xlu0 %v349
        %v517 = vpop.xlane.xlu0 %516
        %518 = vadd.xlane.f32.xlu0 %v350
        %v519 = vpop.xlane.xlu0 %518
        %520 = vadd.xlane.f32.xlu0 %v351
        %v521 = vpop.xlane.xlu0 %520
        %522 = vadd.xlane.f32.xlu0 %v352
        %v523 = vpop.xlane.xlu0 %522
        %524 = vadd.xlane.f32.xlu0 %v353
        %v525 = vpop.xlane.xlu0 %524
        %526 = vadd.xlane.f32.xlu0 %v354
        %v527 = vpop.xlane.xlu0 %526
        %528 = vadd.xlane.f32.xlu0 %v355
        %v529 = vpop.xlane.xlu0 %528
        %530 = vadd.xlane.f32.xlu0 %v356
        %v531 = vpop.xlane.xlu0 %530
        %532 = vadd.xlane.f32.xlu0 %v357
        %v533 = vpop.xlane.xlu0 %532
        %534 = vadd.xlane.f32.xlu0 %v358
        %v535 = vpop.xlane.xlu0 %534
        %536 = vadd.xlane.f32.xlu0 %v359
        %v537 = vpop.xlane.xlu0 %536
        %538 = vadd.xlane.f32.xlu0 %v360
        %v539 = vpop.xlane.xlu0 %538
        %540 = vadd.xlane.f32.xlu0 %v361
        %v541 = vpop.xlane.xlu0 %540
        %542 = vadd.xlane.f32.xlu0 %v362
        %v543 = vpop.xlane.xlu0 %542
        %544 = vadd.xlane.f32.xlu0 %v363
        %v545 = vpop.xlane.xlu0 %544
        %546 = vadd.xlane.f32.xlu0 %v364
        %v547 = vpop.xlane.xlu0 %546
        %548 = vadd.xlane.f32.xlu0 %v365
        %v549 = vpop.xlane.xlu0 %548
        %550 = vadd.xlane.f32.xlu0 %v366
        %v551 = vpop.xlane.xlu0 %550
        %552 = vadd.xlane.f32.xlu0 %v367
        %v553 = vpop.xlane.xlu0 %552
        %554 = vadd.xlane.f32.xlu0 %v368
        %v555 = vpop.xlane.xlu0 %554
        %556 = vadd.xlane.f32.xlu0 %v369
        %v557 = vpop.xlane.xlu0 %556
        %558 = vadd.xlane.f32.xlu0 %v370
        %v559 = vpop.xlane.xlu0 %558
        %560 = vadd.xlane.f32.xlu0 %v371
        %v561 = vpop.xlane.xlu0 %560
        %562 = vadd.xlane.f32.xlu0 %v372
        %v563 = vpop.xlane.xlu0 %562
        %564 = vadd.xlane.f32.xlu0 %v373
        %v565 = vpop.xlane.xlu0 %564
        %566 = vadd.xlane.f32.xlu0 %v374
        %v567 = vpop.xlane.xlu0 %566
        %568 = vadd.xlane.f32.xlu0 %v375
        %v569 = vpop.xlane.xlu0 %568
        %570 = vadd.xlane.f32.xlu0 %v376
        %v571 = vpop.xlane.xlu0 %570
        %572 = vadd.xlane.f32.xlu0 %v377
        %v573 = vpop.xlane.xlu0 %572
        %574 = vadd.xlane.f32.xlu0 %v378
        %v575 = vpop.xlane.xlu0 %574
        %576 = vadd.xlane.f32.xlu0 %v379
        %v577 = vpop.xlane.xlu0 %576
        %578 = vadd.xlane.f32.xlu0 %v380
        %v579 = vpop.xlane.xlu0 %578
        %580 = vadd.xlane.f32.xlu0 %v381
        %v581 = vpop.xlane.xlu0 %580
        %582 = vadd.xlane.f32.xlu0 %v382
        %v583 = vpop.xlane.xlu0 %582
        %584 = vadd.xlane.f32.xlu0 %v383
        %v585 = vpop.xlane.xlu0 %584
        %586 = vadd.xlane.f32.xlu0 %v384
        %v587 = vpop.xlane.xlu0 %586
        %588 = vadd.xlane.f32.xlu0 %v385
        %v589 = vpop.xlane.xlu0 %588
        %590 = vadd.xlane.f32.xlu0 %v386
        %v591 = vpop.xlane.xlu0 %590
        %592 = vadd.xlane.f32.xlu0 %v387
        %v593 = vpop.xlane.xlu0 %592
        %594 = vadd.xlane.f32.xlu0 %v388
        %v595 = vpop.xlane.xlu0 %594
        %596 = vadd.xlane.f32.xlu0 %v389
        %v597 = vpop.xlane.xlu0 %596
        %598 = vadd.xlane.f32.xlu0 %v390
        %v599 = vpop.xlane.xlu0 %598
        %600 = vadd.xlane.f32.xlu0 %v391
        %v601 = vpop.xlane.xlu0 %600
        %602 = vadd.xlane.f32.xlu0 %v392
        %v603 = vpop.xlane.xlu0 %602
        %604 = vadd.xlane.f32.xlu0 %v393
        %v605 = vpop.xlane.xlu0 %604
        %606 = vadd.xlane.f32.xlu0 %v394
        %v607 = vpop.xlane.xlu0 %606
        %608 = vadd.xlane.f32.xlu0 %v395
        %v609 = vpop.xlane.xlu0 %608
        %610 = vadd.xlane.f32.xlu0 %v396
        %v611 = vpop.xlane.xlu0 %610
        %612 = vadd.xlane.f32.xlu0 %v397
        %v613 = vpop.xlane.xlu0 %612
        %614 = vadd.xlane.f32.xlu0 %v398
        %v615 = vpop.xlane.xlu0 %614
        %616 = vadd.xlane.f32.xlu0 %v399
        %v617 = vpop.xlane.xlu0 %616
        %618 = vadd.xlane.f32.xlu0 %v400
        %v619 = vpop.xlane.xlu0 %618
        %620 = vadd.xlane.f32.xlu0 %v401
        %v621 = vpop.xlane.xlu0 %620
        %622 = vadd.xlane.f32.xlu0 %v402
        %v623 = vpop.xlane.xlu0 %622
        %624 = vadd.xlane.f32.xlu0 %v403
        %v625 = vpop.xlane.xlu0 %624
        %626 = vadd.xlane.f32.xlu0 %v404
        %v627 = vpop.xlane.xlu0 %626
        %628 = vadd.xlane.f32.xlu0 %v405
        %v629 = vpop.xlane.xlu0 %628
        %630 = vadd.xlane.f32.xlu0 %v406
        %v631 = vpop.xlane.xlu0 %630
        %632 = vadd.xlane.f32.xlu0 %v407
        %v633 = vpop.xlane.xlu0 %632
        %634 = vadd.xlane.f32.xlu0 %v408
        %v635 = vpop.xlane.xlu0 %634
        %636 = vadd.xlane.f32.xlu0 %v409
        %v637 = vpop.xlane.xlu0 %636
        %638 = vadd.xlane.f32.xlu0 %v410
        %v639 = vpop.xlane.xlu0 %638
        %640 = vadd.xlane.f32.xlu0 %v411
        %v641 = vpop.xlane.xlu0 %640
        %642 = vadd.xlane.f32.xlu0 %v412
        %v643 = vpop.xlane.xlu0 %642
        %644 = vadd.xlane.f32.xlu0 %v413
        %v645 = vpop.xlane.xlu0 %644
        %646 = vadd.xlane.f32.xlu0 %v414
        %v647 = vpop.xlane.xlu0 %646
        %648 = vadd.xlane.f32.xlu0 %v415
        %v649 = vpop.xlane.xlu0 %648
        %650 = vadd.xlane.f32.xlu0 %v416
        %v651 = vpop.xlane.xlu0 %650
        %652 = vadd.xlane.f32.xlu0 %v417
        %v653 = vpop.xlane.xlu0 %652
        %654 = vadd.xlane.f32.xlu0 %v418
        %v655 = vpop.xlane.xlu0 %654
        %656 = vadd.xlane.f32.xlu0 %v419
        %v657 = vpop.xlane.xlu0 %656
        %658 = vadd.xlane.f32.xlu0 %v420
        %v659 = vpop.xlane.xlu0 %658
        %660 = vadd.xlane.f32.xlu0 %v421
        %v661 = vpop.xlane.xlu0 %660
        %662 = vadd.xlane.f32.xlu0 %v422
        %v663 = vpop.xlane.xlu0 %662
        %664 = vadd.xlane.f32.xlu0 %v423
        %v665 = vpop.xlane.xlu0 %664
        %666 = vadd.xlane.f32.xlu0 %v424
        %v667 = vpop.xlane.xlu0 %666
        %668 = vadd.xlane.f32.xlu0 %v425
        %v669 = vpop.xlane.xlu0 %668
        %670 = vadd.xlane.f32.xlu0 %v426
        %v671 = vpop.xlane.xlu0 %670
        %672 = vadd.xlane.f32.xlu0 %v427
        %v673 = vpop.xlane.xlu0 %672
        %674 = vadd.xlane.f32.xlu0 %v428
        %v675 = vpop.xlane.xlu0 %674
        %676 = vadd.xlane.f32.xlu0 %v429
        %v677 = vpop.xlane.xlu0 %676
        %678 = vadd.xlane.f32.xlu0 %v430
        %v679 = vpop.xlane.xlu0 %678
        %680 = vadd.xlane.f32.xlu0 %v431
        %v681 = vpop.xlane.xlu0 %680
        %682 = vadd.xlane.f32.xlu0 %v432
        %v683 = vpop.xlane.xlu0 %682
        %684 = vadd.xlane.f32.xlu0 %v433
        %v685 = vpop.xlane.xlu0 %684
        %686 = vadd.xlane.f32.xlu0 %v434
        %v687 = vpop.xlane.xlu0 %686
        %688 = vadd.xlane.f32.xlu0 %v435
        %v689 = vpop.xlane.xlu0 %688
        %690 = vadd.xlane.f32.xlu0 %v436
        %v691 = vpop.xlane.xlu0 %690
        %692 = vadd.xlane.f32.xlu0 %v437
        %v693 = vpop.xlane.xlu0 %692
        %v694 = vrcp.pop 128.0
        %v695 = vmul.f32 128.0, %v694
        %v696 = vsub.f32 1.0, %v695
        %v697 = vmul.f32 %v694, %v696
        %v698 = vadd.f32 %v694, %v697
        %vm699 = vweird.f32 %v694
        %v700 = vsel %vm699, %v694, %v698
        %v701 = vmul.f32 %v439, %v700
        %v702 = vmul.f32 %v441, %v700
        %v703 = vmul.f32 %v443, %v700
        %v704 = vmul.f32 %v445, %v700
        %v705 = vmul.f32 %v447, %v700
        %v706 = vmul.f32 %v449, %v700
        %v707 = vmul.f32 %v451, %v700
        %v708 = vmul.f32 %v453, %v700
        %v709 = vmul.f32 %v455, %v700
        %v710 = vmul.f32 %v457, %v700
        %v711 = vmul.f32 %v459, %v700
        %v712 = vmul.f32 %v461, %v700
        %v713 = vmul.f32 %v463, %v700
        %v714 = vmul.f32 %v465, %v700
        %v715 = vmul.f32 %v467, %v700
        %v716 = vmul.f32 %v469, %v700
        %v717 = vmul.f32 %v471, %v700
        %v718 = vmul.f32 %v473, %v700
        %v719 = vmul.f32 %v475, %v700
        %v720 = vmul.f32 %v477, %v700
        %v721 = vmul.f32 %v479, %v700
        %v722 = vmul.f32 %v481, %v700
        %v723 = vmul.f32 %v483, %v700
        %v724 = vmul.f32 %v485, %v700
        %v725 = vmul.f32 %v487, %v700
        %v726 = vmul.f32 %v489, %v700
        %v727 = vmul.f32 %v491, %v700
        %v728 = vmul.f32 %v493, %v700
        %v729 = vmul.f32 %v495, %v700
        %v730 = vmul.f32 %v497, %v700
        %v731 = vmul.f32 %v499, %v700
        %v732 = vmul.f32 %v501, %v700
        %v733 = vmul.f32 %v503, %v700
        %v734 = vmul.f32 %v505, %v700
        %v735 = vmul.f32 %v507, %v700
        %v736 = vmul.f32 %v509, %v700
        %v737 = vmul.f32 %v511, %v700
        %v738 = vmul.f32 %v513, %v700
        %v739 = vmul.f32 %v515, %v700
        %v740 = vmul.f32 %v517, %v700
        %v741 = vmul.f32 %v519, %v700
        %v742 = vmul.f32 %v521, %v700
        %v743 = vmul.f32 %v523, %v700
        %v744 = vmul.f32 %v525, %v700
        %v745 = vmul.f32 %v527, %v700
        %v746 = vmul.f32 %v529, %v700
        %v747 = vmul.f32 %v531, %v700
        %v748 = vmul.f32 %v533, %v700
        %v749 = vmul.f32 %v535, %v700
        %v750 = vmul.f32 %v537, %v700
        %v751 = vmul.f32 %v539, %v700
        %v752 = vmul.f32 %v541, %v700
        %v753 = vmul.f32 %v543, %v700
        %v754 = vmul.f32 %v545, %v700
        %v755 = vmul.f32 %v547, %v700
        %v756 = vmul.f32 %v549, %v700
        %v757 = vmul.f32 %v551, %v700
        %v758 = vmul.f32 %v553, %v700
        %v759 = vmul.f32 %v555, %v700
        %v760 = vmul.f32 %v557, %v700
        %v761 = vmul.f32 %v559, %v700
        %v762 = vmul.f32 %v561, %v700
        %v763 = vmul.f32 %v563, %v700
        %v764 = vmul.f32 %v565, %v700
        %v765 = vmul.f32 %v567, %v700
        %v766 = vmul.f32 %v569, %v700
        %v767 = vmul.f32 %v571, %v700
        %v768 = vmul.f32 %v573, %v700
        %v769 = vmul.f32 %v575, %v700
        %v770 = vmul.f32 %v577, %v700
        %v771 = vmul.f32 %v579, %v700
        %v772 = vmul.f32 %v581, %v700
        %v773 = vmul.f32 %v583, %v700
        %v774 = vmul.f32 %v585, %v700
        %v775 = vmul.f32 %v587, %v700
        %v776 = vmul.f32 %v589, %v700
        %v777 = vmul.f32 %v591, %v700
        %v778 = vmul.f32 %v593, %v700
        %v779 = vmul.f32 %v595, %v700
        %v780 = vmul.f32 %v597, %v700
        %v781 = vmul.f32 %v599, %v700
        %v782 = vmul.f32 %v601, %v700
        %v783 = vmul.f32 %v603, %v700
        %v784 = vmul.f32 %v605, %v700
        %v785 = vmul.f32 %v607, %v700
        %v786 = vmul.f32 %v609, %v700
        %v787 = vmul.f32 %v611, %v700
        %v788 = vmul.f32 %v613, %v700
        %v789 = vmul.f32 %v615, %v700
        %v790 = vmul.f32 %v617, %v700
        %v791 = vmul.f32 %v619, %v700
        %v792 = vmul.f32 %v621, %v700
        %v793 = vmul.f32 %v623, %v700
        %v794 = vmul.f32 %v625, %v700
        %v795 = vmul.f32 %v627, %v700
        %v796 = vmul.f32 %v629, %v700
        %v797 = vmul.f32 %v631, %v700
        %v798 = vmul.f32 %v633, %v700
        %v799 = vmul.f32 %v635, %v700
        %v800 = vmul.f32 %v637, %v700
        %v801 = vmul.f32 %v639, %v700
        %v802 = vmul.f32 %v641, %v700
        %v803 = vmul.f32 %v643, %v700
        %v804 = vmul.f32 %v645, %v700
        %v805 = vmul.f32 %v647, %v700
        %v806 = vmul.f32 %v649, %v700
        %v807 = vmul.f32 %v651, %v700
        %v808 = vmul.f32 %v653, %v700
        %v809 = vmul.f32 %v655, %v700
        %v810 = vmul.f32 %v657, %v700
        %v811 = vmul.f32 %v659, %v700
        %v812 = vmul.f32 %v661, %v700
        %v813 = vmul.f32 %v663, %v700
        %v814 = vmul.f32 %v665, %v700
        %v815 = vmul.f32 %v667, %v700
        %v816 = vmul.f32 %v669, %v700
        %v817 = vmul.f32 %v671, %v700
        %v818 = vmul.f32 %v673, %v700
        %v819 = vmul.f32 %v675, %v700
        %v820 = vmul.f32 %v677, %v700
        %v821 = vmul.f32 %v679, %v700
        %v822 = vmul.f32 %v681, %v700
        %v823 = vmul.f32 %v683, %v700
        %v824 = vmul.f32 %v685, %v700
        %v825 = vmul.f32 %v687, %v700
        %v826 = vmul.f32 %v689, %v700
        %v827 = vmul.f32 %v691, %v700
        %v828 = vmul.f32 %v693, %v700
        %v829 = vadd.f32 %v701, 1e-05
        %v830 = vadd.f32 %v702, 1e-05
        %v831 = vadd.f32 %v703, 1e-05
        %v832 = vadd.f32 %v704, 1e-05
        %v833 = vadd.f32 %v705, 1e-05
        %v834 = vadd.f32 %v706, 1e-05
        %v835 = vadd.f32 %v707, 1e-05
        %v836 = vadd.f32 %v708, 1e-05
        %v837 = vadd.f32 %v709, 1e-05
        %v838 = vadd.f32 %v710, 1e-05
        %v839 = vadd.f32 %v711, 1e-05
        %v840 = vadd.f32 %v712, 1e-05
        %v841 = vadd.f32 %v713, 1e-05
        %v842 = vadd.f32 %v714, 1e-05
        %v843 = vadd.f32 %v715, 1e-05
        %v844 = vadd.f32 %v716, 1e-05
        %v845 = vadd.f32 %v717, 1e-05
        %v846 = vadd.f32 %v718, 1e-05
        %v847 = vadd.f32 %v719, 1e-05
        %v848 = vadd.f32 %v720, 1e-05
        %v849 = vadd.f32 %v721, 1e-05
        %v850 = vadd.f32 %v722, 1e-05
        %v851 = vadd.f32 %v723, 1e-05
        %v852 = vadd.f32 %v724, 1e-05
        %v853 = vadd.f32 %v725, 1e-05
        %v854 = vadd.f32 %v726, 1e-05
        %v855 = vadd.f32 %v727, 1e-05
        %v856 = vadd.f32 %v728, 1e-05
        %v857 = vadd.f32 %v729, 1e-05
        %v858 = vadd.f32 %v730, 1e-05
        %v859 = vadd.f32 %v731, 1e-05
        %v860 = vadd.f32 %v732, 1e-05
        %v861 = vadd.f32 %v733, 1e-05
        %v862 = vadd.f32 %v734, 1e-05
        %v863 = vadd.f32 %v735, 1e-05
        %v864 = vadd.f32 %v736, 1e-05
        %v865 = vadd.f32 %v737, 1e-05
        %v866 = vadd.f32 %v738, 1e-05
        %v867 = vadd.f32 %v739, 1e-05
        %v868 = vadd.f32 %v740, 1e-05
        %v869 = vadd.f32 %v741, 1e-05
        %v870 = vadd.f32 %v742, 1e-05
        %v871 = vadd.f32 %v743, 1e-05
        %v872 = vadd.f32 %v744, 1e-05
        %v873 = vadd.f32 %v745, 1e-05
        %v874 = vadd.f32 %v746, 1e-05
        %v875 = vadd.f32 %v747, 1e-05
        %v876 = vadd.f32 %v748, 1e-05
        %v877 = vadd.f32 %v749, 1e-05
        %v878 = vadd.f32 %v750, 1e-05
        %v879 = vadd.f32 %v751, 1e-05
        %v880 = vadd.f32 %v752, 1e-05
        %v881 = vadd.f32 %v753, 1e-05
        %v882 = vadd.f32 %v754, 1e-05
        %v883 = vadd.f32 %v755, 1e-05
        %v884 = vadd.f32 %v756, 1e-05
        %v885 = vadd.f32 %v757, 1e-05
        %v886 = vadd.f32 %v758, 1e-05
        %v887 = vadd.f32 %v759, 1e-05
        %v888 = vadd.f32 %v760, 1e-05
        %v889 = vadd.f32 %v761, 1e-05
        %v890 = vadd.f32 %v762, 1e-05
        %v891 = vadd.f32 %v763, 1e-05
        %v892 = vadd.f32 %v764, 1e-05
        %v893 = vadd.f32 %v765, 1e-05
        %v894 = vadd.f32 %v766, 1e-05
        %v895 = vadd.f32 %v767, 1e-05
        %v896 = vadd.f32 %v768, 1e-05
        %v897 = vadd.f32 %v769, 1e-05
        %v898 = vadd.f32 %v770, 1e-05
        %v899 = vadd.f32 %v771, 1e-05
        %v900 = vadd.f32 %v772, 1e-05
        %v901 = vadd.f32 %v773, 1e-05
        %v902 = vadd.f32 %v774, 1e-05
        %v903 = vadd.f32 %v775, 1e-05
        %v904 = vadd.f32 %v776, 1e-05
        %v905 = vadd.f32 %v777, 1e-05
        %v906 = vadd.f32 %v778, 1e-05
        %v907 = vadd.f32 %v779, 1e-05
        %v908 = vadd.f32 %v780, 1e-05
        %v909 = vadd.f32 %v781, 1e-05
        %v910 = vadd.f32 %v782, 1e-05
        %v911 = vadd.f32 %v783, 1e-05
        %v912 = vadd.f32 %v784, 1e-05
        %v913 = vadd.f32 %v785, 1e-05
        %v914 = vadd.f32 %v786, 1e-05
        %v915 = vadd.f32 %v787, 1e-05
        %v916 = vadd.f32 %v788, 1e-05
        %v917 = vadd.f32 %v789, 1e-05
        %v918 = vadd.f32 %v790, 1e-05
        %v919 = vadd.f32 %v791, 1e-05
        %v920 = vadd.f32 %v792, 1e-05
        %v921 = vadd.f32 %v793, 1e-05
        %v922 = vadd.f32 %v794, 1e-05
        %v923 = vadd.f32 %v795, 1e-05
        %v924 = vadd.f32 %v796, 1e-05
        %v925 = vadd.f32 %v797, 1e-05
        %v926 = vadd.f32 %v798, 1e-05
        %v927 = vadd.f32 %v799, 1e-05
        %v928 = vadd.f32 %v800, 1e-05
        %v929 = vadd.f32 %v801, 1e-05
        %v930 = vadd.f32 %v802, 1e-05
        %v931 = vadd.f32 %v803, 1e-05
        %v932 = vadd.f32 %v804, 1e-05
        %v933 = vadd.f32 %v805, 1e-05
        %v934 = vadd.f32 %v806, 1e-05
        %v935 = vadd.f32 %v807, 1e-05
        %v936 = vadd.f32 %v808, 1e-05
        %v937 = vadd.f32 %v809, 1e-05
        %v938 = vadd.f32 %v810, 1e-05
        %v939 = vadd.f32 %v811, 1e-05
        %v940 = vadd.f32 %v812, 1e-05
        %v941 = vadd.f32 %v813, 1e-05
        %v942 = vadd.f32 %v814, 1e-05
        %v943 = vadd.f32 %v815, 1e-05
        %v944 = vadd.f32 %v816, 1e-05
        %v945 = vadd.f32 %v817, 1e-05
        %v946 = vadd.f32 %v818, 1e-05
        %v947 = vadd.f32 %v819, 1e-05
        %v948 = vadd.f32 %v820, 1e-05
        %v949 = vadd.f32 %v821, 1e-05
        %v950 = vadd.f32 %v822, 1e-05
        %v951 = vadd.f32 %v823, 1e-05
        %v952 = vadd.f32 %v824, 1e-05
        %v953 = vadd.f32 %v825, 1e-05
        %v954 = vadd.f32 %v826, 1e-05
        %v955 = vadd.f32 %v827, 1e-05
        %v956 = vadd.f32 %v828, 1e-05
        %v957 = vrcp.pop %v829
        %v958 = vmul.f32 %v829, %v957
        %v959 = vsub.f32 1.0, %v958
        %v960 = vmul.f32 %v957, %v959
        %v961 = vadd.f32 %v957, %v960
        %vm962 = vweird.f32 %v829
        %vm963 = vweird.f32 %v957
        %vm964 = vmor %vm962, %vm963
        %v965 = vsel %vm964, %v957, %v961
        %v966 = vand.u32 2147483647, %v829
        %vm967 = vcmp.eq.f32.partialorder %v966, 8.507059e+37
        %v968 = vand.u32 %v829, 2147483648
        %v969 = vor.u32 1.1754944e-38, %v968
        %v970 = vsel %vm967, %v969, %v965
        %v971 = vrcp.pop %v830
        %v972 = vmul.f32 %v830, %v971
        %v973 = vsub.f32 1.0, %v972
        %v974 = vmul.f32 %v971, %v973
        %v975 = vadd.f32 %v971, %v974
        %vm976 = vweird.f32 %v830
        %vm977 = vweird.f32 %v971
        %vm978 = vmor %vm976, %vm977
        %v979 = vsel %vm978, %v971, %v975
        %v980 = vand.u32 2147483647, %v830
        %vm981 = vcmp.eq.f32.partialorder %v980, 8.507059e+37
        %v982 = vand.u32 %v830, 2147483648
        %v983 = vor.u32 1.1754944e-38, %v982
        %v984 = vsel %vm981, %v983, %v979
        %v985 = vrcp.pop %v831
        %v986 = vmul.f32 %v831, %v985
        %v987 = vsub.f32 1.0, %v986
        %v988 = vmul.f32 %v985, %v987
        %v989 = vadd.f32 %v985, %v988
        %vm990 = vweird.f32 %v831
        %vm991 = vweird.f32 %v985
        %vm992 = vmor %vm990, %vm991
        %v993 = vsel %vm992, %v985, %v989
        %v994 = vand.u32 2147483647, %v831
        %vm995 = vcmp.eq.f32.partialorder %v994, 8.507059e+37
        %v996 = vand.u32 %v831, 2147483648
        %v997 = vor.u32 1.1754944e-38, %v996
        %v998 = vsel %vm995, %v997, %v993
        %v999 = vrcp.pop %v832
        %v1000 = vmul.f32 %v832, %v999
        %v1001 = vsub.f32 1.0, %v1000
        %v1002 = vmul.f32 %v999, %v1001
        %v1003 = vadd.f32 %v999, %v1002
        %vm1004 = vweird.f32 %v832
        %vm1005 = vweird.f32 %v999
        %vm1006 = vmor %vm1004, %vm1005
        %v1007 = vsel %vm1006, %v999, %v1003
        %v1008 = vand.u32 2147483647, %v832
        %vm1009 = vcmp.eq.f32.partialorder %v1008, 8.507059e+37
        %v1010 = vand.u32 %v832, 2147483648
        %v1011 = vor.u32 1.1754944e-38, %v1010
        %v1012 = vsel %vm1009, %v1011, %v1007
        %v1013 = vrcp.pop %v833
        %v1014 = vmul.f32 %v833, %v1013
        %v1015 = vsub.f32 1.0, %v1014
        %v1016 = vmul.f32 %v1013, %v1015
        %v1017 = vadd.f32 %v1013, %v1016
        %vm1018 = vweird.f32 %v833
        %vm1019 = vweird.f32 %v1013
        %vm1020 = vmor %vm1018, %vm1019
        %v1021 = vsel %vm1020, %v1013, %v1017
        %v1022 = vand.u32 2147483647, %v833
        %vm1023 = vcmp.eq.f32.partialorder %v1022, 8.507059e+37
        %v1024 = vand.u32 %v833, 2147483648
        %v1025 = vor.u32 1.1754944e-38, %v1024
        %v1026 = vsel %vm1023, %v1025, %v1021
        %v1027 = vrcp.pop %v834
        %v1028 = vmul.f32 %v834, %v1027
        %v1029 = vsub.f32 1.0, %v1028
        %v1030 = vmul.f32 %v1027, %v1029
        %v1031 = vadd.f32 %v1027, %v1030
        %vm1032 = vweird.f32 %v834
        %vm1033 = vweird.f32 %v1027
        %vm1034 = vmor %vm1032, %vm1033
        %v1035 = vsel %vm1034, %v1027, %v1031
        %v1036 = vand.u32 2147483647, %v834
        %vm1037 = vcmp.eq.f32.partialorder %v1036, 8.507059e+37
        %v1038 = vand.u32 %v834, 2147483648
        %v1039 = vor.u32 1.1754944e-38, %v1038
        %v1040 = vsel %vm1037, %v1039, %v1035
        %v1041 = vrcp.pop %v835
        %v1042 = vmul.f32 %v835, %v1041
        %v1043 = vsub.f32 1.0, %v1042
        %v1044 = vmul.f32 %v1041, %v1043
        %v1045 = vadd.f32 %v1041, %v1044
        %vm1046 = vweird.f32 %v835
        %vm1047 = vweird.f32 %v1041
        %vm1048 = vmor %vm1046, %vm1047
        %v1049 = vsel %vm1048, %v1041, %v1045
        %v1050 = vand.u32 2147483647, %v835
        %vm1051 = vcmp.eq.f32.partialorder %v1050, 8.507059e+37
        %v1052 = vand.u32 %v835, 2147483648
        %v1053 = vor.u32 1.1754944e-38, %v1052
        %v1054 = vsel %vm1051, %v1053, %v1049
        %v1055 = vrcp.pop %v836
        %v1056 = vmul.f32 %v836, %v1055
        %v1057 = vsub.f32 1.0, %v1056
        %v1058 = vmul.f32 %v1055, %v1057
        %v1059 = vadd.f32 %v1055, %v1058
        %vm1060 = vweird.f32 %v836
        %vm1061 = vweird.f32 %v1055
        %vm1062 = vmor %vm1060, %vm1061
        %v1063 = vsel %vm1062, %v1055, %v1059
        %v1064 = vand.u32 2147483647, %v836
        %vm1065 = vcmp.eq.f32.partialorder %v1064, 8.507059e+37
        %v1066 = vand.u32 %v836, 2147483648
        %v1067 = vor.u32 1.1754944e-38, %v1066
        %v1068 = vsel %vm1065, %v1067, %v1063
        %v1069 = vrcp.pop %v837
        %v1070 = vmul.f32 %v837, %v1069
        %v1071 = vsub.f32 1.0, %v1070
        %v1072 = vmul.f32 %v1069, %v1071
        %v1073 = vadd.f32 %v1069, %v1072
        %vm1074 = vweird.f32 %v837
        %vm1075 = vweird.f32 %v1069
        %vm1076 = vmor %vm1074, %vm1075
        %v1077 = vsel %vm1076, %v1069, %v1073
        %v1078 = vand.u32 2147483647, %v837
        %vm1079 = vcmp.eq.f32.partialorder %v1078, 8.507059e+37
        %v1080 = vand.u32 %v837, 2147483648
        %v1081 = vor.u32 1.1754944e-38, %v1080
        %v1082 = vsel %vm1079, %v1081, %v1077
        %v1083 = vrcp.pop %v838
        %v1084 = vmul.f32 %v838, %v1083
        %v1085 = vsub.f32 1.0, %v1084
        %v1086 = vmul.f32 %v1083, %v1085
        %v1087 = vadd.f32 %v1083, %v1086
        %vm1088 = vweird.f32 %v838
        %vm1089 = vweird.f32 %v1083
        %vm1090 = vmor %vm1088, %vm1089
        %v1091 = vsel %vm1090, %v1083, %v1087
        %v1092 = vand.u32 2147483647, %v838
        %vm1093 = vcmp.eq.f32.partialorder %v1092, 8.507059e+37
        %v1094 = vand.u32 %v838, 2147483648
        %v1095 = vor.u32 1.1754944e-38, %v1094
        %v1096 = vsel %vm1093, %v1095, %v1091
        %v1097 = vrcp.pop %v839
        %v1098 = vmul.f32 %v839, %v1097
        %v1099 = vsub.f32 1.0, %v1098
        %v1100 = vmul.f32 %v1097, %v1099
        %v1101 = vadd.f32 %v1097, %v1100
        %vm1102 = vweird.f32 %v839
        %vm1103 = vweird.f32 %v1097
        %vm1104 = vmor %vm1102, %vm1103
        %v1105 = vsel %vm1104, %v1097, %v1101
        %v1106 = vand.u32 2147483647, %v839
        %vm1107 = vcmp.eq.f32.partialorder %v1106, 8.507059e+37
        %v1108 = vand.u32 %v839, 2147483648
        %v1109 = vor.u32 1.1754944e-38, %v1108
        %v1110 = vsel %vm1107, %v1109, %v1105
        %v1111 = vrcp.pop %v840
        %v1112 = vmul.f32 %v840, %v1111
        %v1113 = vsub.f32 1.0, %v1112
        %v1114 = vmul.f32 %v1111, %v1113
        %v1115 = vadd.f32 %v1111, %v1114
        %vm1116 = vweird.f32 %v840
        %vm1117 = vweird.f32 %v1111
        %vm1118 = vmor %vm1116, %vm1117
        %v1119 = vsel %vm1118, %v1111, %v1115
        %v1120 = vand.u32 2147483647, %v840
        %vm1121 = vcmp.eq.f32.partialorder %v1120, 8.507059e+37
        %v1122 = vand.u32 %v840, 2147483648
        %v1123 = vor.u32 1.1754944e-38, %v1122
        %v1124 = vsel %vm1121, %v1123, %v1119
        %v1125 = vrcp.pop %v841
        %v1126 = vmul.f32 %v841, %v1125
        %v1127 = vsub.f32 1.0, %v1126
        %v1128 = vmul.f32 %v1125, %v1127
        %v1129 = vadd.f32 %v1125, %v1128
        %vm1130 = vweird.f32 %v841
        %vm1131 = vweird.f32 %v1125
        %vm1132 = vmor %vm1130, %vm1131
        %v1133 = vsel %vm1132, %v1125, %v1129
        %v1134 = vand.u32 2147483647, %v841
        %vm1135 = vcmp.eq.f32.partialorder %v1134, 8.507059e+37
        %v1136 = vand.u32 %v841, 2147483648
        %v1137 = vor.u32 1.1754944e-38, %v1136
        %v1138 = vsel %vm1135, %v1137, %v1133
        %v1139 = vrcp.pop %v842
        %v1140 = vmul.f32 %v842, %v1139
        %v1141 = vsub.f32 1.0, %v1140
        %v1142 = vmul.f32 %v1139, %v1141
        %v1143 = vadd.f32 %v1139, %v1142
        %vm1144 = vweird.f32 %v842
        %vm1145 = vweird.f32 %v1139
        %vm1146 = vmor %vm1144, %vm1145
        %v1147 = vsel %vm1146, %v1139, %v1143
        %v1148 = vand.u32 2147483647, %v842
        %vm1149 = vcmp.eq.f32.partialorder %v1148, 8.507059e+37
        %v1150 = vand.u32 %v842, 2147483648
        %v1151 = vor.u32 1.1754944e-38, %v1150
        %v1152 = vsel %vm1149, %v1151, %v1147
        %v1153 = vrcp.pop %v843
        %v1154 = vmul.f32 %v843, %v1153
        %v1155 = vsub.f32 1.0, %v1154
        %v1156 = vmul.f32 %v1153, %v1155
        %v1157 = vadd.f32 %v1153, %v1156
        %vm1158 = vweird.f32 %v843
        %vm1159 = vweird.f32 %v1153
        %vm1160 = vmor %vm1158, %vm1159
        %v1161 = vsel %vm1160, %v1153, %v1157
        %v1162 = vand.u32 2147483647, %v843
        %vm1163 = vcmp.eq.f32.partialorder %v1162, 8.507059e+37
        %v1164 = vand.u32 %v843, 2147483648
        %v1165 = vor.u32 1.1754944e-38, %v1164
        %v1166 = vsel %vm1163, %v1165, %v1161
        %v1167 = vrcp.pop %v844
        %v1168 = vmul.f32 %v844, %v1167
        %v1169 = vsub.f32 1.0, %v1168
        %v1170 = vmul.f32 %v1167, %v1169
        %v1171 = vadd.f32 %v1167, %v1170
        %vm1172 = vweird.f32 %v844
        %vm1173 = vweird.f32 %v1167
        %vm1174 = vmor %vm1172, %vm1173
        %v1175 = vsel %vm1174, %v1167, %v1171
        %v1176 = vand.u32 2147483647, %v844
        %vm1177 = vcmp.eq.f32.partialorder %v1176, 8.507059e+37
        %v1178 = vand.u32 %v844, 2147483648
        %v1179 = vor.u32 1.1754944e-38, %v1178
        %v1180 = vsel %vm1177, %v1179, %v1175
        %v1181 = vrcp.pop %v845
        %v1182 = vmul.f32 %v845, %v1181
        %v1183 = vsub.f32 1.0, %v1182
        %v1184 = vmul.f32 %v1181, %v1183
        %v1185 = vadd.f32 %v1181, %v1184
        %vm1186 = vweird.f32 %v845
        %vm1187 = vweird.f32 %v1181
        %vm1188 = vmor %vm1186, %vm1187
        %v1189 = vsel %vm1188, %v1181, %v1185
        %v1190 = vand.u32 2147483647, %v845
        %vm1191 = vcmp.eq.f32.partialorder %v1190, 8.507059e+37
        %v1192 = vand.u32 %v845, 2147483648
        %v1193 = vor.u32 1.1754944e-38, %v1192
        %v1194 = vsel %vm1191, %v1193, %v1189
        %v1195 = vrcp.pop %v846
        %v1196 = vmul.f32 %v846, %v1195
        %v1197 = vsub.f32 1.0, %v1196
        %v1198 = vmul.f32 %v1195, %v1197
        %v1199 = vadd.f32 %v1195, %v1198
        %vm1200 = vweird.f32 %v846
        %vm1201 = vweird.f32 %v1195
        %vm1202 = vmor %vm1200, %vm1201
        %v1203 = vsel %vm1202, %v1195, %v1199
        %v1204 = vand.u32 2147483647, %v846
        %vm1205 = vcmp.eq.f32.partialorder %v1204, 8.507059e+37
        %v1206 = vand.u32 %v846, 2147483648
        %v1207 = vor.u32 1.1754944e-38, %v1206
        %v1208 = vsel %vm1205, %v1207, %v1203
        %v1209 = vrcp.pop %v847
        %v1210 = vmul.f32 %v847, %v1209
        %v1211 = vsub.f32 1.0, %v1210
        %v1212 = vmul.f32 %v1209, %v1211
        %v1213 = vadd.f32 %v1209, %v1212
        %vm1214 = vweird.f32 %v847
        %vm1215 = vweird.f32 %v1209
        %vm1216 = vmor %vm1214, %vm1215
        %v1217 = vsel %vm1216, %v1209, %v1213
        %v1218 = vand.u32 2147483647, %v847
        %vm1219 = vcmp.eq.f32.partialorder %v1218, 8.507059e+37
        %v1220 = vand.u32 %v847, 2147483648
        %v1221 = vor.u32 1.1754944e-38, %v1220
        %v1222 = vsel %vm1219, %v1221, %v1217
        %v1223 = vrcp.pop %v848
        %v1224 = vmul.f32 %v848, %v1223
        %v1225 = vsub.f32 1.0, %v1224
        %v1226 = vmul.f32 %v1223, %v1225
        %v1227 = vadd.f32 %v1223, %v1226
        %vm1228 = vweird.f32 %v848
        %vm1229 = vweird.f32 %v1223
        %vm1230 = vmor %vm1228, %vm1229
        %v1231 = vsel %vm1230, %v1223, %v1227
        %v1232 = vand.u32 2147483647, %v848
        %vm1233 = vcmp.eq.f32.partialorder %v1232, 8.507059e+37
        %v1234 = vand.u32 %v848, 2147483648
        %v1235 = vor.u32 1.1754944e-38, %v1234
        %v1236 = vsel %vm1233, %v1235, %v1231
        %v1237 = vrcp.pop %v849
        %v1238 = vmul.f32 %v849, %v1237
        %v1239 = vsub.f32 1.0, %v1238
        %v1240 = vmul.f32 %v1237, %v1239
        %v1241 = vadd.f32 %v1237, %v1240
        %vm1242 = vweird.f32 %v849
        %vm1243 = vweird.f32 %v1237
        %vm1244 = vmor %vm1242, %vm1243
        %v1245 = vsel %vm1244, %v1237, %v1241
        %v1246 = vand.u32 2147483647, %v849
        %vm1247 = vcmp.eq.f32.partialorder %v1246, 8.507059e+37
        %v1248 = vand.u32 %v849, 2147483648
        %v1249 = vor.u32 1.1754944e-38, %v1248
        %v1250 = vsel %vm1247, %v1249, %v1245
        %v1251 = vrcp.pop %v850
        %v1252 = vmul.f32 %v850, %v1251
        %v1253 = vsub.f32 1.0, %v1252
        %v1254 = vmul.f32 %v1251, %v1253
        %v1255 = vadd.f32 %v1251, %v1254
        %vm1256 = vweird.f32 %v850
        %vm1257 = vweird.f32 %v1251
        %vm1258 = vmor %vm1256, %vm1257
        %v1259 = vsel %vm1258, %v1251, %v1255
        %v1260 = vand.u32 2147483647, %v850
        %vm1261 = vcmp.eq.f32.partialorder %v1260, 8.507059e+37
        %v1262 = vand.u32 %v850, 2147483648
        %v1263 = vor.u32 1.1754944e-38, %v1262
        %v1264 = vsel %vm1261, %v1263, %v1259
        %v1265 = vrcp.pop %v851
        %v1266 = vmul.f32 %v851, %v1265
        %v1267 = vsub.f32 1.0, %v1266
        %v1268 = vmul.f32 %v1265, %v1267
        %v1269 = vadd.f32 %v1265, %v1268
        %vm1270 = vweird.f32 %v851
        %vm1271 = vweird.f32 %v1265
        %vm1272 = vmor %vm1270, %vm1271
        %v1273 = vsel %vm1272, %v1265, %v1269
        %v1274 = vand.u32 2147483647, %v851
        %vm1275 = vcmp.eq.f32.partialorder %v1274, 8.507059e+37
        %v1276 = vand.u32 %v851, 2147483648
        %v1277 = vor.u32 1.1754944e-38, %v1276
        %v1278 = vsel %vm1275, %v1277, %v1273
        %v1279 = vrcp.pop %v852
        %v1280 = vmul.f32 %v852, %v1279
        %v1281 = vsub.f32 1.0, %v1280
        %v1282 = vmul.f32 %v1279, %v1281
        %v1283 = vadd.f32 %v1279, %v1282
        %vm1284 = vweird.f32 %v852
        %vm1285 = vweird.f32 %v1279
        %vm1286 = vmor %vm1284, %vm1285
        %v1287 = vsel %vm1286, %v1279, %v1283
        %v1288 = vand.u32 2147483647, %v852
        %vm1289 = vcmp.eq.f32.partialorder %v1288, 8.507059e+37
        %v1290 = vand.u32 %v852, 2147483648
        %v1291 = vor.u32 1.1754944e-38, %v1290
        %v1292 = vsel %vm1289, %v1291, %v1287
        %v1293 = vrcp.pop %v853
        %v1294 = vmul.f32 %v853, %v1293
        %v1295 = vsub.f32 1.0, %v1294
        %v1296 = vmul.f32 %v1293, %v1295
        %v1297 = vadd.f32 %v1293, %v1296
        %vm1298 = vweird.f32 %v853
        %vm1299 = vweird.f32 %v1293
        %vm1300 = vmor %vm1298, %vm1299
        %v1301 = vsel %vm1300, %v1293, %v1297
        %v1302 = vand.u32 2147483647, %v853
        %vm1303 = vcmp.eq.f32.partialorder %v1302, 8.507059e+37
        %v1304 = vand.u32 %v853, 2147483648
        %v1305 = vor.u32 1.1754944e-38, %v1304
        %v1306 = vsel %vm1303, %v1305, %v1301
        %v1307 = vrcp.pop %v854
        %v1308 = vmul.f32 %v854, %v1307
        %v1309 = vsub.f32 1.0, %v1308
        %v1310 = vmul.f32 %v1307, %v1309
        %v1311 = vadd.f32 %v1307, %v1310
        %vm1312 = vweird.f32 %v854
        %vm1313 = vweird.f32 %v1307
        %vm1314 = vmor %vm1312, %vm1313
        %v1315 = vsel %vm1314, %v1307, %v1311
        %v1316 = vand.u32 2147483647, %v854
        %vm1317 = vcmp.eq.f32.partialorder %v1316, 8.507059e+37
        %v1318 = vand.u32 %v854, 2147483648
        %v1319 = vor.u32 1.1754944e-38, %v1318
        %v1320 = vsel %vm1317, %v1319, %v1315
        %v1321 = vrcp.pop %v855
        %v1322 = vmul.f32 %v855, %v1321
        %v1323 = vsub.f32 1.0, %v1322
        %v1324 = vmul.f32 %v1321, %v1323
        %v1325 = vadd.f32 %v1321, %v1324
        %vm1326 = vweird.f32 %v855
        %vm1327 = vweird.f32 %v1321
        %vm1328 = vmor %vm1326, %vm1327
        %v1329 = vsel %vm1328, %v1321, %v1325
        %v1330 = vand.u32 2147483647, %v855
        %vm1331 = vcmp.eq.f32.partialorder %v1330, 8.507059e+37
        %v1332 = vand.u32 %v855, 2147483648
        %v1333 = vor.u32 1.1754944e-38, %v1332
        %v1334 = vsel %vm1331, %v1333, %v1329
        %v1335 = vrcp.pop %v856
        %v1336 = vmul.f32 %v856, %v1335
        %v1337 = vsub.f32 1.0, %v1336
        %v1338 = vmul.f32 %v1335, %v1337
        %v1339 = vadd.f32 %v1335, %v1338
        %vm1340 = vweird.f32 %v856
        %vm1341 = vweird.f32 %v1335
        %vm1342 = vmor %vm1340, %vm1341
        %v1343 = vsel %vm1342, %v1335, %v1339
        %v1344 = vand.u32 2147483647, %v856
        %vm1345 = vcmp.eq.f32.partialorder %v1344, 8.507059e+37
        %v1346 = vand.u32 %v856, 2147483648
        %v1347 = vor.u32 1.1754944e-38, %v1346
        %v1348 = vsel %vm1345, %v1347, %v1343
        %v1349 = vrcp.pop %v857
        %v1350 = vmul.f32 %v857, %v1349
        %v1351 = vsub.f32 1.0, %v1350
        %v1352 = vmul.f32 %v1349, %v1351
        %v1353 = vadd.f32 %v1349, %v1352
        %vm1354 = vweird.f32 %v857
        %vm1355 = vweird.f32 %v1349
        %vm1356 = vmor %vm1354, %vm1355
        %v1357 = vsel %vm1356, %v1349, %v1353
        %v1358 = vand.u32 2147483647, %v857
        %vm1359 = vcmp.eq.f32.partialorder %v1358, 8.507059e+37
        %v1360 = vand.u32 %v857, 2147483648
        %v1361 = vor.u32 1.1754944e-38, %v1360
        %v1362 = vsel %vm1359, %v1361, %v1357
        %v1363 = vrcp.pop %v858
        %v1364 = vmul.f32 %v858, %v1363
        %v1365 = vsub.f32 1.0, %v1364
        %v1366 = vmul.f32 %v1363, %v1365
        %v1367 = vadd.f32 %v1363, %v1366
        %vm1368 = vweird.f32 %v858
        %vm1369 = vweird.f32 %v1363
        %vm1370 = vmor %vm1368, %vm1369
        %v1371 = vsel %vm1370, %v1363, %v1367
        %v1372 = vand.u32 2147483647, %v858
        %vm1373 = vcmp.eq.f32.partialorder %v1372, 8.507059e+37
        %v1374 = vand.u32 %v858, 2147483648
        %v1375 = vor.u32 1.1754944e-38, %v1374
        %v1376 = vsel %vm1373, %v1375, %v1371
        %v1377 = vrcp.pop %v859
        %v1378 = vmul.f32 %v859, %v1377
        %v1379 = vsub.f32 1.0, %v1378
        %v1380 = vmul.f32 %v1377, %v1379
        %v1381 = vadd.f32 %v1377, %v1380
        %vm1382 = vweird.f32 %v859
        %vm1383 = vweird.f32 %v1377
        %vm1384 = vmor %vm1382, %vm1383
        %v1385 = vsel %vm1384, %v1377, %v1381
        %v1386 = vand.u32 2147483647, %v859
        %vm1387 = vcmp.eq.f32.partialorder %v1386, 8.507059e+37
        %v1388 = vand.u32 %v859, 2147483648
        %v1389 = vor.u32 1.1754944e-38, %v1388
        %v1390 = vsel %vm1387, %v1389, %v1385
        %v1391 = vrcp.pop %v860
        %v1392 = vmul.f32 %v860, %v1391
        %v1393 = vsub.f32 1.0, %v1392
        %v1394 = vmul.f32 %v1391, %v1393
        %v1395 = vadd.f32 %v1391, %v1394
        %vm1396 = vweird.f32 %v860
        %vm1397 = vweird.f32 %v1391
        %vm1398 = vmor %vm1396, %vm1397
        %v1399 = vsel %vm1398, %v1391, %v1395
        %v1400 = vand.u32 2147483647, %v860
        %vm1401 = vcmp.eq.f32.partialorder %v1400, 8.507059e+37
        %v1402 = vand.u32 %v860, 2147483648
        %v1403 = vor.u32 1.1754944e-38, %v1402
        %v1404 = vsel %vm1401, %v1403, %v1399
        %v1405 = vrcp.pop %v861
        %v1406 = vmul.f32 %v861, %v1405
        %v1407 = vsub.f32 1.0, %v1406
        %v1408 = vmul.f32 %v1405, %v1407
        %v1409 = vadd.f32 %v1405, %v1408
        %vm1410 = vweird.f32 %v861
        %vm1411 = vweird.f32 %v1405
        %vm1412 = vmor %vm1410, %vm1411
        %v1413 = vsel %vm1412, %v1405, %v1409
        %v1414 = vand.u32 2147483647, %v861
        %vm1415 = vcmp.eq.f32.partialorder %v1414, 8.507059e+37
        %v1416 = vand.u32 %v861, 2147483648
        %v1417 = vor.u32 1.1754944e-38, %v1416
        %v1418 = vsel %vm1415, %v1417, %v1413
        %v1419 = vrcp.pop %v862
        %v1420 = vmul.f32 %v862, %v1419
        %v1421 = vsub.f32 1.0, %v1420
        %v1422 = vmul.f32 %v1419, %v1421
        %v1423 = vadd.f32 %v1419, %v1422
        %vm1424 = vweird.f32 %v862
        %vm1425 = vweird.f32 %v1419
        %vm1426 = vmor %vm1424, %vm1425
        %v1427 = vsel %vm1426, %v1419, %v1423
        %v1428 = vand.u32 2147483647, %v862
        %vm1429 = vcmp.eq.f32.partialorder %v1428, 8.507059e+37
        %v1430 = vand.u32 %v862, 2147483648
        %v1431 = vor.u32 1.1754944e-38, %v1430
        %v1432 = vsel %vm1429, %v1431, %v1427
        %v1433 = vrcp.pop %v863
        %v1434 = vmul.f32 %v863, %v1433
        %v1435 = vsub.f32 1.0, %v1434
        %v1436 = vmul.f32 %v1433, %v1435
        %v1437 = vadd.f32 %v1433, %v1436
        %vm1438 = vweird.f32 %v863
        %vm1439 = vweird.f32 %v1433
        %vm1440 = vmor %vm1438, %vm1439
        %v1441 = vsel %vm1440, %v1433, %v1437
        %v1442 = vand.u32 2147483647, %v863
        %vm1443 = vcmp.eq.f32.partialorder %v1442, 8.507059e+37
        %v1444 = vand.u32 %v863, 2147483648
        %v1445 = vor.u32 1.1754944e-38, %v1444
        %v1446 = vsel %vm1443, %v1445, %v1441
        %v1447 = vrcp.pop %v864
        %v1448 = vmul.f32 %v864, %v1447
        %v1449 = vsub.f32 1.0, %v1448
        %v1450 = vmul.f32 %v1447, %v1449
        %v1451 = vadd.f32 %v1447, %v1450
        %vm1452 = vweird.f32 %v864
        %vm1453 = vweird.f32 %v1447
        %vm1454 = vmor %vm1452, %vm1453
        %v1455 = vsel %vm1454, %v1447, %v1451
        %v1456 = vand.u32 2147483647, %v864
        %vm1457 = vcmp.eq.f32.partialorder %v1456, 8.507059e+37
        %v1458 = vand.u32 %v864, 2147483648
        %v1459 = vor.u32 1.1754944e-38, %v1458
        %v1460 = vsel %vm1457, %v1459, %v1455
        %v1461 = vrcp.pop %v865
        %v1462 = vmul.f32 %v865, %v1461
        %v1463 = vsub.f32 1.0, %v1462
        %v1464 = vmul.f32 %v1461, %v1463
        %v1465 = vadd.f32 %v1461, %v1464
        %vm1466 = vweird.f32 %v865
        %vm1467 = vweird.f32 %v1461
        %vm1468 = vmor %vm1466, %vm1467
        %v1469 = vsel %vm1468, %v1461, %v1465
        %v1470 = vand.u32 2147483647, %v865
        %vm1471 = vcmp.eq.f32.partialorder %v1470, 8.507059e+37
        %v1472 = vand.u32 %v865, 2147483648
        %v1473 = vor.u32 1.1754944e-38, %v1472
        %v1474 = vsel %vm1471, %v1473, %v1469
        %v1475 = vrcp.pop %v866
        %v1476 = vmul.f32 %v866, %v1475
        %v1477 = vsub.f32 1.0, %v1476
        %v1478 = vmul.f32 %v1475, %v1477
        %v1479 = vadd.f32 %v1475, %v1478
        %vm1480 = vweird.f32 %v866
        %vm1481 = vweird.f32 %v1475
        %vm1482 = vmor %vm1480, %vm1481
        %v1483 = vsel %vm1482, %v1475, %v1479
        %v1484 = vand.u32 2147483647, %v866
        %vm1485 = vcmp.eq.f32.partialorder %v1484, 8.507059e+37
        %v1486 = vand.u32 %v866, 2147483648
        %v1487 = vor.u32 1.1754944e-38, %v1486
        %v1488 = vsel %vm1485, %v1487, %v1483
        %v1489 = vrcp.pop %v867
        %v1490 = vmul.f32 %v867, %v1489
        %v1491 = vsub.f32 1.0, %v1490
        %v1492 = vmul.f32 %v1489, %v1491
        %v1493 = vadd.f32 %v1489, %v1492
        %vm1494 = vweird.f32 %v867
        %vm1495 = vweird.f32 %v1489
        %vm1496 = vmor %vm1494, %vm1495
        %v1497 = vsel %vm1496, %v1489, %v1493
        %v1498 = vand.u32 2147483647, %v867
        %vm1499 = vcmp.eq.f32.partialorder %v1498, 8.507059e+37
        %v1500 = vand.u32 %v867, 2147483648
        %v1501 = vor.u32 1.1754944e-38, %v1500
        %v1502 = vsel %vm1499, %v1501, %v1497
        %v1503 = vrcp.pop %v868
        %v1504 = vmul.f32 %v868, %v1503
        %v1505 = vsub.f32 1.0, %v1504
        %v1506 = vmul.f32 %v1503, %v1505
        %v1507 = vadd.f32 %v1503, %v1506
        %vm1508 = vweird.f32 %v868
        %vm1509 = vweird.f32 %v1503
        %vm1510 = vmor %vm1508, %vm1509
        %v1511 = vsel %vm1510, %v1503, %v1507
        %v1512 = vand.u32 2147483647, %v868
        %vm1513 = vcmp.eq.f32.partialorder %v1512, 8.507059e+37
        %v1514 = vand.u32 %v868, 2147483648
        %v1515 = vor.u32 1.1754944e-38, %v1514
        %v1516 = vsel %vm1513, %v1515, %v1511
        %v1517 = vrcp.pop %v869
        %v1518 = vmul.f32 %v869, %v1517
        %v1519 = vsub.f32 1.0, %v1518
        %v1520 = vmul.f32 %v1517, %v1519
        %v1521 = vadd.f32 %v1517, %v1520
        %vm1522 = vweird.f32 %v869
        %vm1523 = vweird.f32 %v1517
        %vm1524 = vmor %vm1522, %vm1523
        %v1525 = vsel %vm1524, %v1517, %v1521
        %v1526 = vand.u32 2147483647, %v869
        %vm1527 = vcmp.eq.f32.partialorder %v1526, 8.507059e+37
        %v1528 = vand.u32 %v869, 2147483648
        %v1529 = vor.u32 1.1754944e-38, %v1528
        %v1530 = vsel %vm1527, %v1529, %v1525
        %v1531 = vrcp.pop %v870
        %v1532 = vmul.f32 %v870, %v1531
        %v1533 = vsub.f32 1.0, %v1532
        %v1534 = vmul.f32 %v1531, %v1533
        %v1535 = vadd.f32 %v1531, %v1534
        %vm1536 = vweird.f32 %v870
        %vm1537 = vweird.f32 %v1531
        %vm1538 = vmor %vm1536, %vm1537
        %v1539 = vsel %vm1538, %v1531, %v1535
        %v1540 = vand.u32 2147483647, %v870
        %vm1541 = vcmp.eq.f32.partialorder %v1540, 8.507059e+37
        %v1542 = vand.u32 %v870, 2147483648
        %v1543 = vor.u32 1.1754944e-38, %v1542
        %v1544 = vsel %vm1541, %v1543, %v1539
        %v1545 = vrcp.pop %v871
        %v1546 = vmul.f32 %v871, %v1545
        %v1547 = vsub.f32 1.0, %v1546
        %v1548 = vmul.f32 %v1545, %v1547
        %v1549 = vadd.f32 %v1545, %v1548
        %vm1550 = vweird.f32 %v871
        %vm1551 = vweird.f32 %v1545
        %vm1552 = vmor %vm1550, %vm1551
        %v1553 = vsel %vm1552, %v1545, %v1549
        %v1554 = vand.u32 2147483647, %v871
        %vm1555 = vcmp.eq.f32.partialorder %v1554, 8.507059e+37
        %v1556 = vand.u32 %v871, 2147483648
        %v1557 = vor.u32 1.1754944e-38, %v1556
        %v1558 = vsel %vm1555, %v1557, %v1553
        %v1559 = vrcp.pop %v872
        %v1560 = vmul.f32 %v872, %v1559
        %v1561 = vsub.f32 1.0, %v1560
        %v1562 = vmul.f32 %v1559, %v1561
        %v1563 = vadd.f32 %v1559, %v1562
        %vm1564 = vweird.f32 %v872
        %vm1565 = vweird.f32 %v1559
        %vm1566 = vmor %vm1564, %vm1565
        %v1567 = vsel %vm1566, %v1559, %v1563
        %v1568 = vand.u32 2147483647, %v872
        %vm1569 = vcmp.eq.f32.partialorder %v1568, 8.507059e+37
        %v1570 = vand.u32 %v872, 2147483648
        %v1571 = vor.u32 1.1754944e-38, %v1570
        %v1572 = vsel %vm1569, %v1571, %v1567
        %v1573 = vrcp.pop %v873
        %v1574 = vmul.f32 %v873, %v1573
        %v1575 = vsub.f32 1.0, %v1574
        %v1576 = vmul.f32 %v1573, %v1575
        %v1577 = vadd.f32 %v1573, %v1576
        %vm1578 = vweird.f32 %v873
        %vm1579 = vweird.f32 %v1573
        %vm1580 = vmor %vm1578, %vm1579
        %v1581 = vsel %vm1580, %v1573, %v1577
        %v1582 = vand.u32 2147483647, %v873
        %vm1583 = vcmp.eq.f32.partialorder %v1582, 8.507059e+37
        %v1584 = vand.u32 %v873, 2147483648
        %v1585 = vor.u32 1.1754944e-38, %v1584
        %v1586 = vsel %vm1583, %v1585, %v1581
        %v1587 = vrcp.pop %v874
        %v1588 = vmul.f32 %v874, %v1587
        %v1589 = vsub.f32 1.0, %v1588
        %v1590 = vmul.f32 %v1587, %v1589
        %v1591 = vadd.f32 %v1587, %v1590
        %vm1592 = vweird.f32 %v874
        %vm1593 = vweird.f32 %v1587
        %vm1594 = vmor %vm1592, %vm1593
        %v1595 = vsel %vm1594, %v1587, %v1591
        %v1596 = vand.u32 2147483647, %v874
        %vm1597 = vcmp.eq.f32.partialorder %v1596, 8.507059e+37
        %v1598 = vand.u32 %v874, 2147483648
        %v1599 = vor.u32 1.1754944e-38, %v1598
        %v1600 = vsel %vm1597, %v1599, %v1595
        %v1601 = vrcp.pop %v875
        %v1602 = vmul.f32 %v875, %v1601
        %v1603 = vsub.f32 1.0, %v1602
        %v1604 = vmul.f32 %v1601, %v1603
        %v1605 = vadd.f32 %v1601, %v1604
        %vm1606 = vweird.f32 %v875
        %vm1607 = vweird.f32 %v1601
        %vm1608 = vmor %vm1606, %vm1607
        %v1609 = vsel %vm1608, %v1601, %v1605
        %v1610 = vand.u32 2147483647, %v875
        %vm1611 = vcmp.eq.f32.partialorder %v1610, 8.507059e+37
        %v1612 = vand.u32 %v875, 2147483648
        %v1613 = vor.u32 1.1754944e-38, %v1612
        %v1614 = vsel %vm1611, %v1613, %v1609
        %v1615 = vrcp.pop %v876
        %v1616 = vmul.f32 %v876, %v1615
        %v1617 = vsub.f32 1.0, %v1616
        %v1618 = vmul.f32 %v1615, %v1617
        %v1619 = vadd.f32 %v1615, %v1618
        %vm1620 = vweird.f32 %v876
        %vm1621 = vweird.f32 %v1615
        %vm1622 = vmor %vm1620, %vm1621
        %v1623 = vsel %vm1622, %v1615, %v1619
        %v1624 = vand.u32 2147483647, %v876
        %vm1625 = vcmp.eq.f32.partialorder %v1624, 8.507059e+37
        %v1626 = vand.u32 %v876, 2147483648
        %v1627 = vor.u32 1.1754944e-38, %v1626
        %v1628 = vsel %vm1625, %v1627, %v1623
        %v1629 = vrcp.pop %v877
        %v1630 = vmul.f32 %v877, %v1629
        %v1631 = vsub.f32 1.0, %v1630
        %v1632 = vmul.f32 %v1629, %v1631
        %v1633 = vadd.f32 %v1629, %v1632
        %vm1634 = vweird.f32 %v877
        %vm1635 = vweird.f32 %v1629
        %vm1636 = vmor %vm1634, %vm1635
        %v1637 = vsel %vm1636, %v1629, %v1633
        %v1638 = vand.u32 2147483647, %v877
        %vm1639 = vcmp.eq.f32.partialorder %v1638, 8.507059e+37
        %v1640 = vand.u32 %v877, 2147483648
        %v1641 = vor.u32 1.1754944e-38, %v1640
        %v1642 = vsel %vm1639, %v1641, %v1637
        %v1643 = vrcp.pop %v878
        %v1644 = vmul.f32 %v878, %v1643
        %v1645 = vsub.f32 1.0, %v1644
        %v1646 = vmul.f32 %v1643, %v1645
        %v1647 = vadd.f32 %v1643, %v1646
        %vm1648 = vweird.f32 %v878
        %vm1649 = vweird.f32 %v1643
        %vm1650 = vmor %vm1648, %vm1649
        %v1651 = vsel %vm1650, %v1643, %v1647
        %v1652 = vand.u32 2147483647, %v878
        %vm1653 = vcmp.eq.f32.partialorder %v1652, 8.507059e+37
        %v1654 = vand.u32 %v878, 2147483648
        %v1655 = vor.u32 1.1754944e-38, %v1654
        %v1656 = vsel %vm1653, %v1655, %v1651
        %v1657 = vrcp.pop %v879
        %v1658 = vmul.f32 %v879, %v1657
        %v1659 = vsub.f32 1.0, %v1658
        %v1660 = vmul.f32 %v1657, %v1659
        %v1661 = vadd.f32 %v1657, %v1660
        %vm1662 = vweird.f32 %v879
        %vm1663 = vweird.f32 %v1657
        %vm1664 = vmor %vm1662, %vm1663
        %v1665 = vsel %vm1664, %v1657, %v1661
        %v1666 = vand.u32 2147483647, %v879
        %vm1667 = vcmp.eq.f32.partialorder %v1666, 8.507059e+37
        %v1668 = vand.u32 %v879, 2147483648
        %v1669 = vor.u32 1.1754944e-38, %v1668
        %v1670 = vsel %vm1667, %v1669, %v1665
        %v1671 = vrcp.pop %v880
        %v1672 = vmul.f32 %v880, %v1671
        %v1673 = vsub.f32 1.0, %v1672
        %v1674 = vmul.f32 %v1671, %v1673
        %v1675 = vadd.f32 %v1671, %v1674
        %vm1676 = vweird.f32 %v880
        %vm1677 = vweird.f32 %v1671
        %vm1678 = vmor %vm1676, %vm1677
        %v1679 = vsel %vm1678, %v1671, %v1675
        %v1680 = vand.u32 2147483647, %v880
        %vm1681 = vcmp.eq.f32.partialorder %v1680, 8.507059e+37
        %v1682 = vand.u32 %v880, 2147483648
        %v1683 = vor.u32 1.1754944e-38, %v1682
        %v1684 = vsel %vm1681, %v1683, %v1679
        %v1685 = vrcp.pop %v881
        %v1686 = vmul.f32 %v881, %v1685
        %v1687 = vsub.f32 1.0, %v1686
        %v1688 = vmul.f32 %v1685, %v1687
        %v1689 = vadd.f32 %v1685, %v1688
        %vm1690 = vweird.f32 %v881
        %vm1691 = vweird.f32 %v1685
        %vm1692 = vmor %vm1690, %vm1691
        %v1693 = vsel %vm1692, %v1685, %v1689
        %v1694 = vand.u32 2147483647, %v881
        %vm1695 = vcmp.eq.f32.partialorder %v1694, 8.507059e+37
        %v1696 = vand.u32 %v881, 2147483648
        %v1697 = vor.u32 1.1754944e-38, %v1696
        %v1698 = vsel %vm1695, %v1697, %v1693
        %v1699 = vrcp.pop %v882
        %v1700 = vmul.f32 %v882, %v1699
        %v1701 = vsub.f32 1.0, %v1700
        %v1702 = vmul.f32 %v1699, %v1701
        %v1703 = vadd.f32 %v1699, %v1702
        %vm1704 = vweird.f32 %v882
        %vm1705 = vweird.f32 %v1699
        %vm1706 = vmor %vm1704, %vm1705
        %v1707 = vsel %vm1706, %v1699, %v1703
        %v1708 = vand.u32 2147483647, %v882
        %vm1709 = vcmp.eq.f32.partialorder %v1708, 8.507059e+37
        %v1710 = vand.u32 %v882, 2147483648
        %v1711 = vor.u32 1.1754944e-38, %v1710
        %v1712 = vsel %vm1709, %v1711, %v1707
        %v1713 = vrcp.pop %v883
        %v1714 = vmul.f32 %v883, %v1713
        %v1715 = vsub.f32 1.0, %v1714
        %v1716 = vmul.f32 %v1713, %v1715
        %v1717 = vadd.f32 %v1713, %v1716
        %vm1718 = vweird.f32 %v883
        %vm1719 = vweird.f32 %v1713
        %vm1720 = vmor %vm1718, %vm1719
        %v1721 = vsel %vm1720, %v1713, %v1717
        %v1722 = vand.u32 2147483647, %v883
        %vm1723 = vcmp.eq.f32.partialorder %v1722, 8.507059e+37
        %v1724 = vand.u32 %v883, 2147483648
        %v1725 = vor.u32 1.1754944e-38, %v1724
        %v1726 = vsel %vm1723, %v1725, %v1721
        %v1727 = vrcp.pop %v884
        %v1728 = vmul.f32 %v884, %v1727
        %v1729 = vsub.f32 1.0, %v1728
        %v1730 = vmul.f32 %v1727, %v1729
        %v1731 = vadd.f32 %v1727, %v1730
        %vm1732 = vweird.f32 %v884
        %vm1733 = vweird.f32 %v1727
        %vm1734 = vmor %vm1732, %vm1733
        %v1735 = vsel %vm1734, %v1727, %v1731
        %v1736 = vand.u32 2147483647, %v884
        %vm1737 = vcmp.eq.f32.partialorder %v1736, 8.507059e+37
        %v1738 = vand.u32 %v884, 2147483648
        %v1739 = vor.u32 1.1754944e-38, %v1738
        %v1740 = vsel %vm1737, %v1739, %v1735
        %v1741 = vrcp.pop %v885
        %v1742 = vmul.f32 %v885, %v1741
        %v1743 = vsub.f32 1.0, %v1742
        %v1744 = vmul.f32 %v1741, %v1743
        %v1745 = vadd.f32 %v1741, %v1744
        %vm1746 = vweird.f32 %v885
        %vm1747 = vweird.f32 %v1741
        %vm1748 = vmor %vm1746, %vm1747
        %v1749 = vsel %vm1748, %v1741, %v1745
        %v1750 = vand.u32 2147483647, %v885
        %vm1751 = vcmp.eq.f32.partialorder %v1750, 8.507059e+37
        %v1752 = vand.u32 %v885, 2147483648
        %v1753 = vor.u32 1.1754944e-38, %v1752
        %v1754 = vsel %vm1751, %v1753, %v1749
        %v1755 = vrcp.pop %v886
        %v1756 = vmul.f32 %v886, %v1755
        %v1757 = vsub.f32 1.0, %v1756
        %v1758 = vmul.f32 %v1755, %v1757
        %v1759 = vadd.f32 %v1755, %v1758
        %vm1760 = vweird.f32 %v886
        %vm1761 = vweird.f32 %v1755
        %vm1762 = vmor %vm1760, %vm1761
        %v1763 = vsel %vm1762, %v1755, %v1759
        %v1764 = vand.u32 2147483647, %v886
        %vm1765 = vcmp.eq.f32.partialorder %v1764, 8.507059e+37
        %v1766 = vand.u32 %v886, 2147483648
        %v1767 = vor.u32 1.1754944e-38, %v1766
        %v1768 = vsel %vm1765, %v1767, %v1763
        %v1769 = vrcp.pop %v887
        %v1770 = vmul.f32 %v887, %v1769
        %v1771 = vsub.f32 1.0, %v1770
        %v1772 = vmul.f32 %v1769, %v1771
        %v1773 = vadd.f32 %v1769, %v1772
        %vm1774 = vweird.f32 %v887
        %vm1775 = vweird.f32 %v1769
        %vm1776 = vmor %vm1774, %vm1775
        %v1777 = vsel %vm1776, %v1769, %v1773
        %v1778 = vand.u32 2147483647, %v887
        %vm1779 = vcmp.eq.f32.partialorder %v1778, 8.507059e+37
        %v1780 = vand.u32 %v887, 2147483648
        %v1781 = vor.u32 1.1754944e-38, %v1780
        %v1782 = vsel %vm1779, %v1781, %v1777
        %v1783 = vrcp.pop %v888
        %v1784 = vmul.f32 %v888, %v1783
        %v1785 = vsub.f32 1.0, %v1784
        %v1786 = vmul.f32 %v1783, %v1785
        %v1787 = vadd.f32 %v1783, %v1786
        %vm1788 = vweird.f32 %v888
        %vm1789 = vweird.f32 %v1783
        %vm1790 = vmor %vm1788, %vm1789
        %v1791 = vsel %vm1790, %v1783, %v1787
        %v1792 = vand.u32 2147483647, %v888
        %vm1793 = vcmp.eq.f32.partialorder %v1792, 8.507059e+37
        %v1794 = vand.u32 %v888, 2147483648
        %v1795 = vor.u32 1.1754944e-38, %v1794
        %v1796 = vsel %vm1793, %v1795, %v1791
        %v1797 = vrcp.pop %v889
        %v1798 = vmul.f32 %v889, %v1797
        %v1799 = vsub.f32 1.0, %v1798
        %v1800 = vmul.f32 %v1797, %v1799
        %v1801 = vadd.f32 %v1797, %v1800
        %vm1802 = vweird.f32 %v889
        %vm1803 = vweird.f32 %v1797
        %vm1804 = vmor %vm1802, %vm1803
        %v1805 = vsel %vm1804, %v1797, %v1801
        %v1806 = vand.u32 2147483647, %v889
        %vm1807 = vcmp.eq.f32.partialorder %v1806, 8.507059e+37
        %v1808 = vand.u32 %v889, 2147483648
        %v1809 = vor.u32 1.1754944e-38, %v1808
        %v1810 = vsel %vm1807, %v1809, %v1805
        %v1811 = vrcp.pop %v890
        %v1812 = vmul.f32 %v890, %v1811
        %v1813 = vsub.f32 1.0, %v1812
        %v1814 = vmul.f32 %v1811, %v1813
        %v1815 = vadd.f32 %v1811, %v1814
        %vm1816 = vweird.f32 %v890
        %vm1817 = vweird.f32 %v1811
        %vm1818 = vmor %vm1816, %vm1817
        %v1819 = vsel %vm1818, %v1811, %v1815
        %v1820 = vand.u32 2147483647, %v890
        %vm1821 = vcmp.eq.f32.partialorder %v1820, 8.507059e+37
        %v1822 = vand.u32 %v890, 2147483648
        %v1823 = vor.u32 1.1754944e-38, %v1822
        %v1824 = vsel %vm1821, %v1823, %v1819
        %v1825 = vrcp.pop %v891
        %v1826 = vmul.f32 %v891, %v1825
        %v1827 = vsub.f32 1.0, %v1826
        %v1828 = vmul.f32 %v1825, %v1827
        %v1829 = vadd.f32 %v1825, %v1828
        %vm1830 = vweird.f32 %v891
        %vm1831 = vweird.f32 %v1825
        %vm1832 = vmor %vm1830, %vm1831
        %v1833 = vsel %vm1832, %v1825, %v1829
        %v1834 = vand.u32 2147483647, %v891
        %vm1835 = vcmp.eq.f32.partialorder %v1834, 8.507059e+37
        %v1836 = vand.u32 %v891, 2147483648
        %v1837 = vor.u32 1.1754944e-38, %v1836
        %v1838 = vsel %vm1835, %v1837, %v1833
        %v1839 = vrcp.pop %v892
        %v1840 = vmul.f32 %v892, %v1839
        %v1841 = vsub.f32 1.0, %v1840
        %v1842 = vmul.f32 %v1839, %v1841
        %v1843 = vadd.f32 %v1839, %v1842
        %vm1844 = vweird.f32 %v892
        %vm1845 = vweird.f32 %v1839
        %vm1846 = vmor %vm1844, %vm1845
        %v1847 = vsel %vm1846, %v1839, %v1843
        %v1848 = vand.u32 2147483647, %v892
        %vm1849 = vcmp.eq.f32.partialorder %v1848, 8.507059e+37
        %v1850 = vand.u32 %v892, 2147483648
        %v1851 = vor.u32 1.1754944e-38, %v1850
        %v1852 = vsel %vm1849, %v1851, %v1847
        %v1853 = vrcp.pop %v893
        %v1854 = vmul.f32 %v893, %v1853
        %v1855 = vsub.f32 1.0, %v1854
        %v1856 = vmul.f32 %v1853, %v1855
        %v1857 = vadd.f32 %v1853, %v1856
        %vm1858 = vweird.f32 %v893
        %vm1859 = vweird.f32 %v1853
        %vm1860 = vmor %vm1858, %vm1859
        %v1861 = vsel %vm1860, %v1853, %v1857
        %v1862 = vand.u32 2147483647, %v893
        %vm1863 = vcmp.eq.f32.partialorder %v1862, 8.507059e+37
        %v1864 = vand.u32 %v893, 2147483648
        %v1865 = vor.u32 1.1754944e-38, %v1864
        %v1866 = vsel %vm1863, %v1865, %v1861
        %v1867 = vrcp.pop %v894
        %v1868 = vmul.f32 %v894, %v1867
        %v1869 = vsub.f32 1.0, %v1868
        %v1870 = vmul.f32 %v1867, %v1869
        %v1871 = vadd.f32 %v1867, %v1870
        %vm1872 = vweird.f32 %v894
        %vm1873 = vweird.f32 %v1867
        %vm1874 = vmor %vm1872, %vm1873
        %v1875 = vsel %vm1874, %v1867, %v1871
        %v1876 = vand.u32 2147483647, %v894
        %vm1877 = vcmp.eq.f32.partialorder %v1876, 8.507059e+37
        %v1878 = vand.u32 %v894, 2147483648
        %v1879 = vor.u32 1.1754944e-38, %v1878
        %v1880 = vsel %vm1877, %v1879, %v1875
        %v1881 = vrcp.pop %v895
        %v1882 = vmul.f32 %v895, %v1881
        %v1883 = vsub.f32 1.0, %v1882
        %v1884 = vmul.f32 %v1881, %v1883
        %v1885 = vadd.f32 %v1881, %v1884
        %vm1886 = vweird.f32 %v895
        %vm1887 = vweird.f32 %v1881
        %vm1888 = vmor %vm1886, %vm1887
        %v1889 = vsel %vm1888, %v1881, %v1885
        %v1890 = vand.u32 2147483647, %v895
        %vm1891 = vcmp.eq.f32.partialorder %v1890, 8.507059e+37
        %v1892 = vand.u32 %v895, 2147483648
        %v1893 = vor.u32 1.1754944e-38, %v1892
        %v1894 = vsel %vm1891, %v1893, %v1889
        %v1895 = vrcp.pop %v896
        %v1896 = vmul.f32 %v896, %v1895
        %v1897 = vsub.f32 1.0, %v1896
        %v1898 = vmul.f32 %v1895, %v1897
        %v1899 = vadd.f32 %v1895, %v1898
        %vm1900 = vweird.f32 %v896
        %vm1901 = vweird.f32 %v1895
        %vm1902 = vmor %vm1900, %vm1901
        %v1903 = vsel %vm1902, %v1895, %v1899
        %v1904 = vand.u32 2147483647, %v896
        %vm1905 = vcmp.eq.f32.partialorder %v1904, 8.507059e+37
        %v1906 = vand.u32 %v896, 2147483648
        %v1907 = vor.u32 1.1754944e-38, %v1906
        %v1908 = vsel %vm1905, %v1907, %v1903
        %v1909 = vrcp.pop %v897
        %v1910 = vmul.f32 %v897, %v1909
        %v1911 = vsub.f32 1.0, %v1910
        %v1912 = vmul.f32 %v1909, %v1911
        %v1913 = vadd.f32 %v1909, %v1912
        %vm1914 = vweird.f32 %v897
        %vm1915 = vweird.f32 %v1909
        %vm1916 = vmor %vm1914, %vm1915
        %v1917 = vsel %vm1916, %v1909, %v1913
        %v1918 = vand.u32 2147483647, %v897
        %vm1919 = vcmp.eq.f32.partialorder %v1918, 8.507059e+37
        %v1920 = vand.u32 %v897, 2147483648
        %v1921 = vor.u32 1.1754944e-38, %v1920
        %v1922 = vsel %vm1919, %v1921, %v1917
        %v1923 = vrcp.pop %v898
        %v1924 = vmul.f32 %v898, %v1923
        %v1925 = vsub.f32 1.0, %v1924
        %v1926 = vmul.f32 %v1923, %v1925
        %v1927 = vadd.f32 %v1923, %v1926
        %vm1928 = vweird.f32 %v898
        %vm1929 = vweird.f32 %v1923
        %vm1930 = vmor %vm1928, %vm1929
        %v1931 = vsel %vm1930, %v1923, %v1927
        %v1932 = vand.u32 2147483647, %v898
        %vm1933 = vcmp.eq.f32.partialorder %v1932, 8.507059e+37
        %v1934 = vand.u32 %v898, 2147483648
        %v1935 = vor.u32 1.1754944e-38, %v1934
        %v1936 = vsel %vm1933, %v1935, %v1931
        %v1937 = vrcp.pop %v899
        %v1938 = vmul.f32 %v899, %v1937
        %v1939 = vsub.f32 1.0, %v1938
        %v1940 = vmul.f32 %v1937, %v1939
        %v1941 = vadd.f32 %v1937, %v1940
        %vm1942 = vweird.f32 %v899
        %vm1943 = vweird.f32 %v1937
        %vm1944 = vmor %vm1942, %vm1943
        %v1945 = vsel %vm1944, %v1937, %v1941
        %v1946 = vand.u32 2147483647, %v899
        %vm1947 = vcmp.eq.f32.partialorder %v1946, 8.507059e+37
        %v1948 = vand.u32 %v899, 2147483648
        %v1949 = vor.u32 1.1754944e-38, %v1948
        %v1950 = vsel %vm1947, %v1949, %v1945
        %v1951 = vrcp.pop %v900
        %v1952 = vmul.f32 %v900, %v1951
        %v1953 = vsub.f32 1.0, %v1952
        %v1954 = vmul.f32 %v1951, %v1953
        %v1955 = vadd.f32 %v1951, %v1954
        %vm1956 = vweird.f32 %v900
        %vm1957 = vweird.f32 %v1951
        %vm1958 = vmor %vm1956, %vm1957
        %v1959 = vsel %vm1958, %v1951, %v1955
        %v1960 = vand.u32 2147483647, %v900
        %vm1961 = vcmp.eq.f32.partialorder %v1960, 8.507059e+37
        %v1962 = vand.u32 %v900, 2147483648
        %v1963 = vor.u32 1.1754944e-38, %v1962
        %v1964 = vsel %vm1961, %v1963, %v1959
        %v1965 = vrcp.pop %v901
        %v1966 = vmul.f32 %v901, %v1965
        %v1967 = vsub.f32 1.0, %v1966
        %v1968 = vmul.f32 %v1965, %v1967
        %v1969 = vadd.f32 %v1965, %v1968
        %vm1970 = vweird.f32 %v901
        %vm1971 = vweird.f32 %v1965
        %vm1972 = vmor %vm1970, %vm1971
        %v1973 = vsel %vm1972, %v1965, %v1969
        %v1974 = vand.u32 2147483647, %v901
        %vm1975 = vcmp.eq.f32.partialorder %v1974, 8.507059e+37
        %v1976 = vand.u32 %v901, 2147483648
        %v1977 = vor.u32 1.1754944e-38, %v1976
        %v1978 = vsel %vm1975, %v1977, %v1973
        %v1979 = vrcp.pop %v902
        %v1980 = vmul.f32 %v902, %v1979
        %v1981 = vsub.f32 1.0, %v1980
        %v1982 = vmul.f32 %v1979, %v1981
        %v1983 = vadd.f32 %v1979, %v1982
        %vm1984 = vweird.f32 %v902
        %vm1985 = vweird.f32 %v1979
        %vm1986 = vmor %vm1984, %vm1985
        %v1987 = vsel %vm1986, %v1979, %v1983
        %v1988 = vand.u32 2147483647, %v902
        %vm1989 = vcmp.eq.f32.partialorder %v1988, 8.507059e+37
        %v1990 = vand.u32 %v902, 2147483648
        %v1991 = vor.u32 1.1754944e-38, %v1990
        %v1992 = vsel %vm1989, %v1991, %v1987
        %v1993 = vrcp.pop %v903
        %v1994 = vmul.f32 %v903, %v1993
        %v1995 = vsub.f32 1.0, %v1994
        %v1996 = vmul.f32 %v1993, %v1995
        %v1997 = vadd.f32 %v1993, %v1996
        %vm1998 = vweird.f32 %v903
        %vm1999 = vweird.f32 %v1993
        %vm2000 = vmor %vm1998, %vm1999
        %v2001 = vsel %vm2000, %v1993, %v1997
        %v2002 = vand.u32 2147483647, %v903
        %vm2003 = vcmp.eq.f32.partialorder %v2002, 8.507059e+37
        %v2004 = vand.u32 %v903, 2147483648
        %v2005 = vor.u32 1.1754944e-38, %v2004
        %v2006 = vsel %vm2003, %v2005, %v2001
        %v2007 = vrcp.pop %v904
        %v2008 = vmul.f32 %v904, %v2007
        %v2009 = vsub.f32 1.0, %v2008
        %v2010 = vmul.f32 %v2007, %v2009
        %v2011 = vadd.f32 %v2007, %v2010
        %vm2012 = vweird.f32 %v904
        %vm2013 = vweird.f32 %v2007
        %vm2014 = vmor %vm2012, %vm2013
        %v2015 = vsel %vm2014, %v2007, %v2011
        %v2016 = vand.u32 2147483647, %v904
        %vm2017 = vcmp.eq.f32.partialorder %v2016, 8.507059e+37
        %v2018 = vand.u32 %v904, 2147483648
        %v2019 = vor.u32 1.1754944e-38, %v2018
        %v2020 = vsel %vm2017, %v2019, %v2015
        %v2021 = vrcp.pop %v905
        %v2022 = vmul.f32 %v905, %v2021
        %v2023 = vsub.f32 1.0, %v2022
        %v2024 = vmul.f32 %v2021, %v2023
        %v2025 = vadd.f32 %v2021, %v2024
        %vm2026 = vweird.f32 %v905
        %vm2027 = vweird.f32 %v2021
        %vm2028 = vmor %vm2026, %vm2027
        %v2029 = vsel %vm2028, %v2021, %v2025
        %v2030 = vand.u32 2147483647, %v905
        %vm2031 = vcmp.eq.f32.partialorder %v2030, 8.507059e+37
        %v2032 = vand.u32 %v905, 2147483648
        %v2033 = vor.u32 1.1754944e-38, %v2032
        %v2034 = vsel %vm2031, %v2033, %v2029
        %v2035 = vrcp.pop %v906
        %v2036 = vmul.f32 %v906, %v2035
        %v2037 = vsub.f32 1.0, %v2036
        %v2038 = vmul.f32 %v2035, %v2037
        %v2039 = vadd.f32 %v2035, %v2038
        %vm2040 = vweird.f32 %v906
        %vm2041 = vweird.f32 %v2035
        %vm2042 = vmor %vm2040, %vm2041
        %v2043 = vsel %vm2042, %v2035, %v2039
        %v2044 = vand.u32 2147483647, %v906
        %vm2045 = vcmp.eq.f32.partialorder %v2044, 8.507059e+37
        %v2046 = vand.u32 %v906, 2147483648
        %v2047 = vor.u32 1.1754944e-38, %v2046
        %v2048 = vsel %vm2045, %v2047, %v2043
        %v2049 = vrcp.pop %v907
        %v2050 = vmul.f32 %v907, %v2049
        %v2051 = vsub.f32 1.0, %v2050
        %v2052 = vmul.f32 %v2049, %v2051
        %v2053 = vadd.f32 %v2049, %v2052
        %vm2054 = vweird.f32 %v907
        %vm2055 = vweird.f32 %v2049
        %vm2056 = vmor %vm2054, %vm2055
        %v2057 = vsel %vm2056, %v2049, %v2053
        %v2058 = vand.u32 2147483647, %v907
        %vm2059 = vcmp.eq.f32.partialorder %v2058, 8.507059e+37
        %v2060 = vand.u32 %v907, 2147483648
        %v2061 = vor.u32 1.1754944e-38, %v2060
        %v2062 = vsel %vm2059, %v2061, %v2057
        %v2063 = vrcp.pop %v908
        %v2064 = vmul.f32 %v908, %v2063
        %v2065 = vsub.f32 1.0, %v2064
        %v2066 = vmul.f32 %v2063, %v2065
        %v2067 = vadd.f32 %v2063, %v2066
        %vm2068 = vweird.f32 %v908
        %vm2069 = vweird.f32 %v2063
        %vm2070 = vmor %vm2068, %vm2069
        %v2071 = vsel %vm2070, %v2063, %v2067
        %v2072 = vand.u32 2147483647, %v908
        %vm2073 = vcmp.eq.f32.partialorder %v2072, 8.507059e+37
        %v2074 = vand.u32 %v908, 2147483648
        %v2075 = vor.u32 1.1754944e-38, %v2074
        %v2076 = vsel %vm2073, %v2075, %v2071
        %v2077 = vrcp.pop %v909
        %v2078 = vmul.f32 %v909, %v2077
        %v2079 = vsub.f32 1.0, %v2078
        %v2080 = vmul.f32 %v2077, %v2079
        %v2081 = vadd.f32 %v2077, %v2080
        %vm2082 = vweird.f32 %v909
        %vm2083 = vweird.f32 %v2077
        %vm2084 = vmor %vm2082, %vm2083
        %v2085 = vsel %vm2084, %v2077, %v2081
        %v2086 = vand.u32 2147483647, %v909
        %vm2087 = vcmp.eq.f32.partialorder %v2086, 8.507059e+37
        %v2088 = vand.u32 %v909, 2147483648
        %v2089 = vor.u32 1.1754944e-38, %v2088
        %v2090 = vsel %vm2087, %v2089, %v2085
        %v2091 = vrcp.pop %v910
        %v2092 = vmul.f32 %v910, %v2091
        %v2093 = vsub.f32 1.0, %v2092
        %v2094 = vmul.f32 %v2091, %v2093
        %v2095 = vadd.f32 %v2091, %v2094
        %vm2096 = vweird.f32 %v910
        %vm2097 = vweird.f32 %v2091
        %vm2098 = vmor %vm2096, %vm2097
        %v2099 = vsel %vm2098, %v2091, %v2095
        %v2100 = vand.u32 2147483647, %v910
        %vm2101 = vcmp.eq.f32.partialorder %v2100, 8.507059e+37
        %v2102 = vand.u32 %v910, 2147483648
        %v2103 = vor.u32 1.1754944e-38, %v2102
        %v2104 = vsel %vm2101, %v2103, %v2099
        %v2105 = vrcp.pop %v911
        %v2106 = vmul.f32 %v911, %v2105
        %v2107 = vsub.f32 1.0, %v2106
        %v2108 = vmul.f32 %v2105, %v2107
        %v2109 = vadd.f32 %v2105, %v2108
        %vm2110 = vweird.f32 %v911
        %vm2111 = vweird.f32 %v2105
        %vm2112 = vmor %vm2110, %vm2111
        %v2113 = vsel %vm2112, %v2105, %v2109
        %v2114 = vand.u32 2147483647, %v911
        %vm2115 = vcmp.eq.f32.partialorder %v2114, 8.507059e+37
        %v2116 = vand.u32 %v911, 2147483648
        %v2117 = vor.u32 1.1754944e-38, %v2116
        %v2118 = vsel %vm2115, %v2117, %v2113
        %v2119 = vrcp.pop %v912
        %v2120 = vmul.f32 %v912, %v2119
        %v2121 = vsub.f32 1.0, %v2120
        %v2122 = vmul.f32 %v2119, %v2121
        %v2123 = vadd.f32 %v2119, %v2122
        %vm2124 = vweird.f32 %v912
        %vm2125 = vweird.f32 %v2119
        %vm2126 = vmor %vm2124, %vm2125
        %v2127 = vsel %vm2126, %v2119, %v2123
        %v2128 = vand.u32 2147483647, %v912
        %vm2129 = vcmp.eq.f32.partialorder %v2128, 8.507059e+37
        %v2130 = vand.u32 %v912, 2147483648
        %v2131 = vor.u32 1.1754944e-38, %v2130
        %v2132 = vsel %vm2129, %v2131, %v2127
        %v2133 = vrcp.pop %v913
        %v2134 = vmul.f32 %v913, %v2133
        %v2135 = vsub.f32 1.0, %v2134
        %v2136 = vmul.f32 %v2133, %v2135
        %v2137 = vadd.f32 %v2133, %v2136
        %vm2138 = vweird.f32 %v913
        %vm2139 = vweird.f32 %v2133
        %vm2140 = vmor %vm2138, %vm2139
        %v2141 = vsel %vm2140, %v2133, %v2137
        %v2142 = vand.u32 2147483647, %v913
        %vm2143 = vcmp.eq.f32.partialorder %v2142, 8.507059e+37
        %v2144 = vand.u32 %v913, 2147483648
        %v2145 = vor.u32 1.1754944e-38, %v2144
        %v2146 = vsel %vm2143, %v2145, %v2141
        %v2147 = vrcp.pop %v914
        %v2148 = vmul.f32 %v914, %v2147
        %v2149 = vsub.f32 1.0, %v2148
        %v2150 = vmul.f32 %v2147, %v2149
        %v2151 = vadd.f32 %v2147, %v2150
        %vm2152 = vweird.f32 %v914
        %vm2153 = vweird.f32 %v2147
        %vm2154 = vmor %vm2152, %vm2153
        %v2155 = vsel %vm2154, %v2147, %v2151
        %v2156 = vand.u32 2147483647, %v914
        %vm2157 = vcmp.eq.f32.partialorder %v2156, 8.507059e+37
        %v2158 = vand.u32 %v914, 2147483648
        %v2159 = vor.u32 1.1754944e-38, %v2158
        %v2160 = vsel %vm2157, %v2159, %v2155
        %v2161 = vrcp.pop %v915
        %v2162 = vmul.f32 %v915, %v2161
        %v2163 = vsub.f32 1.0, %v2162
        %v2164 = vmul.f32 %v2161, %v2163
        %v2165 = vadd.f32 %v2161, %v2164
        %vm2166 = vweird.f32 %v915
        %vm2167 = vweird.f32 %v2161
        %vm2168 = vmor %vm2166, %vm2167
        %v2169 = vsel %vm2168, %v2161, %v2165
        %v2170 = vand.u32 2147483647, %v915
        %vm2171 = vcmp.eq.f32.partialorder %v2170, 8.507059e+37
        %v2172 = vand.u32 %v915, 2147483648
        %v2173 = vor.u32 1.1754944e-38, %v2172
        %v2174 = vsel %vm2171, %v2173, %v2169
        %v2175 = vrcp.pop %v916
        %v2176 = vmul.f32 %v916, %v2175
        %v2177 = vsub.f32 1.0, %v2176
        %v2178 = vmul.f32 %v2175, %v2177
        %v2179 = vadd.f32 %v2175, %v2178
        %vm2180 = vweird.f32 %v916
        %vm2181 = vweird.f32 %v2175
        %vm2182 = vmor %vm2180, %vm2181
        %v2183 = vsel %vm2182, %v2175, %v2179
        %v2184 = vand.u32 2147483647, %v916
        %vm2185 = vcmp.eq.f32.partialorder %v2184, 8.507059e+37
        %v2186 = vand.u32 %v916, 2147483648
        %v2187 = vor.u32 1.1754944e-38, %v2186
        %v2188 = vsel %vm2185, %v2187, %v2183
        %v2189 = vrcp.pop %v917
        %v2190 = vmul.f32 %v917, %v2189
        %v2191 = vsub.f32 1.0, %v2190
        %v2192 = vmul.f32 %v2189, %v2191
        %v2193 = vadd.f32 %v2189, %v2192
        %vm2194 = vweird.f32 %v917
        %vm2195 = vweird.f32 %v2189
        %vm2196 = vmor %vm2194, %vm2195
        %v2197 = vsel %vm2196, %v2189, %v2193
        %v2198 = vand.u32 2147483647, %v917
        %vm2199 = vcmp.eq.f32.partialorder %v2198, 8.507059e+37
        %v2200 = vand.u32 %v917, 2147483648
        %v2201 = vor.u32 1.1754944e-38, %v2200
        %v2202 = vsel %vm2199, %v2201, %v2197
        %v2203 = vrcp.pop %v918
        %v2204 = vmul.f32 %v918, %v2203
        %v2205 = vsub.f32 1.0, %v2204
        %v2206 = vmul.f32 %v2203, %v2205
        %v2207 = vadd.f32 %v2203, %v2206
        %vm2208 = vweird.f32 %v918
        %vm2209 = vweird.f32 %v2203
        %vm2210 = vmor %vm2208, %vm2209
        %v2211 = vsel %vm2210, %v2203, %v2207
        %v2212 = vand.u32 2147483647, %v918
        %vm2213 = vcmp.eq.f32.partialorder %v2212, 8.507059e+37
        %v2214 = vand.u32 %v918, 2147483648
        %v2215 = vor.u32 1.1754944e-38, %v2214
        %v2216 = vsel %vm2213, %v2215, %v2211
        %v2217 = vrcp.pop %v919
        %v2218 = vmul.f32 %v919, %v2217
        %v2219 = vsub.f32 1.0, %v2218
        %v2220 = vmul.f32 %v2217, %v2219
        %v2221 = vadd.f32 %v2217, %v2220
        %vm2222 = vweird.f32 %v919
        %vm2223 = vweird.f32 %v2217
        %vm2224 = vmor %vm2222, %vm2223
        %v2225 = vsel %vm2224, %v2217, %v2221
        %v2226 = vand.u32 2147483647, %v919
        %vm2227 = vcmp.eq.f32.partialorder %v2226, 8.507059e+37
        %v2228 = vand.u32 %v919, 2147483648
        %v2229 = vor.u32 1.1754944e-38, %v2228
        %v2230 = vsel %vm2227, %v2229, %v2225
        %v2231 = vrcp.pop %v920
        %v2232 = vmul.f32 %v920, %v2231
        %v2233 = vsub.f32 1.0, %v2232
        %v2234 = vmul.f32 %v2231, %v2233
        %v2235 = vadd.f32 %v2231, %v2234
        %vm2236 = vweird.f32 %v920
        %vm2237 = vweird.f32 %v2231
        %vm2238 = vmor %vm2236, %vm2237
        %v2239 = vsel %vm2238, %v2231, %v2235
        %v2240 = vand.u32 2147483647, %v920
        %vm2241 = vcmp.eq.f32.partialorder %v2240, 8.507059e+37
        %v2242 = vand.u32 %v920, 2147483648
        %v2243 = vor.u32 1.1754944e-38, %v2242
        %v2244 = vsel %vm2241, %v2243, %v2239
        %v2245 = vrcp.pop %v921
        %v2246 = vmul.f32 %v921, %v2245
        %v2247 = vsub.f32 1.0, %v2246
        %v2248 = vmul.f32 %v2245, %v2247
        %v2249 = vadd.f32 %v2245, %v2248
        %vm2250 = vweird.f32 %v921
        %vm2251 = vweird.f32 %v2245
        %vm2252 = vmor %vm2250, %vm2251
        %v2253 = vsel %vm2252, %v2245, %v2249
        %v2254 = vand.u32 2147483647, %v921
        %vm2255 = vcmp.eq.f32.partialorder %v2254, 8.507059e+37
        %v2256 = vand.u32 %v921, 2147483648
        %v2257 = vor.u32 1.1754944e-38, %v2256
        %v2258 = vsel %vm2255, %v2257, %v2253
        %v2259 = vrcp.pop %v922
        %v2260 = vmul.f32 %v922, %v2259
        %v2261 = vsub.f32 1.0, %v2260
        %v2262 = vmul.f32 %v2259, %v2261
        %v2263 = vadd.f32 %v2259, %v2262
        %vm2264 = vweird.f32 %v922
        %vm2265 = vweird.f32 %v2259
        %vm2266 = vmor %vm2264, %vm2265
        %v2267 = vsel %vm2266, %v2259, %v2263
        %v2268 = vand.u32 2147483647, %v922
        %vm2269 = vcmp.eq.f32.partialorder %v2268, 8.507059e+37
        %v2270 = vand.u32 %v922, 2147483648
        %v2271 = vor.u32 1.1754944e-38, %v2270
        %v2272 = vsel %vm2269, %v2271, %v2267
        %v2273 = vrcp.pop %v923
        %v2274 = vmul.f32 %v923, %v2273
        %v2275 = vsub.f32 1.0, %v2274
        %v2276 = vmul.f32 %v2273, %v2275
        %v2277 = vadd.f32 %v2273, %v2276
        %vm2278 = vweird.f32 %v923
        %vm2279 = vweird.f32 %v2273
        %vm2280 = vmor %vm2278, %vm2279
        %v2281 = vsel %vm2280, %v2273, %v2277
        %v2282 = vand.u32 2147483647, %v923
        %vm2283 = vcmp.eq.f32.partialorder %v2282, 8.507059e+37
        %v2284 = vand.u32 %v923, 2147483648
        %v2285 = vor.u32 1.1754944e-38, %v2284
        %v2286 = vsel %vm2283, %v2285, %v2281
        %v2287 = vrcp.pop %v924
        %v2288 = vmul.f32 %v924, %v2287
        %v2289 = vsub.f32 1.0, %v2288
        %v2290 = vmul.f32 %v2287, %v2289
        %v2291 = vadd.f32 %v2287, %v2290
        %vm2292 = vweird.f32 %v924
        %vm2293 = vweird.f32 %v2287
        %vm2294 = vmor %vm2292, %vm2293
        %v2295 = vsel %vm2294, %v2287, %v2291
        %v2296 = vand.u32 2147483647, %v924
        %vm2297 = vcmp.eq.f32.partialorder %v2296, 8.507059e+37
        %v2298 = vand.u32 %v924, 2147483648
        %v2299 = vor.u32 1.1754944e-38, %v2298
        %v2300 = vsel %vm2297, %v2299, %v2295
        %v2301 = vrcp.pop %v925
        %v2302 = vmul.f32 %v925, %v2301
        %v2303 = vsub.f32 1.0, %v2302
        %v2304 = vmul.f32 %v2301, %v2303
        %v2305 = vadd.f32 %v2301, %v2304
        %vm2306 = vweird.f32 %v925
        %vm2307 = vweird.f32 %v2301
        %vm2308 = vmor %vm2306, %vm2307
        %v2309 = vsel %vm2308, %v2301, %v2305
        %v2310 = vand.u32 2147483647, %v925
        %vm2311 = vcmp.eq.f32.partialorder %v2310, 8.507059e+37
        %v2312 = vand.u32 %v925, 2147483648
        %v2313 = vor.u32 1.1754944e-38, %v2312
        %v2314 = vsel %vm2311, %v2313, %v2309
        %v2315 = vrcp.pop %v926
        %v2316 = vmul.f32 %v926, %v2315
        %v2317 = vsub.f32 1.0, %v2316
        %v2318 = vmul.f32 %v2315, %v2317
        %v2319 = vadd.f32 %v2315, %v2318
        %vm2320 = vweird.f32 %v926
        %vm2321 = vweird.f32 %v2315
        %vm2322 = vmor %vm2320, %vm2321
        %v2323 = vsel %vm2322, %v2315, %v2319
        %v2324 = vand.u32 2147483647, %v926
        %vm2325 = vcmp.eq.f32.partialorder %v2324, 8.507059e+37
        %v2326 = vand.u32 %v926, 2147483648
        %v2327 = vor.u32 1.1754944e-38, %v2326
        %v2328 = vsel %vm2325, %v2327, %v2323
        %v2329 = vrcp.pop %v927
        %v2330 = vmul.f32 %v927, %v2329
        %v2331 = vsub.f32 1.0, %v2330
        %v2332 = vmul.f32 %v2329, %v2331
        %v2333 = vadd.f32 %v2329, %v2332
        %vm2334 = vweird.f32 %v927
        %vm2335 = vweird.f32 %v2329
        %vm2336 = vmor %vm2334, %vm2335
        %v2337 = vsel %vm2336, %v2329, %v2333
        %v2338 = vand.u32 2147483647, %v927
        %vm2339 = vcmp.eq.f32.partialorder %v2338, 8.507059e+37
        %v2340 = vand.u32 %v927, 2147483648
        %v2341 = vor.u32 1.1754944e-38, %v2340
        %v2342 = vsel %vm2339, %v2341, %v2337
        %v2343 = vrcp.pop %v928
        %v2344 = vmul.f32 %v928, %v2343
        %v2345 = vsub.f32 1.0, %v2344
        %v2346 = vmul.f32 %v2343, %v2345
        %v2347 = vadd.f32 %v2343, %v2346
        %vm2348 = vweird.f32 %v928
        %vm2349 = vweird.f32 %v2343
        %vm2350 = vmor %vm2348, %vm2349
        %v2351 = vsel %vm2350, %v2343, %v2347
        %v2352 = vand.u32 2147483647, %v928
        %vm2353 = vcmp.eq.f32.partialorder %v2352, 8.507059e+37
        %v2354 = vand.u32 %v928, 2147483648
        %v2355 = vor.u32 1.1754944e-38, %v2354
        %v2356 = vsel %vm2353, %v2355, %v2351
        %v2357 = vrcp.pop %v929
        %v2358 = vmul.f32 %v929, %v2357
        %v2359 = vsub.f32 1.0, %v2358
        %v2360 = vmul.f32 %v2357, %v2359
        %v2361 = vadd.f32 %v2357, %v2360
        %vm2362 = vweird.f32 %v929
        %vm2363 = vweird.f32 %v2357
        %vm2364 = vmor %vm2362, %vm2363
        %v2365 = vsel %vm2364, %v2357, %v2361
        %v2366 = vand.u32 2147483647, %v929
        %vm2367 = vcmp.eq.f32.partialorder %v2366, 8.507059e+37
        %v2368 = vand.u32 %v929, 2147483648
        %v2369 = vor.u32 1.1754944e-38, %v2368
        %v2370 = vsel %vm2367, %v2369, %v2365
        %v2371 = vrcp.pop %v930
        %v2372 = vmul.f32 %v930, %v2371
        %v2373 = vsub.f32 1.0, %v2372
        %v2374 = vmul.f32 %v2371, %v2373
        %v2375 = vadd.f32 %v2371, %v2374
        %vm2376 = vweird.f32 %v930
        %vm2377 = vweird.f32 %v2371
        %vm2378 = vmor %vm2376, %vm2377
        %v2379 = vsel %vm2378, %v2371, %v2375
        %v2380 = vand.u32 2147483647, %v930
        %vm2381 = vcmp.eq.f32.partialorder %v2380, 8.507059e+37
        %v2382 = vand.u32 %v930, 2147483648
        %v2383 = vor.u32 1.1754944e-38, %v2382
        %v2384 = vsel %vm2381, %v2383, %v2379
        %v2385 = vrcp.pop %v931
        %v2386 = vmul.f32 %v931, %v2385
        %v2387 = vsub.f32 1.0, %v2386
        %v2388 = vmul.f32 %v2385, %v2387
        %v2389 = vadd.f32 %v2385, %v2388
        %vm2390 = vweird.f32 %v931
        %vm2391 = vweird.f32 %v2385
        %vm2392 = vmor %vm2390, %vm2391
        %v2393 = vsel %vm2392, %v2385, %v2389
        %v2394 = vand.u32 2147483647, %v931
        %vm2395 = vcmp.eq.f32.partialorder %v2394, 8.507059e+37
        %v2396 = vand.u32 %v931, 2147483648
        %v2397 = vor.u32 1.1754944e-38, %v2396
        %v2398 = vsel %vm2395, %v2397, %v2393
        %v2399 = vrcp.pop %v932
        %v2400 = vmul.f32 %v932, %v2399
        %v2401 = vsub.f32 1.0, %v2400
        %v2402 = vmul.f32 %v2399, %v2401
        %v2403 = vadd.f32 %v2399, %v2402
        %vm2404 = vweird.f32 %v932
        %vm2405 = vweird.f32 %v2399
        %vm2406 = vmor %vm2404, %vm2405
        %v2407 = vsel %vm2406, %v2399, %v2403
        %v2408 = vand.u32 2147483647, %v932
        %vm2409 = vcmp.eq.f32.partialorder %v2408, 8.507059e+37
        %v2410 = vand.u32 %v932, 2147483648
        %v2411 = vor.u32 1.1754944e-38, %v2410
        %v2412 = vsel %vm2409, %v2411, %v2407
        %v2413 = vrcp.pop %v933
        %v2414 = vmul.f32 %v933, %v2413
        %v2415 = vsub.f32 1.0, %v2414
        %v2416 = vmul.f32 %v2413, %v2415
        %v2417 = vadd.f32 %v2413, %v2416
        %vm2418 = vweird.f32 %v933
        %vm2419 = vweird.f32 %v2413
        %vm2420 = vmor %vm2418, %vm2419
        %v2421 = vsel %vm2420, %v2413, %v2417
        %v2422 = vand.u32 2147483647, %v933
        %vm2423 = vcmp.eq.f32.partialorder %v2422, 8.507059e+37
        %v2424 = vand.u32 %v933, 2147483648
        %v2425 = vor.u32 1.1754944e-38, %v2424
        %v2426 = vsel %vm2423, %v2425, %v2421
        %v2427 = vrcp.pop %v934
        %v2428 = vmul.f32 %v934, %v2427
        %v2429 = vsub.f32 1.0, %v2428
        %v2430 = vmul.f32 %v2427, %v2429
        %v2431 = vadd.f32 %v2427, %v2430
        %vm2432 = vweird.f32 %v934
        %vm2433 = vweird.f32 %v2427
        %vm2434 = vmor %vm2432, %vm2433
        %v2435 = vsel %vm2434, %v2427, %v2431
        %v2436 = vand.u32 2147483647, %v934
        %vm2437 = vcmp.eq.f32.partialorder %v2436, 8.507059e+37
        %v2438 = vand.u32 %v934, 2147483648
        %v2439 = vor.u32 1.1754944e-38, %v2438
        %v2440 = vsel %vm2437, %v2439, %v2435
        %v2441 = vrcp.pop %v935
        %v2442 = vmul.f32 %v935, %v2441
        %v2443 = vsub.f32 1.0, %v2442
        %v2444 = vmul.f32 %v2441, %v2443
        %v2445 = vadd.f32 %v2441, %v2444
        %vm2446 = vweird.f32 %v935
        %vm2447 = vweird.f32 %v2441
        %vm2448 = vmor %vm2446, %vm2447
        %v2449 = vsel %vm2448, %v2441, %v2445
        %v2450 = vand.u32 2147483647, %v935
        %vm2451 = vcmp.eq.f32.partialorder %v2450, 8.507059e+37
        %v2452 = vand.u32 %v935, 2147483648
        %v2453 = vor.u32 1.1754944e-38, %v2452
        %v2454 = vsel %vm2451, %v2453, %v2449
        %v2455 = vrcp.pop %v936
        %v2456 = vmul.f32 %v936, %v2455
        %v2457 = vsub.f32 1.0, %v2456
        %v2458 = vmul.f32 %v2455, %v2457
        %v2459 = vadd.f32 %v2455, %v2458
        %vm2460 = vweird.f32 %v936
        %vm2461 = vweird.f32 %v2455
        %vm2462 = vmor %vm2460, %vm2461
        %v2463 = vsel %vm2462, %v2455, %v2459
        %v2464 = vand.u32 2147483647, %v936
        %vm2465 = vcmp.eq.f32.partialorder %v2464, 8.507059e+37
        %v2466 = vand.u32 %v936, 2147483648
        %v2467 = vor.u32 1.1754944e-38, %v2466
        %v2468 = vsel %vm2465, %v2467, %v2463
        %v2469 = vrcp.pop %v937
        %v2470 = vmul.f32 %v937, %v2469
        %v2471 = vsub.f32 1.0, %v2470
        %v2472 = vmul.f32 %v2469, %v2471
        %v2473 = vadd.f32 %v2469, %v2472
        %vm2474 = vweird.f32 %v937
        %vm2475 = vweird.f32 %v2469
        %vm2476 = vmor %vm2474, %vm2475
        %v2477 = vsel %vm2476, %v2469, %v2473
        %v2478 = vand.u32 2147483647, %v937
        %vm2479 = vcmp.eq.f32.partialorder %v2478, 8.507059e+37
        %v2480 = vand.u32 %v937, 2147483648
        %v2481 = vor.u32 1.1754944e-38, %v2480
        %v2482 = vsel %vm2479, %v2481, %v2477
        %v2483 = vrcp.pop %v938
        %v2484 = vmul.f32 %v938, %v2483
        %v2485 = vsub.f32 1.0, %v2484
        %v2486 = vmul.f32 %v2483, %v2485
        %v2487 = vadd.f32 %v2483, %v2486
        %vm2488 = vweird.f32 %v938
        %vm2489 = vweird.f32 %v2483
        %vm2490 = vmor %vm2488, %vm2489
        %v2491 = vsel %vm2490, %v2483, %v2487
        %v2492 = vand.u32 2147483647, %v938
        %vm2493 = vcmp.eq.f32.partialorder %v2492, 8.507059e+37
        %v2494 = vand.u32 %v938, 2147483648
        %v2495 = vor.u32 1.1754944e-38, %v2494
        %v2496 = vsel %vm2493, %v2495, %v2491
        %v2497 = vrcp.pop %v939
        %v2498 = vmul.f32 %v939, %v2497
        %v2499 = vsub.f32 1.0, %v2498
        %v2500 = vmul.f32 %v2497, %v2499
        %v2501 = vadd.f32 %v2497, %v2500
        %vm2502 = vweird.f32 %v939
        %vm2503 = vweird.f32 %v2497
        %vm2504 = vmor %vm2502, %vm2503
        %v2505 = vsel %vm2504, %v2497, %v2501
        %v2506 = vand.u32 2147483647, %v939
        %vm2507 = vcmp.eq.f32.partialorder %v2506, 8.507059e+37
        %v2508 = vand.u32 %v939, 2147483648
        %v2509 = vor.u32 1.1754944e-38, %v2508
        %v2510 = vsel %vm2507, %v2509, %v2505
        %v2511 = vrcp.pop %v940
        %v2512 = vmul.f32 %v940, %v2511
        %v2513 = vsub.f32 1.0, %v2512
        %v2514 = vmul.f32 %v2511, %v2513
        %v2515 = vadd.f32 %v2511, %v2514
        %vm2516 = vweird.f32 %v940
        %vm2517 = vweird.f32 %v2511
        %vm2518 = vmor %vm2516, %vm2517
        %v2519 = vsel %vm2518, %v2511, %v2515
        %v2520 = vand.u32 2147483647, %v940
        %vm2521 = vcmp.eq.f32.partialorder %v2520, 8.507059e+37
        %v2522 = vand.u32 %v940, 2147483648
        %v2523 = vor.u32 1.1754944e-38, %v2522
        %v2524 = vsel %vm2521, %v2523, %v2519
        %v2525 = vrcp.pop %v941
        %v2526 = vmul.f32 %v941, %v2525
        %v2527 = vsub.f32 1.0, %v2526
        %v2528 = vmul.f32 %v2525, %v2527
        %v2529 = vadd.f32 %v2525, %v2528
        %vm2530 = vweird.f32 %v941
        %vm2531 = vweird.f32 %v2525
        %vm2532 = vmor %vm2530, %vm2531
        %v2533 = vsel %vm2532, %v2525, %v2529
        %v2534 = vand.u32 2147483647, %v941
        %vm2535 = vcmp.eq.f32.partialorder %v2534, 8.507059e+37
        %v2536 = vand.u32 %v941, 2147483648
        %v2537 = vor.u32 1.1754944e-38, %v2536
        %v2538 = vsel %vm2535, %v2537, %v2533
        %v2539 = vrcp.pop %v942
        %v2540 = vmul.f32 %v942, %v2539
        %v2541 = vsub.f32 1.0, %v2540
        %v2542 = vmul.f32 %v2539, %v2541
        %v2543 = vadd.f32 %v2539, %v2542
        %vm2544 = vweird.f32 %v942
        %vm2545 = vweird.f32 %v2539
        %vm2546 = vmor %vm2544, %vm2545
        %v2547 = vsel %vm2546, %v2539, %v2543
        %v2548 = vand.u32 2147483647, %v942
        %vm2549 = vcmp.eq.f32.partialorder %v2548, 8.507059e+37
        %v2550 = vand.u32 %v942, 2147483648
        %v2551 = vor.u32 1.1754944e-38, %v2550
        %v2552 = vsel %vm2549, %v2551, %v2547
        %v2553 = vrcp.pop %v943
        %v2554 = vmul.f32 %v943, %v2553
        %v2555 = vsub.f32 1.0, %v2554
        %v2556 = vmul.f32 %v2553, %v2555
        %v2557 = vadd.f32 %v2553, %v2556
        %vm2558 = vweird.f32 %v943
        %vm2559 = vweird.f32 %v2553
        %vm2560 = vmor %vm2558, %vm2559
        %v2561 = vsel %vm2560, %v2553, %v2557
        %v2562 = vand.u32 2147483647, %v943
        %vm2563 = vcmp.eq.f32.partialorder %v2562, 8.507059e+37
        %v2564 = vand.u32 %v943, 2147483648
        %v2565 = vor.u32 1.1754944e-38, %v2564
        %v2566 = vsel %vm2563, %v2565, %v2561
        %v2567 = vrcp.pop %v944
        %v2568 = vmul.f32 %v944, %v2567
        %v2569 = vsub.f32 1.0, %v2568
        %v2570 = vmul.f32 %v2567, %v2569
        %v2571 = vadd.f32 %v2567, %v2570
        %vm2572 = vweird.f32 %v944
        %vm2573 = vweird.f32 %v2567
        %vm2574 = vmor %vm2572, %vm2573
        %v2575 = vsel %vm2574, %v2567, %v2571
        %v2576 = vand.u32 2147483647, %v944
        %vm2577 = vcmp.eq.f32.partialorder %v2576, 8.507059e+37
        %v2578 = vand.u32 %v944, 2147483648
        %v2579 = vor.u32 1.1754944e-38, %v2578
        %v2580 = vsel %vm2577, %v2579, %v2575
        %v2581 = vrcp.pop %v945
        %v2582 = vmul.f32 %v945, %v2581
        %v2583 = vsub.f32 1.0, %v2582
        %v2584 = vmul.f32 %v2581, %v2583
        %v2585 = vadd.f32 %v2581, %v2584
        %vm2586 = vweird.f32 %v945
        %vm2587 = vweird.f32 %v2581
        %vm2588 = vmor %vm2586, %vm2587
        %v2589 = vsel %vm2588, %v2581, %v2585
        %v2590 = vand.u32 2147483647, %v945
        %vm2591 = vcmp.eq.f32.partialorder %v2590, 8.507059e+37
        %v2592 = vand.u32 %v945, 2147483648
        %v2593 = vor.u32 1.1754944e-38, %v2592
        %v2594 = vsel %vm2591, %v2593, %v2589
        %v2595 = vrcp.pop %v946
        %v2596 = vmul.f32 %v946, %v2595
        %v2597 = vsub.f32 1.0, %v2596
        %v2598 = vmul.f32 %v2595, %v2597
        %v2599 = vadd.f32 %v2595, %v2598
        %vm2600 = vweird.f32 %v946
        %vm2601 = vweird.f32 %v2595
        %vm2602 = vmor %vm2600, %vm2601
        %v2603 = vsel %vm2602, %v2595, %v2599
        %v2604 = vand.u32 2147483647, %v946
        %vm2605 = vcmp.eq.f32.partialorder %v2604, 8.507059e+37
        %v2606 = vand.u32 %v946, 2147483648
        %v2607 = vor.u32 1.1754944e-38, %v2606
        %v2608 = vsel %vm2605, %v2607, %v2603
        %v2609 = vrcp.pop %v947
        %v2610 = vmul.f32 %v947, %v2609
        %v2611 = vsub.f32 1.0, %v2610
        %v2612 = vmul.f32 %v2609, %v2611
        %v2613 = vadd.f32 %v2609, %v2612
        %vm2614 = vweird.f32 %v947
        %vm2615 = vweird.f32 %v2609
        %vm2616 = vmor %vm2614, %vm2615
        %v2617 = vsel %vm2616, %v2609, %v2613
        %v2618 = vand.u32 2147483647, %v947
        %vm2619 = vcmp.eq.f32.partialorder %v2618, 8.507059e+37
        %v2620 = vand.u32 %v947, 2147483648
        %v2621 = vor.u32 1.1754944e-38, %v2620
        %v2622 = vsel %vm2619, %v2621, %v2617
        %v2623 = vrcp.pop %v948
        %v2624 = vmul.f32 %v948, %v2623
        %v2625 = vsub.f32 1.0, %v2624
        %v2626 = vmul.f32 %v2623, %v2625
        %v2627 = vadd.f32 %v2623, %v2626
        %vm2628 = vweird.f32 %v948
        %vm2629 = vweird.f32 %v2623
        %vm2630 = vmor %vm2628, %vm2629
        %v2631 = vsel %vm2630, %v2623, %v2627
        %v2632 = vand.u32 2147483647, %v948
        %vm2633 = vcmp.eq.f32.partialorder %v2632, 8.507059e+37
        %v2634 = vand.u32 %v948, 2147483648
        %v2635 = vor.u32 1.1754944e-38, %v2634
        %v2636 = vsel %vm2633, %v2635, %v2631
        %v2637 = vrcp.pop %v949
        %v2638 = vmul.f32 %v949, %v2637
        %v2639 = vsub.f32 1.0, %v2638
        %v2640 = vmul.f32 %v2637, %v2639
        %v2641 = vadd.f32 %v2637, %v2640
        %vm2642 = vweird.f32 %v949
        %vm2643 = vweird.f32 %v2637
        %vm2644 = vmor %vm2642, %vm2643
        %v2645 = vsel %vm2644, %v2637, %v2641
        %v2646 = vand.u32 2147483647, %v949
        %vm2647 = vcmp.eq.f32.partialorder %v2646, 8.507059e+37
        %v2648 = vand.u32 %v949, 2147483648
        %v2649 = vor.u32 1.1754944e-38, %v2648
        %v2650 = vsel %vm2647, %v2649, %v2645
        %v2651 = vrcp.pop %v950
        %v2652 = vmul.f32 %v950, %v2651
        %v2653 = vsub.f32 1.0, %v2652
        %v2654 = vmul.f32 %v2651, %v2653
        %v2655 = vadd.f32 %v2651, %v2654
        %vm2656 = vweird.f32 %v950
        %vm2657 = vweird.f32 %v2651
        %vm2658 = vmor %vm2656, %vm2657
        %v2659 = vsel %vm2658, %v2651, %v2655
        %v2660 = vand.u32 2147483647, %v950
        %vm2661 = vcmp.eq.f32.partialorder %v2660, 8.507059e+37
        %v2662 = vand.u32 %v950, 2147483648
        %v2663 = vor.u32 1.1754944e-38, %v2662
        %v2664 = vsel %vm2661, %v2663, %v2659
        %v2665 = vrcp.pop %v951
        %v2666 = vmul.f32 %v951, %v2665
        %v2667 = vsub.f32 1.0, %v2666
        %v2668 = vmul.f32 %v2665, %v2667
        %v2669 = vadd.f32 %v2665, %v2668
        %vm2670 = vweird.f32 %v951
        %vm2671 = vweird.f32 %v2665
        %vm2672 = vmor %vm2670, %vm2671
        %v2673 = vsel %vm2672, %v2665, %v2669
        %v2674 = vand.u32 2147483647, %v951
        %vm2675 = vcmp.eq.f32.partialorder %v2674, 8.507059e+37
        %v2676 = vand.u32 %v951, 2147483648
        %v2677 = vor.u32 1.1754944e-38, %v2676
        %v2678 = vsel %vm2675, %v2677, %v2673
        %v2679 = vrcp.pop %v952
        %v2680 = vmul.f32 %v952, %v2679
        %v2681 = vsub.f32 1.0, %v2680
        %v2682 = vmul.f32 %v2679, %v2681
        %v2683 = vadd.f32 %v2679, %v2682
        %vm2684 = vweird.f32 %v952
        %vm2685 = vweird.f32 %v2679
        %vm2686 = vmor %vm2684, %vm2685
        %v2687 = vsel %vm2686, %v2679, %v2683
        %v2688 = vand.u32 2147483647, %v952
        %vm2689 = vcmp.eq.f32.partialorder %v2688, 8.507059e+37
        %v2690 = vand.u32 %v952, 2147483648
        %v2691 = vor.u32 1.1754944e-38, %v2690
        %v2692 = vsel %vm2689, %v2691, %v2687
        %v2693 = vrcp.pop %v953
        %v2694 = vmul.f32 %v953, %v2693
        %v2695 = vsub.f32 1.0, %v2694
        %v2696 = vmul.f32 %v2693, %v2695
        %v2697 = vadd.f32 %v2693, %v2696
        %vm2698 = vweird.f32 %v953
        %vm2699 = vweird.f32 %v2693
        %vm2700 = vmor %vm2698, %vm2699
        %v2701 = vsel %vm2700, %v2693, %v2697
        %v2702 = vand.u32 2147483647, %v953
        %vm2703 = vcmp.eq.f32.partialorder %v2702, 8.507059e+37
        %v2704 = vand.u32 %v953, 2147483648
        %v2705 = vor.u32 1.1754944e-38, %v2704
        %v2706 = vsel %vm2703, %v2705, %v2701
        %v2707 = vrcp.pop %v954
        %v2708 = vmul.f32 %v954, %v2707
        %v2709 = vsub.f32 1.0, %v2708
        %v2710 = vmul.f32 %v2707, %v2709
        %v2711 = vadd.f32 %v2707, %v2710
        %vm2712 = vweird.f32 %v954
        %vm2713 = vweird.f32 %v2707
        %vm2714 = vmor %vm2712, %vm2713
        %v2715 = vsel %vm2714, %v2707, %v2711
        %v2716 = vand.u32 2147483647, %v954
        %vm2717 = vcmp.eq.f32.partialorder %v2716, 8.507059e+37
        %v2718 = vand.u32 %v954, 2147483648
        %v2719 = vor.u32 1.1754944e-38, %v2718
        %v2720 = vsel %vm2717, %v2719, %v2715
        %v2721 = vrcp.pop %v955
        %v2722 = vmul.f32 %v955, %v2721
        %v2723 = vsub.f32 1.0, %v2722
        %v2724 = vmul.f32 %v2721, %v2723
        %v2725 = vadd.f32 %v2721, %v2724
        %vm2726 = vweird.f32 %v955
        %vm2727 = vweird.f32 %v2721
        %vm2728 = vmor %vm2726, %vm2727
        %v2729 = vsel %vm2728, %v2721, %v2725
        %v2730 = vand.u32 2147483647, %v955
        %vm2731 = vcmp.eq.f32.partialorder %v2730, 8.507059e+37
        %v2732 = vand.u32 %v955, 2147483648
        %v2733 = vor.u32 1.1754944e-38, %v2732
        %v2734 = vsel %vm2731, %v2733, %v2729
        %v2735 = vrcp.pop %v956
        %v2736 = vmul.f32 %v956, %v2735
        %v2737 = vsub.f32 1.0, %v2736
        %v2738 = vmul.f32 %v2735, %v2737
        %v2739 = vadd.f32 %v2735, %v2738
        %vm2740 = vweird.f32 %v956
        %vm2741 = vweird.f32 %v2735
        %vm2742 = vmor %vm2740, %vm2741
        %v2743 = vsel %vm2742, %v2735, %v2739
        %v2744 = vand.u32 2147483647, %v956
        %vm2745 = vcmp.eq.f32.partialorder %v2744, 8.507059e+37
        %v2746 = vand.u32 %v956, 2147483648
        %v2747 = vor.u32 1.1754944e-38, %v2746
        %v2748 = vsel %vm2745, %v2747, %v2743
        %v2749 = vmul.f32 %v181, %v970
        %v2750 = vmul.f32 %v182, %v984
        %v2751 = vmul.f32 %v183, %v998
        %v2752 = vmul.f32 %v184, %v1012
        %v2753 = vmul.f32 %v185, %v1026
        %v2754 = vmul.f32 %v186, %v1040
        %v2755 = vmul.f32 %v187, %v1054
        %v2756 = vmul.f32 %v188, %v1068
        %v2757 = vmul.f32 %v189, %v1082
        %v2758 = vmul.f32 %v190, %v1096
        %v2759 = vmul.f32 %v191, %v1110
        %v2760 = vmul.f32 %v192, %v1124
        %v2761 = vmul.f32 %v193, %v1138
        %v2762 = vmul.f32 %v194, %v1152
        %v2763 = vmul.f32 %v195, %v1166
        %v2764 = vmul.f32 %v196, %v1180
        %v2765 = vmul.f32 %v197, %v1194
        %v2766 = vmul.f32 %v198, %v1208
        %v2767 = vmul.f32 %v199, %v1222
        %v2768 = vmul.f32 %v200, %v1236
        %v2769 = vmul.f32 %v201, %v1250
        %v2770 = vmul.f32 %v202, %v1264
        %v2771 = vmul.f32 %v203, %v1278
        %v2772 = vmul.f32 %v204, %v1292
        %v2773 = vmul.f32 %v205, %v1306
        %v2774 = vmul.f32 %v206, %v1320
        %v2775 = vmul.f32 %v207, %v1334
        %v2776 = vmul.f32 %v208, %v1348
        %v2777 = vmul.f32 %v209, %v1362
        %v2778 = vmul.f32 %v210, %v1376
        %v2779 = vmul.f32 %v211, %v1390
        %v2780 = vmul.f32 %v212, %v1404
        %v2781 = vmul.f32 %v213, %v1418
        %v2782 = vmul.f32 %v214, %v1432
        %v2783 = vmul.f32 %v215, %v1446
        %v2784 = vmul.f32 %v216, %v1460
        %v2785 = vmul.f32 %v217, %v1474
        %v2786 = vmul.f32 %v218, %v1488
        %v2787 = vmul.f32 %v219, %v1502
        %v2788 = vmul.f32 %v220, %v1516
        %v2789 = vmul.f32 %v221, %v1530
        %v2790 = vmul.f32 %v222, %v1544
        %v2791 = vmul.f32 %v223, %v1558
        %v2792 = vmul.f32 %v224, %v1572
        %v2793 = vmul.f32 %v225, %v1586
        %v2794 = vmul.f32 %v226, %v1600
        %v2795 = vmul.f32 %v227, %v1614
        %v2796 = vmul.f32 %v228, %v1628
        %v2797 = vmul.f32 %v229, %v1642
        %v2798 = vmul.f32 %v230, %v1656
        %v2799 = vmul.f32 %v231, %v1670
        %v2800 = vmul.f32 %v232, %v1684
        %v2801 = vmul.f32 %v233, %v1698
        %v2802 = vmul.f32 %v234, %v1712
        %v2803 = vmul.f32 %v235, %v1726
        %v2804 = vmul.f32 %v236, %v1740
        %v2805 = vmul.f32 %v237, %v1754
        %v2806 = vmul.f32 %v238, %v1768
        %v2807 = vmul.f32 %v239, %v1782
        %v2808 = vmul.f32 %v240, %v1796
        %v2809 = vmul.f32 %v241, %v1810
        %v2810 = vmul.f32 %v242, %v1824
        %v2811 = vmul.f32 %v243, %v1838
        %v2812 = vmul.f32 %v244, %v1852
        %v2813 = vmul.f32 %v245, %v1866
        %v2814 = vmul.f32 %v246, %v1880
        %v2815 = vmul.f32 %v247, %v1894
        %v2816 = vmul.f32 %v248, %v1908
        %v2817 = vmul.f32 %v249, %v1922
        %v2818 = vmul.f32 %v250, %v1936
        %v2819 = vmul.f32 %v251, %v1950
        %v2820 = vmul.f32 %v252, %v1964
        %v2821 = vmul.f32 %v253, %v1978
        %v2822 = vmul.f32 %v254, %v1992
        %v2823 = vmul.f32 %v255, %v2006
        %v2824 = vmul.f32 %v256, %v2020
        %v2825 = vmul.f32 %v257, %v2034
        %v2826 = vmul.f32 %v258, %v2048
        %v2827 = vmul.f32 %v259, %v2062
        %v2828 = vmul.f32 %v260, %v2076
        %v2829 = vmul.f32 %v261, %v2090
        %v2830 = vmul.f32 %v262, %v2104
        %v2831 = vmul.f32 %v263, %v2118
        %v2832 = vmul.f32 %v264, %v2132
        %v2833 = vmul.f32 %v265, %v2146
        %v2834 = vmul.f32 %v266, %v2160
        %v2835 = vmul.f32 %v267, %v2174
        %v2836 = vmul.f32 %v268, %v2188
        %v2837 = vmul.f32 %v269, %v2202
        %v2838 = vmul.f32 %v270, %v2216
        %v2839 = vmul.f32 %v271, %v2230
        %v2840 = vmul.f32 %v272, %v2244
        %v2841 = vmul.f32 %v273, %v2258
        %v2842 = vmul.f32 %v274, %v2272
        %v2843 = vmul.f32 %v275, %v2286
        %v2844 = vmul.f32 %v276, %v2300
        %v2845 = vmul.f32 %v277, %v2314
        %v2846 = vmul.f32 %v278, %v2328
        %v2847 = vmul.f32 %v279, %v2342
        %v2848 = vmul.f32 %v280, %v2356
        %v2849 = vmul.f32 %v281, %v2370
        %v2850 = vmul.f32 %v282, %v2384
        %v2851 = vmul.f32 %v283, %v2398
        %v2852 = vmul.f32 %v284, %v2412
        %v2853 = vmul.f32 %v285, %v2426
        %v2854 = vmul.f32 %v286, %v2440
        %v2855 = vmul.f32 %v287, %v2454
        %v2856 = vmul.f32 %v288, %v2468
        %v2857 = vmul.f32 %v289, %v2482
        %v2858 = vmul.f32 %v290, %v2496
        %v2859 = vmul.f32 %v291, %v2510
        %v2860 = vmul.f32 %v292, %v2524
        %v2861 = vmul.f32 %v293, %v2538
        %v2862 = vmul.f32 %v294, %v2552
        %v2863 = vmul.f32 %v295, %v2566
        %v2864 = vmul.f32 %v296, %v2580
        %v2865 = vmul.f32 %v297, %v2594
        %v2866 = vmul.f32 %v298, %v2608
        %v2867 = vmul.f32 %v299, %v2622
        %v2868 = vmul.f32 %v300, %v2636
        %v2869 = vmul.f32 %v301, %v2650
        %v2870 = vmul.f32 %v302, %v2664
        %v2871 = vmul.f32 %v303, %v2678
        %v2872 = vmul.f32 %v304, %v2692
        %v2873 = vmul.f32 %v305, %v2706
        %v2874 = vmul.f32 %v306, %v2720
        %v2875 = vmul.f32 %v307, %v2734
        %v2876 = vmul.f32 %v308, %v2748
        %v2877 = vrcp.pop %v2749
        %v2878 = vmul.f32 %v2749, %v2877
        %v2879 = vsub.f32 1.0, %v2878
        %v2880 = vmul.f32 %v2877, %v2879
        %v2881 = vadd.f32 %v2877, %v2880
        %vm2882 = vweird.f32 %v2749
        %vm2883 = vweird.f32 %v2877
        %vm2884 = vmor %vm2882, %vm2883
        %v2885 = vsel %vm2884, %v2877, %v2881
        %v2886 = vand.u32 2147483647, %v2749
        %vm2887 = vcmp.eq.f32.partialorder %v2886, 8.507059e+37
        %v2888 = vand.u32 %v2749, 2147483648
        %v2889 = vor.u32 1.1754944e-38, %v2888
        %v2890 = vsel %vm2887, %v2889, %v2885
        %v2891 = vmul.f32 %v181, %v2890
        %v2892 = vrcp.pop %v2750
        %v2893 = vmul.f32 %v2750, %v2892
        %v2894 = vsub.f32 1.0, %v2893
        %v2895 = vmul.f32 %v2892, %v2894
        %v2896 = vadd.f32 %v2892, %v2895
        %vm2897 = vweird.f32 %v2750
        %vm2898 = vweird.f32 %v2892
        %vm2899 = vmor %vm2897, %vm2898
        %v2900 = vsel %vm2899, %v2892, %v2896
        %v2901 = vand.u32 2147483647, %v2750
        %vm2902 = vcmp.eq.f32.partialorder %v2901, 8.507059e+37
        %v2903 = vand.u32 %v2750, 2147483648
        %v2904 = vor.u32 1.1754944e-38, %v2903
        %v2905 = vsel %vm2902, %v2904, %v2900
        %v2906 = vmul.f32 %v182, %v2905
        %v2907 = vrcp.pop %v2751
        %v2908 = vmul.f32 %v2751, %v2907
        %v2909 = vsub.f32 1.0, %v2908
        %v2910 = vmul.f32 %v2907, %v2909
        %v2911 = vadd.f32 %v2907, %v2910
        %vm2912 = vweird.f32 %v2751
        %vm2913 = vweird.f32 %v2907
        %vm2914 = vmor %vm2912, %vm2913
        %v2915 = vsel %vm2914, %v2907, %v2911
        %v2916 = vand.u32 2147483647, %v2751
        %vm2917 = vcmp.eq.f32.partialorder %v2916, 8.507059e+37
        %v2918 = vand.u32 %v2751, 2147483648
        %v2919 = vor.u32 1.1754944e-38, %v2918
        %v2920 = vsel %vm2917, %v2919, %v2915
        %v2921 = vmul.f32 %v183, %v2920
        %v2922 = vrcp.pop %v2752
        %v2923 = vmul.f32 %v2752, %v2922
        %v2924 = vsub.f32 1.0, %v2923
        %v2925 = vmul.f32 %v2922, %v2924
        %v2926 = vadd.f32 %v2922, %v2925
        %vm2927 = vweird.f32 %v2752
        %vm2928 = vweird.f32 %v2922
        %vm2929 = vmor %vm2927, %vm2928
        %v2930 = vsel %vm2929, %v2922, %v2926
        %v2931 = vand.u32 2147483647, %v2752
        %vm2932 = vcmp.eq.f32.partialorder %v2931, 8.507059e+37
        %v2933 = vand.u32 %v2752, 2147483648
        %v2934 = vor.u32 1.1754944e-38, %v2933
        %v2935 = vsel %vm2932, %v2934, %v2930
        %v2936 = vmul.f32 %v184, %v2935
        %v2937 = vrcp.pop %v2753
        %v2938 = vmul.f32 %v2753, %v2937
        %v2939 = vsub.f32 1.0, %v2938
        %v2940 = vmul.f32 %v2937, %v2939
        %v2941 = vadd.f32 %v2937, %v2940
        %vm2942 = vweird.f32 %v2753
        %vm2943 = vweird.f32 %v2937
        %vm2944 = vmor %vm2942, %vm2943
        %v2945 = vsel %vm2944, %v2937, %v2941
        %v2946 = vand.u32 2147483647, %v2753
        %vm2947 = vcmp.eq.f32.partialorder %v2946, 8.507059e+37
        %v2948 = vand.u32 %v2753, 2147483648
        %v2949 = vor.u32 1.1754944e-38, %v2948
        %v2950 = vsel %vm2947, %v2949, %v2945
        %v2951 = vmul.f32 %v185, %v2950
        %v2952 = vrcp.pop %v2754
        %v2953 = vmul.f32 %v2754, %v2952
        %v2954 = vsub.f32 1.0, %v2953
        %v2955 = vmul.f32 %v2952, %v2954
        %v2956 = vadd.f32 %v2952, %v2955
        %vm2957 = vweird.f32 %v2754
        %vm2958 = vweird.f32 %v2952
        %vm2959 = vmor %vm2957, %vm2958
        %v2960 = vsel %vm2959, %v2952, %v2956
        %v2961 = vand.u32 2147483647, %v2754
        %vm2962 = vcmp.eq.f32.partialorder %v2961, 8.507059e+37
        %v2963 = vand.u32 %v2754, 2147483648
        %v2964 = vor.u32 1.1754944e-38, %v2963
        %v2965 = vsel %vm2962, %v2964, %v2960
        %v2966 = vmul.f32 %v186, %v2965
        %v2967 = vrcp.pop %v2755
        %v2968 = vmul.f32 %v2755, %v2967
        %v2969 = vsub.f32 1.0, %v2968
        %v2970 = vmul.f32 %v2967, %v2969
        %v2971 = vadd.f32 %v2967, %v2970
        %vm2972 = vweird.f32 %v2755
        %vm2973 = vweird.f32 %v2967
        %vm2974 = vmor %vm2972, %vm2973
        %v2975 = vsel %vm2974, %v2967, %v2971
        %v2976 = vand.u32 2147483647, %v2755
        %vm2977 = vcmp.eq.f32.partialorder %v2976, 8.507059e+37
        %v2978 = vand.u32 %v2755, 2147483648
        %v2979 = vor.u32 1.1754944e-38, %v2978
        %v2980 = vsel %vm2977, %v2979, %v2975
        %v2981 = vmul.f32 %v187, %v2980
        %v2982 = vrcp.pop %v2756
        %v2983 = vmul.f32 %v2756, %v2982
        %v2984 = vsub.f32 1.0, %v2983
        %v2985 = vmul.f32 %v2982, %v2984
        %v2986 = vadd.f32 %v2982, %v2985
        %vm2987 = vweird.f32 %v2756
        %vm2988 = vweird.f32 %v2982
        %vm2989 = vmor %vm2987, %vm2988
        %v2990 = vsel %vm2989, %v2982, %v2986
        %v2991 = vand.u32 2147483647, %v2756
        %vm2992 = vcmp.eq.f32.partialorder %v2991, 8.507059e+37
        %v2993 = vand.u32 %v2756, 2147483648
        %v2994 = vor.u32 1.1754944e-38, %v2993
        %v2995 = vsel %vm2992, %v2994, %v2990
        %v2996 = vmul.f32 %v188, %v2995
        %v2997 = vrcp.pop %v2757
        %v2998 = vmul.f32 %v2757, %v2997
        %v2999 = vsub.f32 1.0, %v2998
        %v3000 = vmul.f32 %v2997, %v2999
        %v3001 = vadd.f32 %v2997, %v3000
        %vm3002 = vweird.f32 %v2757
        %vm3003 = vweird.f32 %v2997
        %vm3004 = vmor %vm3002, %vm3003
        %v3005 = vsel %vm3004, %v2997, %v3001
        %v3006 = vand.u32 2147483647, %v2757
        %vm3007 = vcmp.eq.f32.partialorder %v3006, 8.507059e+37
        %v3008 = vand.u32 %v2757, 2147483648
        %v3009 = vor.u32 1.1754944e-38, %v3008
        %v3010 = vsel %vm3007, %v3009, %v3005
        %v3011 = vmul.f32 %v189, %v3010
        %v3012 = vrcp.pop %v2758
        %v3013 = vmul.f32 %v2758, %v3012
        %v3014 = vsub.f32 1.0, %v3013
        %v3015 = vmul.f32 %v3012, %v3014
        %v3016 = vadd.f32 %v3012, %v3015
        %vm3017 = vweird.f32 %v2758
        %vm3018 = vweird.f32 %v3012
        %vm3019 = vmor %vm3017, %vm3018
        %v3020 = vsel %vm3019, %v3012, %v3016
        %v3021 = vand.u32 2147483647, %v2758
        %vm3022 = vcmp.eq.f32.partialorder %v3021, 8.507059e+37
        %v3023 = vand.u32 %v2758, 2147483648
        %v3024 = vor.u32 1.1754944e-38, %v3023
        %v3025 = vsel %vm3022, %v3024, %v3020
        %v3026 = vmul.f32 %v190, %v3025
        %v3027 = vrcp.pop %v2759
        %v3028 = vmul.f32 %v2759, %v3027
        %v3029 = vsub.f32 1.0, %v3028
        %v3030 = vmul.f32 %v3027, %v3029
        %v3031 = vadd.f32 %v3027, %v3030
        %vm3032 = vweird.f32 %v2759
        %vm3033 = vweird.f32 %v3027
        %vm3034 = vmor %vm3032, %vm3033
        %v3035 = vsel %vm3034, %v3027, %v3031
        %v3036 = vand.u32 2147483647, %v2759
        %vm3037 = vcmp.eq.f32.partialorder %v3036, 8.507059e+37
        %v3038 = vand.u32 %v2759, 2147483648
        %v3039 = vor.u32 1.1754944e-38, %v3038
        %v3040 = vsel %vm3037, %v3039, %v3035
        %v3041 = vmul.f32 %v191, %v3040
        %v3042 = vrcp.pop %v2760
        %v3043 = vmul.f32 %v2760, %v3042
        %v3044 = vsub.f32 1.0, %v3043
        %v3045 = vmul.f32 %v3042, %v3044
        %v3046 = vadd.f32 %v3042, %v3045
        %vm3047 = vweird.f32 %v2760
        %vm3048 = vweird.f32 %v3042
        %vm3049 = vmor %vm3047, %vm3048
        %v3050 = vsel %vm3049, %v3042, %v3046
        %v3051 = vand.u32 2147483647, %v2760
        %vm3052 = vcmp.eq.f32.partialorder %v3051, 8.507059e+37
        %v3053 = vand.u32 %v2760, 2147483648
        %v3054 = vor.u32 1.1754944e-38, %v3053
        %v3055 = vsel %vm3052, %v3054, %v3050
        %v3056 = vmul.f32 %v192, %v3055
        %v3057 = vrcp.pop %v2761
        %v3058 = vmul.f32 %v2761, %v3057
        %v3059 = vsub.f32 1.0, %v3058
        %v3060 = vmul.f32 %v3057, %v3059
        %v3061 = vadd.f32 %v3057, %v3060
        %vm3062 = vweird.f32 %v2761
        %vm3063 = vweird.f32 %v3057
        %vm3064 = vmor %vm3062, %vm3063
        %v3065 = vsel %vm3064, %v3057, %v3061
        %v3066 = vand.u32 2147483647, %v2761
        %vm3067 = vcmp.eq.f32.partialorder %v3066, 8.507059e+37
        %v3068 = vand.u32 %v2761, 2147483648
        %v3069 = vor.u32 1.1754944e-38, %v3068
        %v3070 = vsel %vm3067, %v3069, %v3065
        %v3071 = vmul.f32 %v193, %v3070
        %v3072 = vrcp.pop %v2762
        %v3073 = vmul.f32 %v2762, %v3072
        %v3074 = vsub.f32 1.0, %v3073
        %v3075 = vmul.f32 %v3072, %v3074
        %v3076 = vadd.f32 %v3072, %v3075
        %vm3077 = vweird.f32 %v2762
        %vm3078 = vweird.f32 %v3072
        %vm3079 = vmor %vm3077, %vm3078
        %v3080 = vsel %vm3079, %v3072, %v3076
        %v3081 = vand.u32 2147483647, %v2762
        %vm3082 = vcmp.eq.f32.partialorder %v3081, 8.507059e+37
        %v3083 = vand.u32 %v2762, 2147483648
        %v3084 = vor.u32 1.1754944e-38, %v3083
        %v3085 = vsel %vm3082, %v3084, %v3080
        %v3086 = vmul.f32 %v194, %v3085
        %v3087 = vrcp.pop %v2763
        %v3088 = vmul.f32 %v2763, %v3087
        %v3089 = vsub.f32 1.0, %v3088
        %v3090 = vmul.f32 %v3087, %v3089
        %v3091 = vadd.f32 %v3087, %v3090
        %vm3092 = vweird.f32 %v2763
        %vm3093 = vweird.f32 %v3087
        %vm3094 = vmor %vm3092, %vm3093
        %v3095 = vsel %vm3094, %v3087, %v3091
        %v3096 = vand.u32 2147483647, %v2763
        %vm3097 = vcmp.eq.f32.partialorder %v3096, 8.507059e+37
        %v3098 = vand.u32 %v2763, 2147483648
        %v3099 = vor.u32 1.1754944e-38, %v3098
        %v3100 = vsel %vm3097, %v3099, %v3095
        %v3101 = vmul.f32 %v195, %v3100
        %v3102 = vrcp.pop %v2764
        %v3103 = vmul.f32 %v2764, %v3102
        %v3104 = vsub.f32 1.0, %v3103
        %v3105 = vmul.f32 %v3102, %v3104
        %v3106 = vadd.f32 %v3102, %v3105
        %vm3107 = vweird.f32 %v2764
        %vm3108 = vweird.f32 %v3102
        %vm3109 = vmor %vm3107, %vm3108
        %v3110 = vsel %vm3109, %v3102, %v3106
        %v3111 = vand.u32 2147483647, %v2764
        %vm3112 = vcmp.eq.f32.partialorder %v3111, 8.507059e+37
        %v3113 = vand.u32 %v2764, 2147483648
        %v3114 = vor.u32 1.1754944e-38, %v3113
        %v3115 = vsel %vm3112, %v3114, %v3110
        %v3116 = vmul.f32 %v196, %v3115
        %v3117 = vrcp.pop %v2765
        %v3118 = vmul.f32 %v2765, %v3117
        %v3119 = vsub.f32 1.0, %v3118
        %v3120 = vmul.f32 %v3117, %v3119
        %v3121 = vadd.f32 %v3117, %v3120
        %vm3122 = vweird.f32 %v2765
        %vm3123 = vweird.f32 %v3117
        %vm3124 = vmor %vm3122, %vm3123
        %v3125 = vsel %vm3124, %v3117, %v3121
        %v3126 = vand.u32 2147483647, %v2765
        %vm3127 = vcmp.eq.f32.partialorder %v3126, 8.507059e+37
        %v3128 = vand.u32 %v2765, 2147483648
        %v3129 = vor.u32 1.1754944e-38, %v3128
        %v3130 = vsel %vm3127, %v3129, %v3125
        %v3131 = vmul.f32 %v197, %v3130
        %v3132 = vrcp.pop %v2766
        %v3133 = vmul.f32 %v2766, %v3132
        %v3134 = vsub.f32 1.0, %v3133
        %v3135 = vmul.f32 %v3132, %v3134
        %v3136 = vadd.f32 %v3132, %v3135
        %vm3137 = vweird.f32 %v2766
        %vm3138 = vweird.f32 %v3132
        %vm3139 = vmor %vm3137, %vm3138
        %v3140 = vsel %vm3139, %v3132, %v3136
        %v3141 = vand.u32 2147483647, %v2766
        %vm3142 = vcmp.eq.f32.partialorder %v3141, 8.507059e+37
        %v3143 = vand.u32 %v2766, 2147483648
        %v3144 = vor.u32 1.1754944e-38, %v3143
        %v3145 = vsel %vm3142, %v3144, %v3140
        %v3146 = vmul.f32 %v198, %v3145
        %v3147 = vrcp.pop %v2767
        %v3148 = vmul.f32 %v2767, %v3147
        %v3149 = vsub.f32 1.0, %v3148
        %v3150 = vmul.f32 %v3147, %v3149
        %v3151 = vadd.f32 %v3147, %v3150
        %vm3152 = vweird.f32 %v2767
        %vm3153 = vweird.f32 %v3147
        %vm3154 = vmor %vm3152, %vm3153
        %v3155 = vsel %vm3154, %v3147, %v3151
        %v3156 = vand.u32 2147483647, %v2767
        %vm3157 = vcmp.eq.f32.partialorder %v3156, 8.507059e+37
        %v3158 = vand.u32 %v2767, 2147483648
        %v3159 = vor.u32 1.1754944e-38, %v3158
        %v3160 = vsel %vm3157, %v3159, %v3155
        %v3161 = vmul.f32 %v199, %v3160
        %v3162 = vrcp.pop %v2768
        %v3163 = vmul.f32 %v2768, %v3162
        %v3164 = vsub.f32 1.0, %v3163
        %v3165 = vmul.f32 %v3162, %v3164
        %v3166 = vadd.f32 %v3162, %v3165
        %vm3167 = vweird.f32 %v2768
        %vm3168 = vweird.f32 %v3162
        %vm3169 = vmor %vm3167, %vm3168
        %v3170 = vsel %vm3169, %v3162, %v3166
        %v3171 = vand.u32 2147483647, %v2768
        %vm3172 = vcmp.eq.f32.partialorder %v3171, 8.507059e+37
        %v3173 = vand.u32 %v2768, 2147483648
        %v3174 = vor.u32 1.1754944e-38, %v3173
        %v3175 = vsel %vm3172, %v3174, %v3170
        %v3176 = vmul.f32 %v200, %v3175
        %v3177 = vrcp.pop %v2769
        %v3178 = vmul.f32 %v2769, %v3177
        %v3179 = vsub.f32 1.0, %v3178
        %v3180 = vmul.f32 %v3177, %v3179
        %v3181 = vadd.f32 %v3177, %v3180
        %vm3182 = vweird.f32 %v2769
        %vm3183 = vweird.f32 %v3177
        %vm3184 = vmor %vm3182, %vm3183
        %v3185 = vsel %vm3184, %v3177, %v3181
        %v3186 = vand.u32 2147483647, %v2769
        %vm3187 = vcmp.eq.f32.partialorder %v3186, 8.507059e+37
        %v3188 = vand.u32 %v2769, 2147483648
        %v3189 = vor.u32 1.1754944e-38, %v3188
        %v3190 = vsel %vm3187, %v3189, %v3185
        %v3191 = vmul.f32 %v201, %v3190
        %v3192 = vrcp.pop %v2770
        %v3193 = vmul.f32 %v2770, %v3192
        %v3194 = vsub.f32 1.0, %v3193
        %v3195 = vmul.f32 %v3192, %v3194
        %v3196 = vadd.f32 %v3192, %v3195
        %vm3197 = vweird.f32 %v2770
        %vm3198 = vweird.f32 %v3192
        %vm3199 = vmor %vm3197, %vm3198
        %v3200 = vsel %vm3199, %v3192, %v3196
        %v3201 = vand.u32 2147483647, %v2770
        %vm3202 = vcmp.eq.f32.partialorder %v3201, 8.507059e+37
        %v3203 = vand.u32 %v2770, 2147483648
        %v3204 = vor.u32 1.1754944e-38, %v3203
        %v3205 = vsel %vm3202, %v3204, %v3200
        %v3206 = vmul.f32 %v202, %v3205
        %v3207 = vrcp.pop %v2771
        %v3208 = vmul.f32 %v2771, %v3207
        %v3209 = vsub.f32 1.0, %v3208
        %v3210 = vmul.f32 %v3207, %v3209
        %v3211 = vadd.f32 %v3207, %v3210
        %vm3212 = vweird.f32 %v2771
        %vm3213 = vweird.f32 %v3207
        %vm3214 = vmor %vm3212, %vm3213
        %v3215 = vsel %vm3214, %v3207, %v3211
        %v3216 = vand.u32 2147483647, %v2771
        %vm3217 = vcmp.eq.f32.partialorder %v3216, 8.507059e+37
        %v3218 = vand.u32 %v2771, 2147483648
        %v3219 = vor.u32 1.1754944e-38, %v3218
        %v3220 = vsel %vm3217, %v3219, %v3215
        %v3221 = vmul.f32 %v203, %v3220
        %v3222 = vrcp.pop %v2772
        %v3223 = vmul.f32 %v2772, %v3222
        %v3224 = vsub.f32 1.0, %v3223
        %v3225 = vmul.f32 %v3222, %v3224
        %v3226 = vadd.f32 %v3222, %v3225
        %vm3227 = vweird.f32 %v2772
        %vm3228 = vweird.f32 %v3222
        %vm3229 = vmor %vm3227, %vm3228
        %v3230 = vsel %vm3229, %v3222, %v3226
        %v3231 = vand.u32 2147483647, %v2772
        %vm3232 = vcmp.eq.f32.partialorder %v3231, 8.507059e+37
        %v3233 = vand.u32 %v2772, 2147483648
        %v3234 = vor.u32 1.1754944e-38, %v3233
        %v3235 = vsel %vm3232, %v3234, %v3230
        %v3236 = vmul.f32 %v204, %v3235
        %v3237 = vrcp.pop %v2773
        %v3238 = vmul.f32 %v2773, %v3237
        %v3239 = vsub.f32 1.0, %v3238
        %v3240 = vmul.f32 %v3237, %v3239
        %v3241 = vadd.f32 %v3237, %v3240
        %vm3242 = vweird.f32 %v2773
        %vm3243 = vweird.f32 %v3237
        %vm3244 = vmor %vm3242, %vm3243
        %v3245 = vsel %vm3244, %v3237, %v3241
        %v3246 = vand.u32 2147483647, %v2773
        %vm3247 = vcmp.eq.f32.partialorder %v3246, 8.507059e+37
        %v3248 = vand.u32 %v2773, 2147483648
        %v3249 = vor.u32 1.1754944e-38, %v3248
        %v3250 = vsel %vm3247, %v3249, %v3245
        %v3251 = vmul.f32 %v205, %v3250
        %v3252 = vrcp.pop %v2774
        %v3253 = vmul.f32 %v2774, %v3252
        %v3254 = vsub.f32 1.0, %v3253
        %v3255 = vmul.f32 %v3252, %v3254
        %v3256 = vadd.f32 %v3252, %v3255
        %vm3257 = vweird.f32 %v2774
        %vm3258 = vweird.f32 %v3252
        %vm3259 = vmor %vm3257, %vm3258
        %v3260 = vsel %vm3259, %v3252, %v3256
        %v3261 = vand.u32 2147483647, %v2774
        %vm3262 = vcmp.eq.f32.partialorder %v3261, 8.507059e+37
        %v3263 = vand.u32 %v2774, 2147483648
        %v3264 = vor.u32 1.1754944e-38, %v3263
        %v3265 = vsel %vm3262, %v3264, %v3260
        %v3266 = vmul.f32 %v206, %v3265
        %v3267 = vrcp.pop %v2775
        %v3268 = vmul.f32 %v2775, %v3267
        %v3269 = vsub.f32 1.0, %v3268
        %v3270 = vmul.f32 %v3267, %v3269
        %v3271 = vadd.f32 %v3267, %v3270
        %vm3272 = vweird.f32 %v2775
        %vm3273 = vweird.f32 %v3267
        %vm3274 = vmor %vm3272, %vm3273
        %v3275 = vsel %vm3274, %v3267, %v3271
        %v3276 = vand.u32 2147483647, %v2775
        %vm3277 = vcmp.eq.f32.partialorder %v3276, 8.507059e+37
        %v3278 = vand.u32 %v2775, 2147483648
        %v3279 = vor.u32 1.1754944e-38, %v3278
        %v3280 = vsel %vm3277, %v3279, %v3275
        %v3281 = vmul.f32 %v207, %v3280
        %v3282 = vrcp.pop %v2776
        %v3283 = vmul.f32 %v2776, %v3282
        %v3284 = vsub.f32 1.0, %v3283
        %v3285 = vmul.f32 %v3282, %v3284
        %v3286 = vadd.f32 %v3282, %v3285
        %vm3287 = vweird.f32 %v2776
        %vm3288 = vweird.f32 %v3282
        %vm3289 = vmor %vm3287, %vm3288
        %v3290 = vsel %vm3289, %v3282, %v3286
        %v3291 = vand.u32 2147483647, %v2776
        %vm3292 = vcmp.eq.f32.partialorder %v3291, 8.507059e+37
        %v3293 = vand.u32 %v2776, 2147483648
        %v3294 = vor.u32 1.1754944e-38, %v3293
        %v3295 = vsel %vm3292, %v3294, %v3290
        %v3296 = vmul.f32 %v208, %v3295
        %v3297 = vrcp.pop %v2777
        %v3298 = vmul.f32 %v2777, %v3297
        %v3299 = vsub.f32 1.0, %v3298
        %v3300 = vmul.f32 %v3297, %v3299
        %v3301 = vadd.f32 %v3297, %v3300
        %vm3302 = vweird.f32 %v2777
        %vm3303 = vweird.f32 %v3297
        %vm3304 = vmor %vm3302, %vm3303
        %v3305 = vsel %vm3304, %v3297, %v3301
        %v3306 = vand.u32 2147483647, %v2777
        %vm3307 = vcmp.eq.f32.partialorder %v3306, 8.507059e+37
        %v3308 = vand.u32 %v2777, 2147483648
        %v3309 = vor.u32 1.1754944e-38, %v3308
        %v3310 = vsel %vm3307, %v3309, %v3305
        %v3311 = vmul.f32 %v209, %v3310
        %v3312 = vrcp.pop %v2778
        %v3313 = vmul.f32 %v2778, %v3312
        %v3314 = vsub.f32 1.0, %v3313
        %v3315 = vmul.f32 %v3312, %v3314
        %v3316 = vadd.f32 %v3312, %v3315
        %vm3317 = vweird.f32 %v2778
        %vm3318 = vweird.f32 %v3312
        %vm3319 = vmor %vm3317, %vm3318
        %v3320 = vsel %vm3319, %v3312, %v3316
        %v3321 = vand.u32 2147483647, %v2778
        %vm3322 = vcmp.eq.f32.partialorder %v3321, 8.507059e+37
        %v3323 = vand.u32 %v2778, 2147483648
        %v3324 = vor.u32 1.1754944e-38, %v3323
        %v3325 = vsel %vm3322, %v3324, %v3320
        %v3326 = vmul.f32 %v210, %v3325
        %v3327 = vrcp.pop %v2779
        %v3328 = vmul.f32 %v2779, %v3327
        %v3329 = vsub.f32 1.0, %v3328
        %v3330 = vmul.f32 %v3327, %v3329
        %v3331 = vadd.f32 %v3327, %v3330
        %vm3332 = vweird.f32 %v2779
        %vm3333 = vweird.f32 %v3327
        %vm3334 = vmor %vm3332, %vm3333
        %v3335 = vsel %vm3334, %v3327, %v3331
        %v3336 = vand.u32 2147483647, %v2779
        %vm3337 = vcmp.eq.f32.partialorder %v3336, 8.507059e+37
        %v3338 = vand.u32 %v2779, 2147483648
        %v3339 = vor.u32 1.1754944e-38, %v3338
        %v3340 = vsel %vm3337, %v3339, %v3335
        %v3341 = vmul.f32 %v211, %v3340
        %v3342 = vrcp.pop %v2780
        %v3343 = vmul.f32 %v2780, %v3342
        %v3344 = vsub.f32 1.0, %v3343
        %v3345 = vmul.f32 %v3342, %v3344
        %v3346 = vadd.f32 %v3342, %v3345
        %vm3347 = vweird.f32 %v2780
        %vm3348 = vweird.f32 %v3342
        %vm3349 = vmor %vm3347, %vm3348
        %v3350 = vsel %vm3349, %v3342, %v3346
        %v3351 = vand.u32 2147483647, %v2780
        %vm3352 = vcmp.eq.f32.partialorder %v3351, 8.507059e+37
        %v3353 = vand.u32 %v2780, 2147483648
        %v3354 = vor.u32 1.1754944e-38, %v3353
        %v3355 = vsel %vm3352, %v3354, %v3350
        %v3356 = vmul.f32 %v212, %v3355
        %v3357 = vrcp.pop %v2781
        %v3358 = vmul.f32 %v2781, %v3357
        %v3359 = vsub.f32 1.0, %v3358
        %v3360 = vmul.f32 %v3357, %v3359
        %v3361 = vadd.f32 %v3357, %v3360
        %vm3362 = vweird.f32 %v2781
        %vm3363 = vweird.f32 %v3357
        %vm3364 = vmor %vm3362, %vm3363
        %v3365 = vsel %vm3364, %v3357, %v3361
        %v3366 = vand.u32 2147483647, %v2781
        %vm3367 = vcmp.eq.f32.partialorder %v3366, 8.507059e+37
        %v3368 = vand.u32 %v2781, 2147483648
        %v3369 = vor.u32 1.1754944e-38, %v3368
        %v3370 = vsel %vm3367, %v3369, %v3365
        %v3371 = vmul.f32 %v213, %v3370
        %v3372 = vrcp.pop %v2782
        %v3373 = vmul.f32 %v2782, %v3372
        %v3374 = vsub.f32 1.0, %v3373
        %v3375 = vmul.f32 %v3372, %v3374
        %v3376 = vadd.f32 %v3372, %v3375
        %vm3377 = vweird.f32 %v2782
        %vm3378 = vweird.f32 %v3372
        %vm3379 = vmor %vm3377, %vm3378
        %v3380 = vsel %vm3379, %v3372, %v3376
        %v3381 = vand.u32 2147483647, %v2782
        %vm3382 = vcmp.eq.f32.partialorder %v3381, 8.507059e+37
        %v3383 = vand.u32 %v2782, 2147483648
        %v3384 = vor.u32 1.1754944e-38, %v3383
        %v3385 = vsel %vm3382, %v3384, %v3380
        %v3386 = vmul.f32 %v214, %v3385
        %v3387 = vrcp.pop %v2783
        %v3388 = vmul.f32 %v2783, %v3387
        %v3389 = vsub.f32 1.0, %v3388
        %v3390 = vmul.f32 %v3387, %v3389
        %v3391 = vadd.f32 %v3387, %v3390
        %vm3392 = vweird.f32 %v2783
        %vm3393 = vweird.f32 %v3387
        %vm3394 = vmor %vm3392, %vm3393
        %v3395 = vsel %vm3394, %v3387, %v3391
        %v3396 = vand.u32 2147483647, %v2783
        %vm3397 = vcmp.eq.f32.partialorder %v3396, 8.507059e+37
        %v3398 = vand.u32 %v2783, 2147483648
        %v3399 = vor.u32 1.1754944e-38, %v3398
        %v3400 = vsel %vm3397, %v3399, %v3395
        %v3401 = vmul.f32 %v215, %v3400
        %v3402 = vrcp.pop %v2784
        %v3403 = vmul.f32 %v2784, %v3402
        %v3404 = vsub.f32 1.0, %v3403
        %v3405 = vmul.f32 %v3402, %v3404
        %v3406 = vadd.f32 %v3402, %v3405
        %vm3407 = vweird.f32 %v2784
        %vm3408 = vweird.f32 %v3402
        %vm3409 = vmor %vm3407, %vm3408
        %v3410 = vsel %vm3409, %v3402, %v3406
        %v3411 = vand.u32 2147483647, %v2784
        %vm3412 = vcmp.eq.f32.partialorder %v3411, 8.507059e+37
        %v3413 = vand.u32 %v2784, 2147483648
        %v3414 = vor.u32 1.1754944e-38, %v3413
        %v3415 = vsel %vm3412, %v3414, %v3410
        %v3416 = vmul.f32 %v216, %v3415
        %v3417 = vrcp.pop %v2785
        %v3418 = vmul.f32 %v2785, %v3417
        %v3419 = vsub.f32 1.0, %v3418
        %v3420 = vmul.f32 %v3417, %v3419
        %v3421 = vadd.f32 %v3417, %v3420
        %vm3422 = vweird.f32 %v2785
        %vm3423 = vweird.f32 %v3417
        %vm3424 = vmor %vm3422, %vm3423
        %v3425 = vsel %vm3424, %v3417, %v3421
        %v3426 = vand.u32 2147483647, %v2785
        %vm3427 = vcmp.eq.f32.partialorder %v3426, 8.507059e+37
        %v3428 = vand.u32 %v2785, 2147483648
        %v3429 = vor.u32 1.1754944e-38, %v3428
        %v3430 = vsel %vm3427, %v3429, %v3425
        %v3431 = vmul.f32 %v217, %v3430
        %v3432 = vrcp.pop %v2786
        %v3433 = vmul.f32 %v2786, %v3432
        %v3434 = vsub.f32 1.0, %v3433
        %v3435 = vmul.f32 %v3432, %v3434
        %v3436 = vadd.f32 %v3432, %v3435
        %vm3437 = vweird.f32 %v2786
        %vm3438 = vweird.f32 %v3432
        %vm3439 = vmor %vm3437, %vm3438
        %v3440 = vsel %vm3439, %v3432, %v3436
        %v3441 = vand.u32 2147483647, %v2786
        %vm3442 = vcmp.eq.f32.partialorder %v3441, 8.507059e+37
        %v3443 = vand.u32 %v2786, 2147483648
        %v3444 = vor.u32 1.1754944e-38, %v3443
        %v3445 = vsel %vm3442, %v3444, %v3440
        %v3446 = vmul.f32 %v218, %v3445
        %v3447 = vrcp.pop %v2787
        %v3448 = vmul.f32 %v2787, %v3447
        %v3449 = vsub.f32 1.0, %v3448
        %v3450 = vmul.f32 %v3447, %v3449
        %v3451 = vadd.f32 %v3447, %v3450
        %vm3452 = vweird.f32 %v2787
        %vm3453 = vweird.f32 %v3447
        %vm3454 = vmor %vm3452, %vm3453
        %v3455 = vsel %vm3454, %v3447, %v3451
        %v3456 = vand.u32 2147483647, %v2787
        %vm3457 = vcmp.eq.f32.partialorder %v3456, 8.507059e+37
        %v3458 = vand.u32 %v2787, 2147483648
        %v3459 = vor.u32 1.1754944e-38, %v3458
        %v3460 = vsel %vm3457, %v3459, %v3455
        %v3461 = vmul.f32 %v219, %v3460
        %v3462 = vrcp.pop %v2788
        %v3463 = vmul.f32 %v2788, %v3462
        %v3464 = vsub.f32 1.0, %v3463
        %v3465 = vmul.f32 %v3462, %v3464
        %v3466 = vadd.f32 %v3462, %v3465
        %vm3467 = vweird.f32 %v2788
        %vm3468 = vweird.f32 %v3462
        %vm3469 = vmor %vm3467, %vm3468
        %v3470 = vsel %vm3469, %v3462, %v3466
        %v3471 = vand.u32 2147483647, %v2788
        %vm3472 = vcmp.eq.f32.partialorder %v3471, 8.507059e+37
        %v3473 = vand.u32 %v2788, 2147483648
        %v3474 = vor.u32 1.1754944e-38, %v3473
        %v3475 = vsel %vm3472, %v3474, %v3470
        %v3476 = vmul.f32 %v220, %v3475
        %v3477 = vrcp.pop %v2789
        %v3478 = vmul.f32 %v2789, %v3477
        %v3479 = vsub.f32 1.0, %v3478
        %v3480 = vmul.f32 %v3477, %v3479
        %v3481 = vadd.f32 %v3477, %v3480
        %vm3482 = vweird.f32 %v2789
        %vm3483 = vweird.f32 %v3477
        %vm3484 = vmor %vm3482, %vm3483
        %v3485 = vsel %vm3484, %v3477, %v3481
        %v3486 = vand.u32 2147483647, %v2789
        %vm3487 = vcmp.eq.f32.partialorder %v3486, 8.507059e+37
        %v3488 = vand.u32 %v2789, 2147483648
        %v3489 = vor.u32 1.1754944e-38, %v3488
        %v3490 = vsel %vm3487, %v3489, %v3485
        %v3491 = vmul.f32 %v221, %v3490
        %v3492 = vrcp.pop %v2790
        %v3493 = vmul.f32 %v2790, %v3492
        %v3494 = vsub.f32 1.0, %v3493
        %v3495 = vmul.f32 %v3492, %v3494
        %v3496 = vadd.f32 %v3492, %v3495
        %vm3497 = vweird.f32 %v2790
        %vm3498 = vweird.f32 %v3492
        %vm3499 = vmor %vm3497, %vm3498
        %v3500 = vsel %vm3499, %v3492, %v3496
        %v3501 = vand.u32 2147483647, %v2790
        %vm3502 = vcmp.eq.f32.partialorder %v3501, 8.507059e+37
        %v3503 = vand.u32 %v2790, 2147483648
        %v3504 = vor.u32 1.1754944e-38, %v3503
        %v3505 = vsel %vm3502, %v3504, %v3500
        %v3506 = vmul.f32 %v222, %v3505
        %v3507 = vrcp.pop %v2791
        %v3508 = vmul.f32 %v2791, %v3507
        %v3509 = vsub.f32 1.0, %v3508
        %v3510 = vmul.f32 %v3507, %v3509
        %v3511 = vadd.f32 %v3507, %v3510
        %vm3512 = vweird.f32 %v2791
        %vm3513 = vweird.f32 %v3507
        %vm3514 = vmor %vm3512, %vm3513
        %v3515 = vsel %vm3514, %v3507, %v3511
        %v3516 = vand.u32 2147483647, %v2791
        %vm3517 = vcmp.eq.f32.partialorder %v3516, 8.507059e+37
        %v3518 = vand.u32 %v2791, 2147483648
        %v3519 = vor.u32 1.1754944e-38, %v3518
        %v3520 = vsel %vm3517, %v3519, %v3515
        %v3521 = vmul.f32 %v223, %v3520
        %v3522 = vrcp.pop %v2792
        %v3523 = vmul.f32 %v2792, %v3522
        %v3524 = vsub.f32 1.0, %v3523
        %v3525 = vmul.f32 %v3522, %v3524
        %v3526 = vadd.f32 %v3522, %v3525
        %vm3527 = vweird.f32 %v2792
        %vm3528 = vweird.f32 %v3522
        %vm3529 = vmor %vm3527, %vm3528
        %v3530 = vsel %vm3529, %v3522, %v3526
        %v3531 = vand.u32 2147483647, %v2792
        %vm3532 = vcmp.eq.f32.partialorder %v3531, 8.507059e+37
        %v3533 = vand.u32 %v2792, 2147483648
        %v3534 = vor.u32 1.1754944e-38, %v3533
        %v3535 = vsel %vm3532, %v3534, %v3530
        %v3536 = vmul.f32 %v224, %v3535
        %v3537 = vrcp.pop %v2793
        %v3538 = vmul.f32 %v2793, %v3537
        %v3539 = vsub.f32 1.0, %v3538
        %v3540 = vmul.f32 %v3537, %v3539
        %v3541 = vadd.f32 %v3537, %v3540
        %vm3542 = vweird.f32 %v2793
        %vm3543 = vweird.f32 %v3537
        %vm3544 = vmor %vm3542, %vm3543
        %v3545 = vsel %vm3544, %v3537, %v3541
        %v3546 = vand.u32 2147483647, %v2793
        %vm3547 = vcmp.eq.f32.partialorder %v3546, 8.507059e+37
        %v3548 = vand.u32 %v2793, 2147483648
        %v3549 = vor.u32 1.1754944e-38, %v3548
        %v3550 = vsel %vm3547, %v3549, %v3545
        %v3551 = vmul.f32 %v225, %v3550
        %v3552 = vrcp.pop %v2794
        %v3553 = vmul.f32 %v2794, %v3552
        %v3554 = vsub.f32 1.0, %v3553
        %v3555 = vmul.f32 %v3552, %v3554
        %v3556 = vadd.f32 %v3552, %v3555
        %vm3557 = vweird.f32 %v2794
        %vm3558 = vweird.f32 %v3552
        %vm3559 = vmor %vm3557, %vm3558
        %v3560 = vsel %vm3559, %v3552, %v3556
        %v3561 = vand.u32 2147483647, %v2794
        %vm3562 = vcmp.eq.f32.partialorder %v3561, 8.507059e+37
        %v3563 = vand.u32 %v2794, 2147483648
        %v3564 = vor.u32 1.1754944e-38, %v3563
        %v3565 = vsel %vm3562, %v3564, %v3560
        %v3566 = vmul.f32 %v226, %v3565
        %v3567 = vrcp.pop %v2795
        %v3568 = vmul.f32 %v2795, %v3567
        %v3569 = vsub.f32 1.0, %v3568
        %v3570 = vmul.f32 %v3567, %v3569
        %v3571 = vadd.f32 %v3567, %v3570
        %vm3572 = vweird.f32 %v2795
        %vm3573 = vweird.f32 %v3567
        %vm3574 = vmor %vm3572, %vm3573
        %v3575 = vsel %vm3574, %v3567, %v3571
        %v3576 = vand.u32 2147483647, %v2795
        %vm3577 = vcmp.eq.f32.partialorder %v3576, 8.507059e+37
        %v3578 = vand.u32 %v2795, 2147483648
        %v3579 = vor.u32 1.1754944e-38, %v3578
        %v3580 = vsel %vm3577, %v3579, %v3575
        %v3581 = vmul.f32 %v227, %v3580
        %v3582 = vrcp.pop %v2796
        %v3583 = vmul.f32 %v2796, %v3582
        %v3584 = vsub.f32 1.0, %v3583
        %v3585 = vmul.f32 %v3582, %v3584
        %v3586 = vadd.f32 %v3582, %v3585
        %vm3587 = vweird.f32 %v2796
        %vm3588 = vweird.f32 %v3582
        %vm3589 = vmor %vm3587, %vm3588
        %v3590 = vsel %vm3589, %v3582, %v3586
        %v3591 = vand.u32 2147483647, %v2796
        %vm3592 = vcmp.eq.f32.partialorder %v3591, 8.507059e+37
        %v3593 = vand.u32 %v2796, 2147483648
        %v3594 = vor.u32 1.1754944e-38, %v3593
        %v3595 = vsel %vm3592, %v3594, %v3590
        %v3596 = vmul.f32 %v228, %v3595
        %v3597 = vrcp.pop %v2797
        %v3598 = vmul.f32 %v2797, %v3597
        %v3599 = vsub.f32 1.0, %v3598
        %v3600 = vmul.f32 %v3597, %v3599
        %v3601 = vadd.f32 %v3597, %v3600
        %vm3602 = vweird.f32 %v2797
        %vm3603 = vweird.f32 %v3597
        %vm3604 = vmor %vm3602, %vm3603
        %v3605 = vsel %vm3604, %v3597, %v3601
        %v3606 = vand.u32 2147483647, %v2797
        %vm3607 = vcmp.eq.f32.partialorder %v3606, 8.507059e+37
        %v3608 = vand.u32 %v2797, 2147483648
        %v3609 = vor.u32 1.1754944e-38, %v3608
        %v3610 = vsel %vm3607, %v3609, %v3605
        %v3611 = vmul.f32 %v229, %v3610
        %v3612 = vrcp.pop %v2798
        %v3613 = vmul.f32 %v2798, %v3612
        %v3614 = vsub.f32 1.0, %v3613
        %v3615 = vmul.f32 %v3612, %v3614
        %v3616 = vadd.f32 %v3612, %v3615
        %vm3617 = vweird.f32 %v2798
        %vm3618 = vweird.f32 %v3612
        %vm3619 = vmor %vm3617, %vm3618
        %v3620 = vsel %vm3619, %v3612, %v3616
        %v3621 = vand.u32 2147483647, %v2798
        %vm3622 = vcmp.eq.f32.partialorder %v3621, 8.507059e+37
        %v3623 = vand.u32 %v2798, 2147483648
        %v3624 = vor.u32 1.1754944e-38, %v3623
        %v3625 = vsel %vm3622, %v3624, %v3620
        %v3626 = vmul.f32 %v230, %v3625
        %v3627 = vrcp.pop %v2799
        %v3628 = vmul.f32 %v2799, %v3627
        %v3629 = vsub.f32 1.0, %v3628
        %v3630 = vmul.f32 %v3627, %v3629
        %v3631 = vadd.f32 %v3627, %v3630
        %vm3632 = vweird.f32 %v2799
        %vm3633 = vweird.f32 %v3627
        %vm3634 = vmor %vm3632, %vm3633
        %v3635 = vsel %vm3634, %v3627, %v3631
        %v3636 = vand.u32 2147483647, %v2799
        %vm3637 = vcmp.eq.f32.partialorder %v3636, 8.507059e+37
        %v3638 = vand.u32 %v2799, 2147483648
        %v3639 = vor.u32 1.1754944e-38, %v3638
        %v3640 = vsel %vm3637, %v3639, %v3635
        %v3641 = vmul.f32 %v231, %v3640
        %v3642 = vrcp.pop %v2800
        %v3643 = vmul.f32 %v2800, %v3642
        %v3644 = vsub.f32 1.0, %v3643
        %v3645 = vmul.f32 %v3642, %v3644
        %v3646 = vadd.f32 %v3642, %v3645
        %vm3647 = vweird.f32 %v2800
        %vm3648 = vweird.f32 %v3642
        %vm3649 = vmor %vm3647, %vm3648
        %v3650 = vsel %vm3649, %v3642, %v3646
        %v3651 = vand.u32 2147483647, %v2800
        %vm3652 = vcmp.eq.f32.partialorder %v3651, 8.507059e+37
        %v3653 = vand.u32 %v2800, 2147483648
        %v3654 = vor.u32 1.1754944e-38, %v3653
        %v3655 = vsel %vm3652, %v3654, %v3650
        %v3656 = vmul.f32 %v232, %v3655
        %v3657 = vrcp.pop %v2801
        %v3658 = vmul.f32 %v2801, %v3657
        %v3659 = vsub.f32 1.0, %v3658
        %v3660 = vmul.f32 %v3657, %v3659
        %v3661 = vadd.f32 %v3657, %v3660
        %vm3662 = vweird.f32 %v2801
        %vm3663 = vweird.f32 %v3657
        %vm3664 = vmor %vm3662, %vm3663
        %v3665 = vsel %vm3664, %v3657, %v3661
        %v3666 = vand.u32 2147483647, %v2801
        %vm3667 = vcmp.eq.f32.partialorder %v3666, 8.507059e+37
        %v3668 = vand.u32 %v2801, 2147483648
        %v3669 = vor.u32 1.1754944e-38, %v3668
        %v3670 = vsel %vm3667, %v3669, %v3665
        %v3671 = vmul.f32 %v233, %v3670
        %v3672 = vrcp.pop %v2802
        %v3673 = vmul.f32 %v2802, %v3672
        %v3674 = vsub.f32 1.0, %v3673
        %v3675 = vmul.f32 %v3672, %v3674
        %v3676 = vadd.f32 %v3672, %v3675
        %vm3677 = vweird.f32 %v2802
        %vm3678 = vweird.f32 %v3672
        %vm3679 = vmor %vm3677, %vm3678
        %v3680 = vsel %vm3679, %v3672, %v3676
        %v3681 = vand.u32 2147483647, %v2802
        %vm3682 = vcmp.eq.f32.partialorder %v3681, 8.507059e+37
        %v3683 = vand.u32 %v2802, 2147483648
        %v3684 = vor.u32 1.1754944e-38, %v3683
        %v3685 = vsel %vm3682, %v3684, %v3680
        %v3686 = vmul.f32 %v234, %v3685
        %v3687 = vrcp.pop %v2803
        %v3688 = vmul.f32 %v2803, %v3687
        %v3689 = vsub.f32 1.0, %v3688
        %v3690 = vmul.f32 %v3687, %v3689
        %v3691 = vadd.f32 %v3687, %v3690
        %vm3692 = vweird.f32 %v2803
        %vm3693 = vweird.f32 %v3687
        %vm3694 = vmor %vm3692, %vm3693
        %v3695 = vsel %vm3694, %v3687, %v3691
        %v3696 = vand.u32 2147483647, %v2803
        %vm3697 = vcmp.eq.f32.partialorder %v3696, 8.507059e+37
        %v3698 = vand.u32 %v2803, 2147483648
        %v3699 = vor.u32 1.1754944e-38, %v3698
        %v3700 = vsel %vm3697, %v3699, %v3695
        %v3701 = vmul.f32 %v235, %v3700
        %v3702 = vrcp.pop %v2804
        %v3703 = vmul.f32 %v2804, %v3702
        %v3704 = vsub.f32 1.0, %v3703
        %v3705 = vmul.f32 %v3702, %v3704
        %v3706 = vadd.f32 %v3702, %v3705
        %vm3707 = vweird.f32 %v2804
        %vm3708 = vweird.f32 %v3702
        %vm3709 = vmor %vm3707, %vm3708
        %v3710 = vsel %vm3709, %v3702, %v3706
        %v3711 = vand.u32 2147483647, %v2804
        %vm3712 = vcmp.eq.f32.partialorder %v3711, 8.507059e+37
        %v3713 = vand.u32 %v2804, 2147483648
        %v3714 = vor.u32 1.1754944e-38, %v3713
        %v3715 = vsel %vm3712, %v3714, %v3710
        %v3716 = vmul.f32 %v236, %v3715
        %v3717 = vrcp.pop %v2805
        %v3718 = vmul.f32 %v2805, %v3717
        %v3719 = vsub.f32 1.0, %v3718
        %v3720 = vmul.f32 %v3717, %v3719
        %v3721 = vadd.f32 %v3717, %v3720
        %vm3722 = vweird.f32 %v2805
        %vm3723 = vweird.f32 %v3717
        %vm3724 = vmor %vm3722, %vm3723
        %v3725 = vsel %vm3724, %v3717, %v3721
        %v3726 = vand.u32 2147483647, %v2805
        %vm3727 = vcmp.eq.f32.partialorder %v3726, 8.507059e+37
        %v3728 = vand.u32 %v2805, 2147483648
        %v3729 = vor.u32 1.1754944e-38, %v3728
        %v3730 = vsel %vm3727, %v3729, %v3725
        %v3731 = vmul.f32 %v237, %v3730
        %v3732 = vrcp.pop %v2806
        %v3733 = vmul.f32 %v2806, %v3732
        %v3734 = vsub.f32 1.0, %v3733
        %v3735 = vmul.f32 %v3732, %v3734
        %v3736 = vadd.f32 %v3732, %v3735
        %vm3737 = vweird.f32 %v2806
        %vm3738 = vweird.f32 %v3732
        %vm3739 = vmor %vm3737, %vm3738
        %v3740 = vsel %vm3739, %v3732, %v3736
        %v3741 = vand.u32 2147483647, %v2806
        %vm3742 = vcmp.eq.f32.partialorder %v3741, 8.507059e+37
        %v3743 = vand.u32 %v2806, 2147483648
        %v3744 = vor.u32 1.1754944e-38, %v3743
        %v3745 = vsel %vm3742, %v3744, %v3740
        %v3746 = vmul.f32 %v238, %v3745
        %v3747 = vrcp.pop %v2807
        %v3748 = vmul.f32 %v2807, %v3747
        %v3749 = vsub.f32 1.0, %v3748
        %v3750 = vmul.f32 %v3747, %v3749
        %v3751 = vadd.f32 %v3747, %v3750
        %vm3752 = vweird.f32 %v2807
        %vm3753 = vweird.f32 %v3747
        %vm3754 = vmor %vm3752, %vm3753
        %v3755 = vsel %vm3754, %v3747, %v3751
        %v3756 = vand.u32 2147483647, %v2807
        %vm3757 = vcmp.eq.f32.partialorder %v3756, 8.507059e+37
        %v3758 = vand.u32 %v2807, 2147483648
        %v3759 = vor.u32 1.1754944e-38, %v3758
        %v3760 = vsel %vm3757, %v3759, %v3755
        %v3761 = vmul.f32 %v239, %v3760
        %v3762 = vrcp.pop %v2808
        %v3763 = vmul.f32 %v2808, %v3762
        %v3764 = vsub.f32 1.0, %v3763
        %v3765 = vmul.f32 %v3762, %v3764
        %v3766 = vadd.f32 %v3762, %v3765
        %vm3767 = vweird.f32 %v2808
        %vm3768 = vweird.f32 %v3762
        %vm3769 = vmor %vm3767, %vm3768
        %v3770 = vsel %vm3769, %v3762, %v3766
        %v3771 = vand.u32 2147483647, %v2808
        %vm3772 = vcmp.eq.f32.partialorder %v3771, 8.507059e+37
        %v3773 = vand.u32 %v2808, 2147483648
        %v3774 = vor.u32 1.1754944e-38, %v3773
        %v3775 = vsel %vm3772, %v3774, %v3770
        %v3776 = vmul.f32 %v240, %v3775
        %v3777 = vrcp.pop %v2809
        %v3778 = vmul.f32 %v2809, %v3777
        %v3779 = vsub.f32 1.0, %v3778
        %v3780 = vmul.f32 %v3777, %v3779
        %v3781 = vadd.f32 %v3777, %v3780
        %vm3782 = vweird.f32 %v2809
        %vm3783 = vweird.f32 %v3777
        %vm3784 = vmor %vm3782, %vm3783
        %v3785 = vsel %vm3784, %v3777, %v3781
        %v3786 = vand.u32 2147483647, %v2809
        %vm3787 = vcmp.eq.f32.partialorder %v3786, 8.507059e+37
        %v3788 = vand.u32 %v2809, 2147483648
        %v3789 = vor.u32 1.1754944e-38, %v3788
        %v3790 = vsel %vm3787, %v3789, %v3785
        %v3791 = vmul.f32 %v241, %v3790
        %v3792 = vrcp.pop %v2810
        %v3793 = vmul.f32 %v2810, %v3792
        %v3794 = vsub.f32 1.0, %v3793
        %v3795 = vmul.f32 %v3792, %v3794
        %v3796 = vadd.f32 %v3792, %v3795
        %vm3797 = vweird.f32 %v2810
        %vm3798 = vweird.f32 %v3792
        %vm3799 = vmor %vm3797, %vm3798
        %v3800 = vsel %vm3799, %v3792, %v3796
        %v3801 = vand.u32 2147483647, %v2810
        %vm3802 = vcmp.eq.f32.partialorder %v3801, 8.507059e+37
        %v3803 = vand.u32 %v2810, 2147483648
        %v3804 = vor.u32 1.1754944e-38, %v3803
        %v3805 = vsel %vm3802, %v3804, %v3800
        %v3806 = vmul.f32 %v242, %v3805
        %v3807 = vrcp.pop %v2811
        %v3808 = vmul.f32 %v2811, %v3807
        %v3809 = vsub.f32 1.0, %v3808
        %v3810 = vmul.f32 %v3807, %v3809
        %v3811 = vadd.f32 %v3807, %v3810
        %vm3812 = vweird.f32 %v2811
        %vm3813 = vweird.f32 %v3807
        %vm3814 = vmor %vm3812, %vm3813
        %v3815 = vsel %vm3814, %v3807, %v3811
        %v3816 = vand.u32 2147483647, %v2811
        %vm3817 = vcmp.eq.f32.partialorder %v3816, 8.507059e+37
        %v3818 = vand.u32 %v2811, 2147483648
        %v3819 = vor.u32 1.1754944e-38, %v3818
        %v3820 = vsel %vm3817, %v3819, %v3815
        %v3821 = vmul.f32 %v243, %v3820
        %v3822 = vrcp.pop %v2812
        %v3823 = vmul.f32 %v2812, %v3822
        %v3824 = vsub.f32 1.0, %v3823
        %v3825 = vmul.f32 %v3822, %v3824
        %v3826 = vadd.f32 %v3822, %v3825
        %vm3827 = vweird.f32 %v2812
        %vm3828 = vweird.f32 %v3822
        %vm3829 = vmor %vm3827, %vm3828
        %v3830 = vsel %vm3829, %v3822, %v3826
        %v3831 = vand.u32 2147483647, %v2812
        %vm3832 = vcmp.eq.f32.partialorder %v3831, 8.507059e+37
        %v3833 = vand.u32 %v2812, 2147483648
        %v3834 = vor.u32 1.1754944e-38, %v3833
        %v3835 = vsel %vm3832, %v3834, %v3830
        %v3836 = vmul.f32 %v244, %v3835
        %v3837 = vrcp.pop %v2813
        %v3838 = vmul.f32 %v2813, %v3837
        %v3839 = vsub.f32 1.0, %v3838
        %v3840 = vmul.f32 %v3837, %v3839
        %v3841 = vadd.f32 %v3837, %v3840
        %vm3842 = vweird.f32 %v2813
        %vm3843 = vweird.f32 %v3837
        %vm3844 = vmor %vm3842, %vm3843
        %v3845 = vsel %vm3844, %v3837, %v3841
        %v3846 = vand.u32 2147483647, %v2813
        %vm3847 = vcmp.eq.f32.partialorder %v3846, 8.507059e+37
        %v3848 = vand.u32 %v2813, 2147483648
        %v3849 = vor.u32 1.1754944e-38, %v3848
        %v3850 = vsel %vm3847, %v3849, %v3845
        %v3851 = vmul.f32 %v245, %v3850
        %v3852 = vrcp.pop %v2814
        %v3853 = vmul.f32 %v2814, %v3852
        %v3854 = vsub.f32 1.0, %v3853
        %v3855 = vmul.f32 %v3852, %v3854
        %v3856 = vadd.f32 %v3852, %v3855
        %vm3857 = vweird.f32 %v2814
        %vm3858 = vweird.f32 %v3852
        %vm3859 = vmor %vm3857, %vm3858
        %v3860 = vsel %vm3859, %v3852, %v3856
        %v3861 = vand.u32 2147483647, %v2814
        %vm3862 = vcmp.eq.f32.partialorder %v3861, 8.507059e+37
        %v3863 = vand.u32 %v2814, 2147483648
        %v3864 = vor.u32 1.1754944e-38, %v3863
        %v3865 = vsel %vm3862, %v3864, %v3860
        %v3866 = vmul.f32 %v246, %v3865
        %v3867 = vrcp.pop %v2815
        %v3868 = vmul.f32 %v2815, %v3867
        %v3869 = vsub.f32 1.0, %v3868
        %v3870 = vmul.f32 %v3867, %v3869
        %v3871 = vadd.f32 %v3867, %v3870
        %vm3872 = vweird.f32 %v2815
        %vm3873 = vweird.f32 %v3867
        %vm3874 = vmor %vm3872, %vm3873
        %v3875 = vsel %vm3874, %v3867, %v3871
        %v3876 = vand.u32 2147483647, %v2815
        %vm3877 = vcmp.eq.f32.partialorder %v3876, 8.507059e+37
        %v3878 = vand.u32 %v2815, 2147483648
        %v3879 = vor.u32 1.1754944e-38, %v3878
        %v3880 = vsel %vm3877, %v3879, %v3875
        %v3881 = vmul.f32 %v247, %v3880
        %v3882 = vrcp.pop %v2816
        %v3883 = vmul.f32 %v2816, %v3882
        %v3884 = vsub.f32 1.0, %v3883
        %v3885 = vmul.f32 %v3882, %v3884
        %v3886 = vadd.f32 %v3882, %v3885
        %vm3887 = vweird.f32 %v2816
        %vm3888 = vweird.f32 %v3882
        %vm3889 = vmor %vm3887, %vm3888
        %v3890 = vsel %vm3889, %v3882, %v3886
        %v3891 = vand.u32 2147483647, %v2816
        %vm3892 = vcmp.eq.f32.partialorder %v3891, 8.507059e+37
        %v3893 = vand.u32 %v2816, 2147483648
        %v3894 = vor.u32 1.1754944e-38, %v3893
        %v3895 = vsel %vm3892, %v3894, %v3890
        %v3896 = vmul.f32 %v248, %v3895
        %v3897 = vrcp.pop %v2817
        %v3898 = vmul.f32 %v2817, %v3897
        %v3899 = vsub.f32 1.0, %v3898
        %v3900 = vmul.f32 %v3897, %v3899
        %v3901 = vadd.f32 %v3897, %v3900
        %vm3902 = vweird.f32 %v2817
        %vm3903 = vweird.f32 %v3897
        %vm3904 = vmor %vm3902, %vm3903
        %v3905 = vsel %vm3904, %v3897, %v3901
        %v3906 = vand.u32 2147483647, %v2817
        %vm3907 = vcmp.eq.f32.partialorder %v3906, 8.507059e+37
        %v3908 = vand.u32 %v2817, 2147483648
        %v3909 = vor.u32 1.1754944e-38, %v3908
        %v3910 = vsel %vm3907, %v3909, %v3905
        %v3911 = vmul.f32 %v249, %v3910
        %v3912 = vrcp.pop %v2818
        %v3913 = vmul.f32 %v2818, %v3912
        %v3914 = vsub.f32 1.0, %v3913
        %v3915 = vmul.f32 %v3912, %v3914
        %v3916 = vadd.f32 %v3912, %v3915
        %vm3917 = vweird.f32 %v2818
        %vm3918 = vweird.f32 %v3912
        %vm3919 = vmor %vm3917, %vm3918
        %v3920 = vsel %vm3919, %v3912, %v3916
        %v3921 = vand.u32 2147483647, %v2818
        %vm3922 = vcmp.eq.f32.partialorder %v3921, 8.507059e+37
        %v3923 = vand.u32 %v2818, 2147483648
        %v3924 = vor.u32 1.1754944e-38, %v3923
        %v3925 = vsel %vm3922, %v3924, %v3920
        %v3926 = vmul.f32 %v250, %v3925
        %v3927 = vrcp.pop %v2819
        %v3928 = vmul.f32 %v2819, %v3927
        %v3929 = vsub.f32 1.0, %v3928
        %v3930 = vmul.f32 %v3927, %v3929
        %v3931 = vadd.f32 %v3927, %v3930
        %vm3932 = vweird.f32 %v2819
        %vm3933 = vweird.f32 %v3927
        %vm3934 = vmor %vm3932, %vm3933
        %v3935 = vsel %vm3934, %v3927, %v3931
        %v3936 = vand.u32 2147483647, %v2819
        %vm3937 = vcmp.eq.f32.partialorder %v3936, 8.507059e+37
        %v3938 = vand.u32 %v2819, 2147483648
        %v3939 = vor.u32 1.1754944e-38, %v3938
        %v3940 = vsel %vm3937, %v3939, %v3935
        %v3941 = vmul.f32 %v251, %v3940
        %v3942 = vrcp.pop %v2820
        %v3943 = vmul.f32 %v2820, %v3942
        %v3944 = vsub.f32 1.0, %v3943
        %v3945 = vmul.f32 %v3942, %v3944
        %v3946 = vadd.f32 %v3942, %v3945
        %vm3947 = vweird.f32 %v2820
        %vm3948 = vweird.f32 %v3942
        %vm3949 = vmor %vm3947, %vm3948
        %v3950 = vsel %vm3949, %v3942, %v3946
        %v3951 = vand.u32 2147483647, %v2820
        %vm3952 = vcmp.eq.f32.partialorder %v3951, 8.507059e+37
        %v3953 = vand.u32 %v2820, 2147483648
        %v3954 = vor.u32 1.1754944e-38, %v3953
        %v3955 = vsel %vm3952, %v3954, %v3950
        %v3956 = vmul.f32 %v252, %v3955
        %v3957 = vrcp.pop %v2821
        %v3958 = vmul.f32 %v2821, %v3957
        %v3959 = vsub.f32 1.0, %v3958
        %v3960 = vmul.f32 %v3957, %v3959
        %v3961 = vadd.f32 %v3957, %v3960
        %vm3962 = vweird.f32 %v2821
        %vm3963 = vweird.f32 %v3957
        %vm3964 = vmor %vm3962, %vm3963
        %v3965 = vsel %vm3964, %v3957, %v3961
        %v3966 = vand.u32 2147483647, %v2821
        %vm3967 = vcmp.eq.f32.partialorder %v3966, 8.507059e+37
        %v3968 = vand.u32 %v2821, 2147483648
        %v3969 = vor.u32 1.1754944e-38, %v3968
        %v3970 = vsel %vm3967, %v3969, %v3965
        %v3971 = vmul.f32 %v253, %v3970
        %v3972 = vrcp.pop %v2822
        %v3973 = vmul.f32 %v2822, %v3972
        %v3974 = vsub.f32 1.0, %v3973
        %v3975 = vmul.f32 %v3972, %v3974
        %v3976 = vadd.f32 %v3972, %v3975
        %vm3977 = vweird.f32 %v2822
        %vm3978 = vweird.f32 %v3972
        %vm3979 = vmor %vm3977, %vm3978
        %v3980 = vsel %vm3979, %v3972, %v3976
        %v3981 = vand.u32 2147483647, %v2822
        %vm3982 = vcmp.eq.f32.partialorder %v3981, 8.507059e+37
        %v3983 = vand.u32 %v2822, 2147483648
        %v3984 = vor.u32 1.1754944e-38, %v3983
        %v3985 = vsel %vm3982, %v3984, %v3980
        %v3986 = vmul.f32 %v254, %v3985
        %v3987 = vrcp.pop %v2823
        %v3988 = vmul.f32 %v2823, %v3987
        %v3989 = vsub.f32 1.0, %v3988
        %v3990 = vmul.f32 %v3987, %v3989
        %v3991 = vadd.f32 %v3987, %v3990
        %vm3992 = vweird.f32 %v2823
        %vm3993 = vweird.f32 %v3987
        %vm3994 = vmor %vm3992, %vm3993
        %v3995 = vsel %vm3994, %v3987, %v3991
        %v3996 = vand.u32 2147483647, %v2823
        %vm3997 = vcmp.eq.f32.partialorder %v3996, 8.507059e+37
        %v3998 = vand.u32 %v2823, 2147483648
        %v3999 = vor.u32 1.1754944e-38, %v3998
        %v4000 = vsel %vm3997, %v3999, %v3995
        %v4001 = vmul.f32 %v255, %v4000
        %v4002 = vrcp.pop %v2824
        %v4003 = vmul.f32 %v2824, %v4002
        %v4004 = vsub.f32 1.0, %v4003
        %v4005 = vmul.f32 %v4002, %v4004
        %v4006 = vadd.f32 %v4002, %v4005
        %vm4007 = vweird.f32 %v2824
        %vm4008 = vweird.f32 %v4002
        %vm4009 = vmor %vm4007, %vm4008
        %v4010 = vsel %vm4009, %v4002, %v4006
        %v4011 = vand.u32 2147483647, %v2824
        %vm4012 = vcmp.eq.f32.partialorder %v4011, 8.507059e+37
        %v4013 = vand.u32 %v2824, 2147483648
        %v4014 = vor.u32 1.1754944e-38, %v4013
        %v4015 = vsel %vm4012, %v4014, %v4010
        %v4016 = vmul.f32 %v256, %v4015
        %v4017 = vrcp.pop %v2825
        %v4018 = vmul.f32 %v2825, %v4017
        %v4019 = vsub.f32 1.0, %v4018
        %v4020 = vmul.f32 %v4017, %v4019
        %v4021 = vadd.f32 %v4017, %v4020
        %vm4022 = vweird.f32 %v2825
        %vm4023 = vweird.f32 %v4017
        %vm4024 = vmor %vm4022, %vm4023
        %v4025 = vsel %vm4024, %v4017, %v4021
        %v4026 = vand.u32 2147483647, %v2825
        %vm4027 = vcmp.eq.f32.partialorder %v4026, 8.507059e+37
        %v4028 = vand.u32 %v2825, 2147483648
        %v4029 = vor.u32 1.1754944e-38, %v4028
        %v4030 = vsel %vm4027, %v4029, %v4025
        %v4031 = vmul.f32 %v257, %v4030
        %v4032 = vrcp.pop %v2826
        %v4033 = vmul.f32 %v2826, %v4032
        %v4034 = vsub.f32 1.0, %v4033
        %v4035 = vmul.f32 %v4032, %v4034
        %v4036 = vadd.f32 %v4032, %v4035
        %vm4037 = vweird.f32 %v2826
        %vm4038 = vweird.f32 %v4032
        %vm4039 = vmor %vm4037, %vm4038
        %v4040 = vsel %vm4039, %v4032, %v4036
        %v4041 = vand.u32 2147483647, %v2826
        %vm4042 = vcmp.eq.f32.partialorder %v4041, 8.507059e+37
        %v4043 = vand.u32 %v2826, 2147483648
        %v4044 = vor.u32 1.1754944e-38, %v4043
        %v4045 = vsel %vm4042, %v4044, %v4040
        %v4046 = vmul.f32 %v258, %v4045
        %v4047 = vrcp.pop %v2827
        %v4048 = vmul.f32 %v2827, %v4047
        %v4049 = vsub.f32 1.0, %v4048
        %v4050 = vmul.f32 %v4047, %v4049
        %v4051 = vadd.f32 %v4047, %v4050
        %vm4052 = vweird.f32 %v2827
        %vm4053 = vweird.f32 %v4047
        %vm4054 = vmor %vm4052, %vm4053
        %v4055 = vsel %vm4054, %v4047, %v4051
        %v4056 = vand.u32 2147483647, %v2827
        %vm4057 = vcmp.eq.f32.partialorder %v4056, 8.507059e+37
        %v4058 = vand.u32 %v2827, 2147483648
        %v4059 = vor.u32 1.1754944e-38, %v4058
        %v4060 = vsel %vm4057, %v4059, %v4055
        %v4061 = vmul.f32 %v259, %v4060
        %v4062 = vrcp.pop %v2828
        %v4063 = vmul.f32 %v2828, %v4062
        %v4064 = vsub.f32 1.0, %v4063
        %v4065 = vmul.f32 %v4062, %v4064
        %v4066 = vadd.f32 %v4062, %v4065
        %vm4067 = vweird.f32 %v2828
        %vm4068 = vweird.f32 %v4062
        %vm4069 = vmor %vm4067, %vm4068
        %v4070 = vsel %vm4069, %v4062, %v4066
        %v4071 = vand.u32 2147483647, %v2828
        %vm4072 = vcmp.eq.f32.partialorder %v4071, 8.507059e+37
        %v4073 = vand.u32 %v2828, 2147483648
        %v4074 = vor.u32 1.1754944e-38, %v4073
        %v4075 = vsel %vm4072, %v4074, %v4070
        %v4076 = vmul.f32 %v260, %v4075
        %v4077 = vrcp.pop %v2829
        %v4078 = vmul.f32 %v2829, %v4077
        %v4079 = vsub.f32 1.0, %v4078
        %v4080 = vmul.f32 %v4077, %v4079
        %v4081 = vadd.f32 %v4077, %v4080
        %vm4082 = vweird.f32 %v2829
        %vm4083 = vweird.f32 %v4077
        %vm4084 = vmor %vm4082, %vm4083
        %v4085 = vsel %vm4084, %v4077, %v4081
        %v4086 = vand.u32 2147483647, %v2829
        %vm4087 = vcmp.eq.f32.partialorder %v4086, 8.507059e+37
        %v4088 = vand.u32 %v2829, 2147483648
        %v4089 = vor.u32 1.1754944e-38, %v4088
        %v4090 = vsel %vm4087, %v4089, %v4085
        %v4091 = vmul.f32 %v261, %v4090
        %v4092 = vrcp.pop %v2830
        %v4093 = vmul.f32 %v2830, %v4092
        %v4094 = vsub.f32 1.0, %v4093
        %v4095 = vmul.f32 %v4092, %v4094
        %v4096 = vadd.f32 %v4092, %v4095
        %vm4097 = vweird.f32 %v2830
        %vm4098 = vweird.f32 %v4092
        %vm4099 = vmor %vm4097, %vm4098
        %v4100 = vsel %vm4099, %v4092, %v4096
        %v4101 = vand.u32 2147483647, %v2830
        %vm4102 = vcmp.eq.f32.partialorder %v4101, 8.507059e+37
        %v4103 = vand.u32 %v2830, 2147483648
        %v4104 = vor.u32 1.1754944e-38, %v4103
        %v4105 = vsel %vm4102, %v4104, %v4100
        %v4106 = vmul.f32 %v262, %v4105
        %v4107 = vrcp.pop %v2831
        %v4108 = vmul.f32 %v2831, %v4107
        %v4109 = vsub.f32 1.0, %v4108
        %v4110 = vmul.f32 %v4107, %v4109
        %v4111 = vadd.f32 %v4107, %v4110
        %vm4112 = vweird.f32 %v2831
        %vm4113 = vweird.f32 %v4107
        %vm4114 = vmor %vm4112, %vm4113
        %v4115 = vsel %vm4114, %v4107, %v4111
        %v4116 = vand.u32 2147483647, %v2831
        %vm4117 = vcmp.eq.f32.partialorder %v4116, 8.507059e+37
        %v4118 = vand.u32 %v2831, 2147483648
        %v4119 = vor.u32 1.1754944e-38, %v4118
        %v4120 = vsel %vm4117, %v4119, %v4115
        %v4121 = vmul.f32 %v263, %v4120
        %v4122 = vrcp.pop %v2832
        %v4123 = vmul.f32 %v2832, %v4122
        %v4124 = vsub.f32 1.0, %v4123
        %v4125 = vmul.f32 %v4122, %v4124
        %v4126 = vadd.f32 %v4122, %v4125
        %vm4127 = vweird.f32 %v2832
        %vm4128 = vweird.f32 %v4122
        %vm4129 = vmor %vm4127, %vm4128
        %v4130 = vsel %vm4129, %v4122, %v4126
        %v4131 = vand.u32 2147483647, %v2832
        %vm4132 = vcmp.eq.f32.partialorder %v4131, 8.507059e+37
        %v4133 = vand.u32 %v2832, 2147483648
        %v4134 = vor.u32 1.1754944e-38, %v4133
        %v4135 = vsel %vm4132, %v4134, %v4130
        %v4136 = vmul.f32 %v264, %v4135
        %v4137 = vrcp.pop %v2833
        %v4138 = vmul.f32 %v2833, %v4137
        %v4139 = vsub.f32 1.0, %v4138
        %v4140 = vmul.f32 %v4137, %v4139
        %v4141 = vadd.f32 %v4137, %v4140
        %vm4142 = vweird.f32 %v2833
        %vm4143 = vweird.f32 %v4137
        %vm4144 = vmor %vm4142, %vm4143
        %v4145 = vsel %vm4144, %v4137, %v4141
        %v4146 = vand.u32 2147483647, %v2833
        %vm4147 = vcmp.eq.f32.partialorder %v4146, 8.507059e+37
        %v4148 = vand.u32 %v2833, 2147483648
        %v4149 = vor.u32 1.1754944e-38, %v4148
        %v4150 = vsel %vm4147, %v4149, %v4145
        %v4151 = vmul.f32 %v265, %v4150
        %v4152 = vrcp.pop %v2834
        %v4153 = vmul.f32 %v2834, %v4152
        %v4154 = vsub.f32 1.0, %v4153
        %v4155 = vmul.f32 %v4152, %v4154
        %v4156 = vadd.f32 %v4152, %v4155
        %vm4157 = vweird.f32 %v2834
        %vm4158 = vweird.f32 %v4152
        %vm4159 = vmor %vm4157, %vm4158
        %v4160 = vsel %vm4159, %v4152, %v4156
        %v4161 = vand.u32 2147483647, %v2834
        %vm4162 = vcmp.eq.f32.partialorder %v4161, 8.507059e+37
        %v4163 = vand.u32 %v2834, 2147483648
        %v4164 = vor.u32 1.1754944e-38, %v4163
        %v4165 = vsel %vm4162, %v4164, %v4160
        %v4166 = vmul.f32 %v266, %v4165
        %v4167 = vrcp.pop %v2835
        %v4168 = vmul.f32 %v2835, %v4167
        %v4169 = vsub.f32 1.0, %v4168
        %v4170 = vmul.f32 %v4167, %v4169
        %v4171 = vadd.f32 %v4167, %v4170
        %vm4172 = vweird.f32 %v2835
        %vm4173 = vweird.f32 %v4167
        %vm4174 = vmor %vm4172, %vm4173
        %v4175 = vsel %vm4174, %v4167, %v4171
        %v4176 = vand.u32 2147483647, %v2835
        %vm4177 = vcmp.eq.f32.partialorder %v4176, 8.507059e+37
        %v4178 = vand.u32 %v2835, 2147483648
        %v4179 = vor.u32 1.1754944e-38, %v4178
        %v4180 = vsel %vm4177, %v4179, %v4175
        %v4181 = vmul.f32 %v267, %v4180
        %v4182 = vrcp.pop %v2836
        %v4183 = vmul.f32 %v2836, %v4182
        %v4184 = vsub.f32 1.0, %v4183
        %v4185 = vmul.f32 %v4182, %v4184
        %v4186 = vadd.f32 %v4182, %v4185
        %vm4187 = vweird.f32 %v2836
        %vm4188 = vweird.f32 %v4182
        %vm4189 = vmor %vm4187, %vm4188
        %v4190 = vsel %vm4189, %v4182, %v4186
        %v4191 = vand.u32 2147483647, %v2836
        %vm4192 = vcmp.eq.f32.partialorder %v4191, 8.507059e+37
        %v4193 = vand.u32 %v2836, 2147483648
        %v4194 = vor.u32 1.1754944e-38, %v4193
        %v4195 = vsel %vm4192, %v4194, %v4190
        %v4196 = vmul.f32 %v268, %v4195
        %v4197 = vrcp.pop %v2837
        %v4198 = vmul.f32 %v2837, %v4197
        %v4199 = vsub.f32 1.0, %v4198
        %v4200 = vmul.f32 %v4197, %v4199
        %v4201 = vadd.f32 %v4197, %v4200
        %vm4202 = vweird.f32 %v2837
        %vm4203 = vweird.f32 %v4197
        %vm4204 = vmor %vm4202, %vm4203
        %v4205 = vsel %vm4204, %v4197, %v4201
        %v4206 = vand.u32 2147483647, %v2837
        %vm4207 = vcmp.eq.f32.partialorder %v4206, 8.507059e+37
        %v4208 = vand.u32 %v2837, 2147483648
        %v4209 = vor.u32 1.1754944e-38, %v4208
        %v4210 = vsel %vm4207, %v4209, %v4205
        %v4211 = vmul.f32 %v269, %v4210
        %v4212 = vrcp.pop %v2838
        %v4213 = vmul.f32 %v2838, %v4212
        %v4214 = vsub.f32 1.0, %v4213
        %v4215 = vmul.f32 %v4212, %v4214
        %v4216 = vadd.f32 %v4212, %v4215
        %vm4217 = vweird.f32 %v2838
        %vm4218 = vweird.f32 %v4212
        %vm4219 = vmor %vm4217, %vm4218
        %v4220 = vsel %vm4219, %v4212, %v4216
        %v4221 = vand.u32 2147483647, %v2838
        %vm4222 = vcmp.eq.f32.partialorder %v4221, 8.507059e+37
        %v4223 = vand.u32 %v2838, 2147483648
        %v4224 = vor.u32 1.1754944e-38, %v4223
        %v4225 = vsel %vm4222, %v4224, %v4220
        %v4226 = vmul.f32 %v270, %v4225
        %v4227 = vrcp.pop %v2839
        %v4228 = vmul.f32 %v2839, %v4227
        %v4229 = vsub.f32 1.0, %v4228
        %v4230 = vmul.f32 %v4227, %v4229
        %v4231 = vadd.f32 %v4227, %v4230
        %vm4232 = vweird.f32 %v2839
        %vm4233 = vweird.f32 %v4227
        %vm4234 = vmor %vm4232, %vm4233
        %v4235 = vsel %vm4234, %v4227, %v4231
        %v4236 = vand.u32 2147483647, %v2839
        %vm4237 = vcmp.eq.f32.partialorder %v4236, 8.507059e+37
        %v4238 = vand.u32 %v2839, 2147483648
        %v4239 = vor.u32 1.1754944e-38, %v4238
        %v4240 = vsel %vm4237, %v4239, %v4235
        %v4241 = vmul.f32 %v271, %v4240
        %v4242 = vrcp.pop %v2840
        %v4243 = vmul.f32 %v2840, %v4242
        %v4244 = vsub.f32 1.0, %v4243
        %v4245 = vmul.f32 %v4242, %v4244
        %v4246 = vadd.f32 %v4242, %v4245
        %vm4247 = vweird.f32 %v2840
        %vm4248 = vweird.f32 %v4242
        %vm4249 = vmor %vm4247, %vm4248
        %v4250 = vsel %vm4249, %v4242, %v4246
        %v4251 = vand.u32 2147483647, %v2840
        %vm4252 = vcmp.eq.f32.partialorder %v4251, 8.507059e+37
        %v4253 = vand.u32 %v2840, 2147483648
        %v4254 = vor.u32 1.1754944e-38, %v4253
        %v4255 = vsel %vm4252, %v4254, %v4250
        %v4256 = vmul.f32 %v272, %v4255
        %v4257 = vrcp.pop %v2841
        %v4258 = vmul.f32 %v2841, %v4257
        %v4259 = vsub.f32 1.0, %v4258
        %v4260 = vmul.f32 %v4257, %v4259
        %v4261 = vadd.f32 %v4257, %v4260
        %vm4262 = vweird.f32 %v2841
        %vm4263 = vweird.f32 %v4257
        %vm4264 = vmor %vm4262, %vm4263
        %v4265 = vsel %vm4264, %v4257, %v4261
        %v4266 = vand.u32 2147483647, %v2841
        %vm4267 = vcmp.eq.f32.partialorder %v4266, 8.507059e+37
        %v4268 = vand.u32 %v2841, 2147483648
        %v4269 = vor.u32 1.1754944e-38, %v4268
        %v4270 = vsel %vm4267, %v4269, %v4265
        %v4271 = vmul.f32 %v273, %v4270
        %v4272 = vrcp.pop %v2842
        %v4273 = vmul.f32 %v2842, %v4272
        %v4274 = vsub.f32 1.0, %v4273
        %v4275 = vmul.f32 %v4272, %v4274
        %v4276 = vadd.f32 %v4272, %v4275
        %vm4277 = vweird.f32 %v2842
        %vm4278 = vweird.f32 %v4272
        %vm4279 = vmor %vm4277, %vm4278
        %v4280 = vsel %vm4279, %v4272, %v4276
        %v4281 = vand.u32 2147483647, %v2842
        %vm4282 = vcmp.eq.f32.partialorder %v4281, 8.507059e+37
        %v4283 = vand.u32 %v2842, 2147483648
        %v4284 = vor.u32 1.1754944e-38, %v4283
        %v4285 = vsel %vm4282, %v4284, %v4280
        %v4286 = vmul.f32 %v274, %v4285
        %v4287 = vrcp.pop %v2843
        %v4288 = vmul.f32 %v2843, %v4287
        %v4289 = vsub.f32 1.0, %v4288
        %v4290 = vmul.f32 %v4287, %v4289
        %v4291 = vadd.f32 %v4287, %v4290
        %vm4292 = vweird.f32 %v2843
        %vm4293 = vweird.f32 %v4287
        %vm4294 = vmor %vm4292, %vm4293
        %v4295 = vsel %vm4294, %v4287, %v4291
        %v4296 = vand.u32 2147483647, %v2843
        %vm4297 = vcmp.eq.f32.partialorder %v4296, 8.507059e+37
        %v4298 = vand.u32 %v2843, 2147483648
        %v4299 = vor.u32 1.1754944e-38, %v4298
        %v4300 = vsel %vm4297, %v4299, %v4295
        %v4301 = vmul.f32 %v275, %v4300
        %v4302 = vrcp.pop %v2844
        %v4303 = vmul.f32 %v2844, %v4302
        %v4304 = vsub.f32 1.0, %v4303
        %v4305 = vmul.f32 %v4302, %v4304
        %v4306 = vadd.f32 %v4302, %v4305
        %vm4307 = vweird.f32 %v2844
        %vm4308 = vweird.f32 %v4302
        %vm4309 = vmor %vm4307, %vm4308
        %v4310 = vsel %vm4309, %v4302, %v4306
        %v4311 = vand.u32 2147483647, %v2844
        %vm4312 = vcmp.eq.f32.partialorder %v4311, 8.507059e+37
        %v4313 = vand.u32 %v2844, 2147483648
        %v4314 = vor.u32 1.1754944e-38, %v4313
        %v4315 = vsel %vm4312, %v4314, %v4310
        %v4316 = vmul.f32 %v276, %v4315
        %v4317 = vrcp.pop %v2845
        %v4318 = vmul.f32 %v2845, %v4317
        %v4319 = vsub.f32 1.0, %v4318
        %v4320 = vmul.f32 %v4317, %v4319
        %v4321 = vadd.f32 %v4317, %v4320
        %vm4322 = vweird.f32 %v2845
        %vm4323 = vweird.f32 %v4317
        %vm4324 = vmor %vm4322, %vm4323
        %v4325 = vsel %vm4324, %v4317, %v4321
        %v4326 = vand.u32 2147483647, %v2845
        %vm4327 = vcmp.eq.f32.partialorder %v4326, 8.507059e+37
        %v4328 = vand.u32 %v2845, 2147483648
        %v4329 = vor.u32 1.1754944e-38, %v4328
        %v4330 = vsel %vm4327, %v4329, %v4325
        %v4331 = vmul.f32 %v277, %v4330
        %v4332 = vrcp.pop %v2846
        %v4333 = vmul.f32 %v2846, %v4332
        %v4334 = vsub.f32 1.0, %v4333
        %v4335 = vmul.f32 %v4332, %v4334
        %v4336 = vadd.f32 %v4332, %v4335
        %vm4337 = vweird.f32 %v2846
        %vm4338 = vweird.f32 %v4332
        %vm4339 = vmor %vm4337, %vm4338
        %v4340 = vsel %vm4339, %v4332, %v4336
        %v4341 = vand.u32 2147483647, %v2846
        %vm4342 = vcmp.eq.f32.partialorder %v4341, 8.507059e+37
        %v4343 = vand.u32 %v2846, 2147483648
        %v4344 = vor.u32 1.1754944e-38, %v4343
        %v4345 = vsel %vm4342, %v4344, %v4340
        %v4346 = vmul.f32 %v278, %v4345
        %v4347 = vrcp.pop %v2847
        %v4348 = vmul.f32 %v2847, %v4347
        %v4349 = vsub.f32 1.0, %v4348
        %v4350 = vmul.f32 %v4347, %v4349
        %v4351 = vadd.f32 %v4347, %v4350
        %vm4352 = vweird.f32 %v2847
        %vm4353 = vweird.f32 %v4347
        %vm4354 = vmor %vm4352, %vm4353
        %v4355 = vsel %vm4354, %v4347, %v4351
        %v4356 = vand.u32 2147483647, %v2847
        %vm4357 = vcmp.eq.f32.partialorder %v4356, 8.507059e+37
        %v4358 = vand.u32 %v2847, 2147483648
        %v4359 = vor.u32 1.1754944e-38, %v4358
        %v4360 = vsel %vm4357, %v4359, %v4355
        %v4361 = vmul.f32 %v279, %v4360
        %v4362 = vrcp.pop %v2848
        %v4363 = vmul.f32 %v2848, %v4362
        %v4364 = vsub.f32 1.0, %v4363
        %v4365 = vmul.f32 %v4362, %v4364
        %v4366 = vadd.f32 %v4362, %v4365
        %vm4367 = vweird.f32 %v2848
        %vm4368 = vweird.f32 %v4362
        %vm4369 = vmor %vm4367, %vm4368
        %v4370 = vsel %vm4369, %v4362, %v4366
        %v4371 = vand.u32 2147483647, %v2848
        %vm4372 = vcmp.eq.f32.partialorder %v4371, 8.507059e+37
        %v4373 = vand.u32 %v2848, 2147483648
        %v4374 = vor.u32 1.1754944e-38, %v4373
        %v4375 = vsel %vm4372, %v4374, %v4370
        %v4376 = vmul.f32 %v280, %v4375
        %v4377 = vrcp.pop %v2849
        %v4378 = vmul.f32 %v2849, %v4377
        %v4379 = vsub.f32 1.0, %v4378
        %v4380 = vmul.f32 %v4377, %v4379
        %v4381 = vadd.f32 %v4377, %v4380
        %vm4382 = vweird.f32 %v2849
        %vm4383 = vweird.f32 %v4377
        %vm4384 = vmor %vm4382, %vm4383
        %v4385 = vsel %vm4384, %v4377, %v4381
        %v4386 = vand.u32 2147483647, %v2849
        %vm4387 = vcmp.eq.f32.partialorder %v4386, 8.507059e+37
        %v4388 = vand.u32 %v2849, 2147483648
        %v4389 = vor.u32 1.1754944e-38, %v4388
        %v4390 = vsel %vm4387, %v4389, %v4385
        %v4391 = vmul.f32 %v281, %v4390
        %v4392 = vrcp.pop %v2850
        %v4393 = vmul.f32 %v2850, %v4392
        %v4394 = vsub.f32 1.0, %v4393
        %v4395 = vmul.f32 %v4392, %v4394
        %v4396 = vadd.f32 %v4392, %v4395
        %vm4397 = vweird.f32 %v2850
        %vm4398 = vweird.f32 %v4392
        %vm4399 = vmor %vm4397, %vm4398
        %v4400 = vsel %vm4399, %v4392, %v4396
        %v4401 = vand.u32 2147483647, %v2850
        %vm4402 = vcmp.eq.f32.partialorder %v4401, 8.507059e+37
        %v4403 = vand.u32 %v2850, 2147483648
        %v4404 = vor.u32 1.1754944e-38, %v4403
        %v4405 = vsel %vm4402, %v4404, %v4400
        %v4406 = vmul.f32 %v282, %v4405
        %v4407 = vrcp.pop %v2851
        %v4408 = vmul.f32 %v2851, %v4407
        %v4409 = vsub.f32 1.0, %v4408
        %v4410 = vmul.f32 %v4407, %v4409
        %v4411 = vadd.f32 %v4407, %v4410
        %vm4412 = vweird.f32 %v2851
        %vm4413 = vweird.f32 %v4407
        %vm4414 = vmor %vm4412, %vm4413
        %v4415 = vsel %vm4414, %v4407, %v4411
        %v4416 = vand.u32 2147483647, %v2851
        %vm4417 = vcmp.eq.f32.partialorder %v4416, 8.507059e+37
        %v4418 = vand.u32 %v2851, 2147483648
        %v4419 = vor.u32 1.1754944e-38, %v4418
        %v4420 = vsel %vm4417, %v4419, %v4415
        %v4421 = vmul.f32 %v283, %v4420
        %v4422 = vrcp.pop %v2852
        %v4423 = vmul.f32 %v2852, %v4422
        %v4424 = vsub.f32 1.0, %v4423
        %v4425 = vmul.f32 %v4422, %v4424
        %v4426 = vadd.f32 %v4422, %v4425
        %vm4427 = vweird.f32 %v2852
        %vm4428 = vweird.f32 %v4422
        %vm4429 = vmor %vm4427, %vm4428
        %v4430 = vsel %vm4429, %v4422, %v4426
        %v4431 = vand.u32 2147483647, %v2852
        %vm4432 = vcmp.eq.f32.partialorder %v4431, 8.507059e+37
        %v4433 = vand.u32 %v2852, 2147483648
        %v4434 = vor.u32 1.1754944e-38, %v4433
        %v4435 = vsel %vm4432, %v4434, %v4430
        %v4436 = vmul.f32 %v284, %v4435
        %v4437 = vrcp.pop %v2853
        %v4438 = vmul.f32 %v2853, %v4437
        %v4439 = vsub.f32 1.0, %v4438
        %v4440 = vmul.f32 %v4437, %v4439
        %v4441 = vadd.f32 %v4437, %v4440
        %vm4442 = vweird.f32 %v2853
        %vm4443 = vweird.f32 %v4437
        %vm4444 = vmor %vm4442, %vm4443
        %v4445 = vsel %vm4444, %v4437, %v4441
        %v4446 = vand.u32 2147483647, %v2853
        %vm4447 = vcmp.eq.f32.partialorder %v4446, 8.507059e+37
        %v4448 = vand.u32 %v2853, 2147483648
        %v4449 = vor.u32 1.1754944e-38, %v4448
        %v4450 = vsel %vm4447, %v4449, %v4445
        %v4451 = vmul.f32 %v285, %v4450
        %v4452 = vrcp.pop %v2854
        %v4453 = vmul.f32 %v2854, %v4452
        %v4454 = vsub.f32 1.0, %v4453
        %v4455 = vmul.f32 %v4452, %v4454
        %v4456 = vadd.f32 %v4452, %v4455
        %vm4457 = vweird.f32 %v2854
        %vm4458 = vweird.f32 %v4452
        %vm4459 = vmor %vm4457, %vm4458
        %v4460 = vsel %vm4459, %v4452, %v4456
        %v4461 = vand.u32 2147483647, %v2854
        %vm4462 = vcmp.eq.f32.partialorder %v4461, 8.507059e+37
        %v4463 = vand.u32 %v2854, 2147483648
        %v4464 = vor.u32 1.1754944e-38, %v4463
        %v4465 = vsel %vm4462, %v4464, %v4460
        %v4466 = vmul.f32 %v286, %v4465
        %v4467 = vrcp.pop %v2855
        %v4468 = vmul.f32 %v2855, %v4467
        %v4469 = vsub.f32 1.0, %v4468
        %v4470 = vmul.f32 %v4467, %v4469
        %v4471 = vadd.f32 %v4467, %v4470
        %vm4472 = vweird.f32 %v2855
        %vm4473 = vweird.f32 %v4467
        %vm4474 = vmor %vm4472, %vm4473
        %v4475 = vsel %vm4474, %v4467, %v4471
        %v4476 = vand.u32 2147483647, %v2855
        %vm4477 = vcmp.eq.f32.partialorder %v4476, 8.507059e+37
        %v4478 = vand.u32 %v2855, 2147483648
        %v4479 = vor.u32 1.1754944e-38, %v4478
        %v4480 = vsel %vm4477, %v4479, %v4475
        %v4481 = vmul.f32 %v287, %v4480
        %v4482 = vrcp.pop %v2856
        %v4483 = vmul.f32 %v2856, %v4482
        %v4484 = vsub.f32 1.0, %v4483
        %v4485 = vmul.f32 %v4482, %v4484
        %v4486 = vadd.f32 %v4482, %v4485
        %vm4487 = vweird.f32 %v2856
        %vm4488 = vweird.f32 %v4482
        %vm4489 = vmor %vm4487, %vm4488
        %v4490 = vsel %vm4489, %v4482, %v4486
        %v4491 = vand.u32 2147483647, %v2856
        %vm4492 = vcmp.eq.f32.partialorder %v4491, 8.507059e+37
        %v4493 = vand.u32 %v2856, 2147483648
        %v4494 = vor.u32 1.1754944e-38, %v4493
        %v4495 = vsel %vm4492, %v4494, %v4490
        %v4496 = vmul.f32 %v288, %v4495
        %v4497 = vrcp.pop %v2857
        %v4498 = vmul.f32 %v2857, %v4497
        %v4499 = vsub.f32 1.0, %v4498
        %v4500 = vmul.f32 %v4497, %v4499
        %v4501 = vadd.f32 %v4497, %v4500
        %vm4502 = vweird.f32 %v2857
        %vm4503 = vweird.f32 %v4497
        %vm4504 = vmor %vm4502, %vm4503
        %v4505 = vsel %vm4504, %v4497, %v4501
        %v4506 = vand.u32 2147483647, %v2857
        %vm4507 = vcmp.eq.f32.partialorder %v4506, 8.507059e+37
        %v4508 = vand.u32 %v2857, 2147483648
        %v4509 = vor.u32 1.1754944e-38, %v4508
        %v4510 = vsel %vm4507, %v4509, %v4505
        %v4511 = vmul.f32 %v289, %v4510
        %v4512 = vrcp.pop %v2858
        %v4513 = vmul.f32 %v2858, %v4512
        %v4514 = vsub.f32 1.0, %v4513
        %v4515 = vmul.f32 %v4512, %v4514
        %v4516 = vadd.f32 %v4512, %v4515
        %vm4517 = vweird.f32 %v2858
        %vm4518 = vweird.f32 %v4512
        %vm4519 = vmor %vm4517, %vm4518
        %v4520 = vsel %vm4519, %v4512, %v4516
        %v4521 = vand.u32 2147483647, %v2858
        %vm4522 = vcmp.eq.f32.partialorder %v4521, 8.507059e+37
        %v4523 = vand.u32 %v2858, 2147483648
        %v4524 = vor.u32 1.1754944e-38, %v4523
        %v4525 = vsel %vm4522, %v4524, %v4520
        %v4526 = vmul.f32 %v290, %v4525
        %v4527 = vrcp.pop %v2859
        %v4528 = vmul.f32 %v2859, %v4527
        %v4529 = vsub.f32 1.0, %v4528
        %v4530 = vmul.f32 %v4527, %v4529
        %v4531 = vadd.f32 %v4527, %v4530
        %vm4532 = vweird.f32 %v2859
        %vm4533 = vweird.f32 %v4527
        %vm4534 = vmor %vm4532, %vm4533
        %v4535 = vsel %vm4534, %v4527, %v4531
        %v4536 = vand.u32 2147483647, %v2859
        %vm4537 = vcmp.eq.f32.partialorder %v4536, 8.507059e+37
        %v4538 = vand.u32 %v2859, 2147483648
        %v4539 = vor.u32 1.1754944e-38, %v4538
        %v4540 = vsel %vm4537, %v4539, %v4535
        %v4541 = vmul.f32 %v291, %v4540
        %v4542 = vrcp.pop %v2860
        %v4543 = vmul.f32 %v2860, %v4542
        %v4544 = vsub.f32 1.0, %v4543
        %v4545 = vmul.f32 %v4542, %v4544
        %v4546 = vadd.f32 %v4542, %v4545
        %vm4547 = vweird.f32 %v2860
        %vm4548 = vweird.f32 %v4542
        %vm4549 = vmor %vm4547, %vm4548
        %v4550 = vsel %vm4549, %v4542, %v4546
        %v4551 = vand.u32 2147483647, %v2860
        %vm4552 = vcmp.eq.f32.partialorder %v4551, 8.507059e+37
        %v4553 = vand.u32 %v2860, 2147483648
        %v4554 = vor.u32 1.1754944e-38, %v4553
        %v4555 = vsel %vm4552, %v4554, %v4550
        %v4556 = vmul.f32 %v292, %v4555
        %v4557 = vrcp.pop %v2861
        %v4558 = vmul.f32 %v2861, %v4557
        %v4559 = vsub.f32 1.0, %v4558
        %v4560 = vmul.f32 %v4557, %v4559
        %v4561 = vadd.f32 %v4557, %v4560
        %vm4562 = vweird.f32 %v2861
        %vm4563 = vweird.f32 %v4557
        %vm4564 = vmor %vm4562, %vm4563
        %v4565 = vsel %vm4564, %v4557, %v4561
        %v4566 = vand.u32 2147483647, %v2861
        %vm4567 = vcmp.eq.f32.partialorder %v4566, 8.507059e+37
        %v4568 = vand.u32 %v2861, 2147483648
        %v4569 = vor.u32 1.1754944e-38, %v4568
        %v4570 = vsel %vm4567, %v4569, %v4565
        %v4571 = vmul.f32 %v293, %v4570
        %v4572 = vrcp.pop %v2862
        %v4573 = vmul.f32 %v2862, %v4572
        %v4574 = vsub.f32 1.0, %v4573
        %v4575 = vmul.f32 %v4572, %v4574
        %v4576 = vadd.f32 %v4572, %v4575
        %vm4577 = vweird.f32 %v2862
        %vm4578 = vweird.f32 %v4572
        %vm4579 = vmor %vm4577, %vm4578
        %v4580 = vsel %vm4579, %v4572, %v4576
        %v4581 = vand.u32 2147483647, %v2862
        %vm4582 = vcmp.eq.f32.partialorder %v4581, 8.507059e+37
        %v4583 = vand.u32 %v2862, 2147483648
        %v4584 = vor.u32 1.1754944e-38, %v4583
        %v4585 = vsel %vm4582, %v4584, %v4580
        %v4586 = vmul.f32 %v294, %v4585
        %v4587 = vrcp.pop %v2863
        %v4588 = vmul.f32 %v2863, %v4587
        %v4589 = vsub.f32 1.0, %v4588
        %v4590 = vmul.f32 %v4587, %v4589
        %v4591 = vadd.f32 %v4587, %v4590
        %vm4592 = vweird.f32 %v2863
        %vm4593 = vweird.f32 %v4587
        %vm4594 = vmor %vm4592, %vm4593
        %v4595 = vsel %vm4594, %v4587, %v4591
        %v4596 = vand.u32 2147483647, %v2863
        %vm4597 = vcmp.eq.f32.partialorder %v4596, 8.507059e+37
        %v4598 = vand.u32 %v2863, 2147483648
        %v4599 = vor.u32 1.1754944e-38, %v4598
        %v4600 = vsel %vm4597, %v4599, %v4595
        %v4601 = vmul.f32 %v295, %v4600
        %v4602 = vrcp.pop %v2864
        %v4603 = vmul.f32 %v2864, %v4602
        %v4604 = vsub.f32 1.0, %v4603
        %v4605 = vmul.f32 %v4602, %v4604
        %v4606 = vadd.f32 %v4602, %v4605
        %vm4607 = vweird.f32 %v2864
        %vm4608 = vweird.f32 %v4602
        %vm4609 = vmor %vm4607, %vm4608
        %v4610 = vsel %vm4609, %v4602, %v4606
        %v4611 = vand.u32 2147483647, %v2864
        %vm4612 = vcmp.eq.f32.partialorder %v4611, 8.507059e+37
        %v4613 = vand.u32 %v2864, 2147483648
        %v4614 = vor.u32 1.1754944e-38, %v4613
        %v4615 = vsel %vm4612, %v4614, %v4610
        %v4616 = vmul.f32 %v296, %v4615
        %v4617 = vrcp.pop %v2865
        %v4618 = vmul.f32 %v2865, %v4617
        %v4619 = vsub.f32 1.0, %v4618
        %v4620 = vmul.f32 %v4617, %v4619
        %v4621 = vadd.f32 %v4617, %v4620
        %vm4622 = vweird.f32 %v2865
        %vm4623 = vweird.f32 %v4617
        %vm4624 = vmor %vm4622, %vm4623
        %v4625 = vsel %vm4624, %v4617, %v4621
        %v4626 = vand.u32 2147483647, %v2865
        %vm4627 = vcmp.eq.f32.partialorder %v4626, 8.507059e+37
        %v4628 = vand.u32 %v2865, 2147483648
        %v4629 = vor.u32 1.1754944e-38, %v4628
        %v4630 = vsel %vm4627, %v4629, %v4625
        %v4631 = vmul.f32 %v297, %v4630
        %v4632 = vrcp.pop %v2866
        %v4633 = vmul.f32 %v2866, %v4632
        %v4634 = vsub.f32 1.0, %v4633
        %v4635 = vmul.f32 %v4632, %v4634
        %v4636 = vadd.f32 %v4632, %v4635
        %vm4637 = vweird.f32 %v2866
        %vm4638 = vweird.f32 %v4632
        %vm4639 = vmor %vm4637, %vm4638
        %v4640 = vsel %vm4639, %v4632, %v4636
        %v4641 = vand.u32 2147483647, %v2866
        %vm4642 = vcmp.eq.f32.partialorder %v4641, 8.507059e+37
        %v4643 = vand.u32 %v2866, 2147483648
        %v4644 = vor.u32 1.1754944e-38, %v4643
        %v4645 = vsel %vm4642, %v4644, %v4640
        %v4646 = vmul.f32 %v298, %v4645
        %v4647 = vrcp.pop %v2867
        %v4648 = vmul.f32 %v2867, %v4647
        %v4649 = vsub.f32 1.0, %v4648
        %v4650 = vmul.f32 %v4647, %v4649
        %v4651 = vadd.f32 %v4647, %v4650
        %vm4652 = vweird.f32 %v2867
        %vm4653 = vweird.f32 %v4647
        %vm4654 = vmor %vm4652, %vm4653
        %v4655 = vsel %vm4654, %v4647, %v4651
        %v4656 = vand.u32 2147483647, %v2867
        %vm4657 = vcmp.eq.f32.partialorder %v4656, 8.507059e+37
        %v4658 = vand.u32 %v2867, 2147483648
        %v4659 = vor.u32 1.1754944e-38, %v4658
        %v4660 = vsel %vm4657, %v4659, %v4655
        %v4661 = vmul.f32 %v299, %v4660
        %v4662 = vrcp.pop %v2868
        %v4663 = vmul.f32 %v2868, %v4662
        %v4664 = vsub.f32 1.0, %v4663
        %v4665 = vmul.f32 %v4662, %v4664
        %v4666 = vadd.f32 %v4662, %v4665
        %vm4667 = vweird.f32 %v2868
        %vm4668 = vweird.f32 %v4662
        %vm4669 = vmor %vm4667, %vm4668
        %v4670 = vsel %vm4669, %v4662, %v4666
        %v4671 = vand.u32 2147483647, %v2868
        %vm4672 = vcmp.eq.f32.partialorder %v4671, 8.507059e+37
        %v4673 = vand.u32 %v2868, 2147483648
        %v4674 = vor.u32 1.1754944e-38, %v4673
        %v4675 = vsel %vm4672, %v4674, %v4670
        %v4676 = vmul.f32 %v300, %v4675
        %v4677 = vrcp.pop %v2869
        %v4678 = vmul.f32 %v2869, %v4677
        %v4679 = vsub.f32 1.0, %v4678
        %v4680 = vmul.f32 %v4677, %v4679
        %v4681 = vadd.f32 %v4677, %v4680
        %vm4682 = vweird.f32 %v2869
        %vm4683 = vweird.f32 %v4677
        %vm4684 = vmor %vm4682, %vm4683
        %v4685 = vsel %vm4684, %v4677, %v4681
        %v4686 = vand.u32 2147483647, %v2869
        %vm4687 = vcmp.eq.f32.partialorder %v4686, 8.507059e+37
        %v4688 = vand.u32 %v2869, 2147483648
        %v4689 = vor.u32 1.1754944e-38, %v4688
        %v4690 = vsel %vm4687, %v4689, %v4685
        %v4691 = vmul.f32 %v301, %v4690
        %v4692 = vrcp.pop %v2870
        %v4693 = vmul.f32 %v2870, %v4692
        %v4694 = vsub.f32 1.0, %v4693
        %v4695 = vmul.f32 %v4692, %v4694
        %v4696 = vadd.f32 %v4692, %v4695
        %vm4697 = vweird.f32 %v2870
        %vm4698 = vweird.f32 %v4692
        %vm4699 = vmor %vm4697, %vm4698
        %v4700 = vsel %vm4699, %v4692, %v4696
        %v4701 = vand.u32 2147483647, %v2870
        %vm4702 = vcmp.eq.f32.partialorder %v4701, 8.507059e+37
        %v4703 = vand.u32 %v2870, 2147483648
        %v4704 = vor.u32 1.1754944e-38, %v4703
        %v4705 = vsel %vm4702, %v4704, %v4700
        %v4706 = vmul.f32 %v302, %v4705
        %v4707 = vrcp.pop %v2871
        %v4708 = vmul.f32 %v2871, %v4707
        %v4709 = vsub.f32 1.0, %v4708
        %v4710 = vmul.f32 %v4707, %v4709
        %v4711 = vadd.f32 %v4707, %v4710
        %vm4712 = vweird.f32 %v2871
        %vm4713 = vweird.f32 %v4707
        %vm4714 = vmor %vm4712, %vm4713
        %v4715 = vsel %vm4714, %v4707, %v4711
        %v4716 = vand.u32 2147483647, %v2871
        %vm4717 = vcmp.eq.f32.partialorder %v4716, 8.507059e+37
        %v4718 = vand.u32 %v2871, 2147483648
        %v4719 = vor.u32 1.1754944e-38, %v4718
        %v4720 = vsel %vm4717, %v4719, %v4715
        %v4721 = vmul.f32 %v303, %v4720
        %v4722 = vrcp.pop %v2872
        %v4723 = vmul.f32 %v2872, %v4722
        %v4724 = vsub.f32 1.0, %v4723
        %v4725 = vmul.f32 %v4722, %v4724
        %v4726 = vadd.f32 %v4722, %v4725
        %vm4727 = vweird.f32 %v2872
        %vm4728 = vweird.f32 %v4722
        %vm4729 = vmor %vm4727, %vm4728
        %v4730 = vsel %vm4729, %v4722, %v4726
        %v4731 = vand.u32 2147483647, %v2872
        %vm4732 = vcmp.eq.f32.partialorder %v4731, 8.507059e+37
        %v4733 = vand.u32 %v2872, 2147483648
        %v4734 = vor.u32 1.1754944e-38, %v4733
        %v4735 = vsel %vm4732, %v4734, %v4730
        %v4736 = vmul.f32 %v304, %v4735
        %v4737 = vrcp.pop %v2873
        %v4738 = vmul.f32 %v2873, %v4737
        %v4739 = vsub.f32 1.0, %v4738
        %v4740 = vmul.f32 %v4737, %v4739
        %v4741 = vadd.f32 %v4737, %v4740
        %vm4742 = vweird.f32 %v2873
        %vm4743 = vweird.f32 %v4737
        %vm4744 = vmor %vm4742, %vm4743
        %v4745 = vsel %vm4744, %v4737, %v4741
        %v4746 = vand.u32 2147483647, %v2873
        %vm4747 = vcmp.eq.f32.partialorder %v4746, 8.507059e+37
        %v4748 = vand.u32 %v2873, 2147483648
        %v4749 = vor.u32 1.1754944e-38, %v4748
        %v4750 = vsel %vm4747, %v4749, %v4745
        %v4751 = vmul.f32 %v305, %v4750
        %v4752 = vrcp.pop %v2874
        %v4753 = vmul.f32 %v2874, %v4752
        %v4754 = vsub.f32 1.0, %v4753
        %v4755 = vmul.f32 %v4752, %v4754
        %v4756 = vadd.f32 %v4752, %v4755
        %vm4757 = vweird.f32 %v2874
        %vm4758 = vweird.f32 %v4752
        %vm4759 = vmor %vm4757, %vm4758
        %v4760 = vsel %vm4759, %v4752, %v4756
        %v4761 = vand.u32 2147483647, %v2874
        %vm4762 = vcmp.eq.f32.partialorder %v4761, 8.507059e+37
        %v4763 = vand.u32 %v2874, 2147483648
        %v4764 = vor.u32 1.1754944e-38, %v4763
        %v4765 = vsel %vm4762, %v4764, %v4760
        %v4766 = vmul.f32 %v306, %v4765
        %v4767 = vrcp.pop %v2875
        %v4768 = vmul.f32 %v2875, %v4767
        %v4769 = vsub.f32 1.0, %v4768
        %v4770 = vmul.f32 %v4767, %v4769
        %v4771 = vadd.f32 %v4767, %v4770
        %vm4772 = vweird.f32 %v2875
        %vm4773 = vweird.f32 %v4767
        %vm4774 = vmor %vm4772, %vm4773
        %v4775 = vsel %vm4774, %v4767, %v4771
        %v4776 = vand.u32 2147483647, %v2875
        %vm4777 = vcmp.eq.f32.partialorder %v4776, 8.507059e+37
        %v4778 = vand.u32 %v2875, 2147483648
        %v4779 = vor.u32 1.1754944e-38, %v4778
        %v4780 = vsel %vm4777, %v4779, %v4775
        %v4781 = vmul.f32 %v307, %v4780
        %v4782 = vrcp.pop %v2876
        %v4783 = vmul.f32 %v2876, %v4782
        %v4784 = vsub.f32 1.0, %v4783
        %v4785 = vmul.f32 %v4782, %v4784
        %v4786 = vadd.f32 %v4782, %v4785
        %vm4787 = vweird.f32 %v2876
        %vm4788 = vweird.f32 %v4782
        %vm4789 = vmor %vm4787, %vm4788
        %v4790 = vsel %vm4789, %v4782, %v4786
        %v4791 = vand.u32 2147483647, %v2876
        %vm4792 = vcmp.eq.f32.partialorder %v4791, 8.507059e+37
        %v4793 = vand.u32 %v2876, 2147483648
        %v4794 = vor.u32 1.1754944e-38, %v4793
        %v4795 = vsel %vm4792, %v4794, %v4790
        %v4796 = vmul.f32 %v308, %v4795
        %v4798 = vperm.slane %v309, 0
        %v4800 = vmul.f32 %v2891, %v4798
        %v4801 = vmul.f32 %v2906, %v4798
        %v4802 = vmul.f32 %v2921, %v4798
        %v4803 = vmul.f32 %v2936, %v4798
        %v4804 = vmul.f32 %v2951, %v4798
        %v4805 = vmul.f32 %v2966, %v4798
        %v4806 = vmul.f32 %v2981, %v4798
        %v4807 = vmul.f32 %v2996, %v4798
        %v4808 = vmul.f32 %v3011, %v4798
        %v4809 = vmul.f32 %v3026, %v4798
        %v4810 = vmul.f32 %v3041, %v4798
        %v4811 = vmul.f32 %v3056, %v4798
        %v4812 = vmul.f32 %v3071, %v4798
        %v4813 = vmul.f32 %v3086, %v4798
        %v4814 = vmul.f32 %v3101, %v4798
        %v4815 = vmul.f32 %v3116, %v4798
        %v4816 = vmul.f32 %v3131, %v4798
        %v4817 = vmul.f32 %v3146, %v4798
        %v4818 = vmul.f32 %v3161, %v4798
        %v4819 = vmul.f32 %v3176, %v4798
        %v4820 = vmul.f32 %v3191, %v4798
        %v4821 = vmul.f32 %v3206, %v4798
        %v4822 = vmul.f32 %v3221, %v4798
        %v4823 = vmul.f32 %v3236, %v4798
        %v4824 = vmul.f32 %v3251, %v4798
        %v4825 = vmul.f32 %v3266, %v4798
        %v4826 = vmul.f32 %v3281, %v4798
        %v4827 = vmul.f32 %v3296, %v4798
        %v4828 = vmul.f32 %v3311, %v4798
        %v4829 = vmul.f32 %v3326, %v4798
        %v4830 = vmul.f32 %v3341, %v4798
        %v4831 = vmul.f32 %v3356, %v4798
        %v4832 = vmul.f32 %v3371, %v4798
        %v4833 = vmul.f32 %v3386, %v4798
        %v4834 = vmul.f32 %v3401, %v4798
        %v4835 = vmul.f32 %v3416, %v4798
        %v4836 = vmul.f32 %v3431, %v4798
        %v4837 = vmul.f32 %v3446, %v4798
        %v4838 = vmul.f32 %v3461, %v4798
        %v4839 = vmul.f32 %v3476, %v4798
        %v4840 = vmul.f32 %v3491, %v4798
        %v4841 = vmul.f32 %v3506, %v4798
        %v4842 = vmul.f32 %v3521, %v4798
        %v4843 = vmul.f32 %v3536, %v4798
        %v4844 = vmul.f32 %v3551, %v4798
        %v4845 = vmul.f32 %v3566, %v4798
        %v4846 = vmul.f32 %v3581, %v4798
        %v4847 = vmul.f32 %v3596, %v4798
        %v4848 = vmul.f32 %v3611, %v4798
        %v4849 = vmul.f32 %v3626, %v4798
        %v4850 = vmul.f32 %v3641, %v4798
        %v4851 = vmul.f32 %v3656, %v4798
        %v4852 = vmul.f32 %v3671, %v4798
        %v4853 = vmul.f32 %v3686, %v4798
        %v4854 = vmul.f32 %v3701, %v4798
        %v4855 = vmul.f32 %v3716, %v4798
        %v4856 = vmul.f32 %v3731, %v4798
        %v4857 = vmul.f32 %v3746, %v4798
        %v4858 = vmul.f32 %v3761, %v4798
        %v4859 = vmul.f32 %v3776, %v4798
        %v4860 = vmul.f32 %v3791, %v4798
        %v4861 = vmul.f32 %v3806, %v4798
        %v4862 = vmul.f32 %v3821, %v4798
        %v4863 = vmul.f32 %v3836, %v4798
        %v4864 = vmul.f32 %v3851, %v4798
        %v4865 = vmul.f32 %v3866, %v4798
        %v4866 = vmul.f32 %v3881, %v4798
        %v4867 = vmul.f32 %v3896, %v4798
        %v4868 = vmul.f32 %v3911, %v4798
        %v4869 = vmul.f32 %v3926, %v4798
        %v4870 = vmul.f32 %v3941, %v4798
        %v4871 = vmul.f32 %v3956, %v4798
        %v4872 = vmul.f32 %v3971, %v4798
        %v4873 = vmul.f32 %v3986, %v4798
        %v4874 = vmul.f32 %v4001, %v4798
        %v4875 = vmul.f32 %v4016, %v4798
        %v4876 = vmul.f32 %v4031, %v4798
        %v4877 = vmul.f32 %v4046, %v4798
        %v4878 = vmul.f32 %v4061, %v4798
        %v4879 = vmul.f32 %v4076, %v4798
        %v4880 = vmul.f32 %v4091, %v4798
        %v4881 = vmul.f32 %v4106, %v4798
        %v4882 = vmul.f32 %v4121, %v4798
        %v4883 = vmul.f32 %v4136, %v4798
        %v4884 = vmul.f32 %v4151, %v4798
        %v4885 = vmul.f32 %v4166, %v4798
        %v4886 = vmul.f32 %v4181, %v4798
        %v4887 = vmul.f32 %v4196, %v4798
        %v4888 = vmul.f32 %v4211, %v4798
        %v4889 = vmul.f32 %v4226, %v4798
        %v4890 = vmul.f32 %v4241, %v4798
        %v4891 = vmul.f32 %v4256, %v4798
        %v4892 = vmul.f32 %v4271, %v4798
        %v4893 = vmul.f32 %v4286, %v4798
        %v4894 = vmul.f32 %v4301, %v4798
        %v4895 = vmul.f32 %v4316, %v4798
        %v4896 = vmul.f32 %v4331, %v4798
        %v4897 = vmul.f32 %v4346, %v4798
        %v4898 = vmul.f32 %v4361, %v4798
        %v4899 = vmul.f32 %v4376, %v4798
        %v4900 = vmul.f32 %v4391, %v4798
        %v4901 = vmul.f32 %v4406, %v4798
        %v4902 = vmul.f32 %v4421, %v4798
        %v4903 = vmul.f32 %v4436, %v4798
        %v4904 = vmul.f32 %v4451, %v4798
        %v4905 = vmul.f32 %v4466, %v4798
        %v4906 = vmul.f32 %v4481, %v4798
        %v4907 = vmul.f32 %v4496, %v4798
        %v4908 = vmul.f32 %v4511, %v4798
        %v4909 = vmul.f32 %v4526, %v4798
        %v4910 = vmul.f32 %v4541, %v4798
        %v4911 = vmul.f32 %v4556, %v4798
        %v4912 = vmul.f32 %v4571, %v4798
        %v4913 = vmul.f32 %v4586, %v4798
        %v4914 = vmul.f32 %v4601, %v4798
        %v4915 = vmul.f32 %v4616, %v4798
        %v4916 = vmul.f32 %v4631, %v4798
        %v4917 = vmul.f32 %v4646, %v4798
        %v4918 = vmul.f32 %v4661, %v4798
        %v4919 = vmul.f32 %v4676, %v4798
        %v4920 = vmul.f32 %v4691, %v4798
        %v4921 = vmul.f32 %v4706, %v4798
        %v4922 = vmul.f32 %v4721, %v4798
        %v4923 = vmul.f32 %v4736, %v4798
        %v4924 = vmul.f32 %v4751, %v4798
        %v4925 = vmul.f32 %v4766, %v4798
        %v4926 = vmul.f32 %v4781, %v4798
        %v4927 = vmul.f32 %v4796, %v4798
        %4928 = vst [vmem:[%s178] sm:$0xff] %v4800
        %4929 = vst [vmem:[%s178 + $0x8] sm:$0xff] %v4801
        %4930 = vst [vmem:[%s178 + $0x10] sm:$0xff] %v4802
        %4931 = vst [vmem:[%s178 + $0x18] sm:$0xff] %v4803
        %4932 = vst [vmem:[%s178 + $0x20] sm:$0xff] %v4804
        %4933 = vst [vmem:[%s178 + $0x28] sm:$0xff] %v4805
        %4934 = vst [vmem:[%s178 + $0x30] sm:$0xff] %v4806
        %4935 = vst [vmem:[%s178 + $0x38] sm:$0xff] %v4807
        %4936 = vst [vmem:[%s178 + $0x40] sm:$0xff] %v4808
        %4937 = vst [vmem:[%s178 + $0x48] sm:$0xff] %v4809
        %4938 = vst [vmem:[%s178 + $0x50] sm:$0xff] %v4810
        %4939 = vst [vmem:[%s178 + $0x58] sm:$0xff] %v4811
        %4940 = vst [vmem:[%s178 + $0x60] sm:$0xff] %v4812
        %4941 = vst [vmem:[%s178 + $0x68] sm:$0xff] %v4813
        %4942 = vst [vmem:[%s178 + $0x70] sm:$0xff] %v4814
        %4943 = vst [vmem:[%s178 + $0x78] sm:$0xff] %v4815
        %4944 = vst [vmem:[%s178 + $0x80] sm:$0xff] %v4816
        %4945 = vst [vmem:[%s178 + $0x88] sm:$0xff] %v4817
        %4946 = vst [vmem:[%s178 + $0x90] sm:$0xff] %v4818
        %4947 = vst [vmem:[%s178 + $0x98] sm:$0xff] %v4819
        %4948 = vst [vmem:[%s178 + $0xa0] sm:$0xff] %v4820
        %4949 = vst [vmem:[%s178 + $0xa8] sm:$0xff] %v4821
        %4950 = vst [vmem:[%s178 + $0xb0] sm:$0xff] %v4822
        %4951 = vst [vmem:[%s178 + $0xb8] sm:$0xff] %v4823
        %4952 = vst [vmem:[%s178 + $0xc0] sm:$0xff] %v4824
        %4953 = vst [vmem:[%s178 + $0xc8] sm:$0xff] %v4825
        %4954 = vst [vmem:[%s178 + $0xd0] sm:$0xff] %v4826
        %4955 = vst [vmem:[%s178 + $0xd8] sm:$0xff] %v4827
        %4956 = vst [vmem:[%s178 + $0xe0] sm:$0xff] %v4828
        %4957 = vst [vmem:[%s178 + $0xe8] sm:$0xff] %v4829
        %4958 = vst [vmem:[%s178 + $0xf0] sm:$0xff] %v4830
        %4959 = vst [vmem:[%s178 + $0xf8] sm:$0xff] %v4831
        %4960 = vst [vmem:[%s178 + $0x100] sm:$0xff] %v4832
        %4961 = vst [vmem:[%s178 + $0x108] sm:$0xff] %v4833
        %4962 = vst [vmem:[%s178 + $0x110] sm:$0xff] %v4834
        %4963 = vst [vmem:[%s178 + $0x118] sm:$0xff] %v4835
        %4964 = vst [vmem:[%s178 + $0x120] sm:$0xff] %v4836
        %4965 = vst [vmem:[%s178 + $0x128] sm:$0xff] %v4837
        %4966 = vst [vmem:[%s178 + $0x130] sm:$0xff] %v4838
        %4967 = vst [vmem:[%s178 + $0x138] sm:$0xff] %v4839
        %4968 = vst [vmem:[%s178 + $0x140] sm:$0xff] %v4840
        %4969 = vst [vmem:[%s178 + $0x148] sm:$0xff] %v4841
        %4970 = vst [vmem:[%s178 + $0x150] sm:$0xff] %v4842
        %4971 = vst [vmem:[%s178 + $0x158] sm:$0xff] %v4843
        %4972 = vst [vmem:[%s178 + $0x160] sm:$0xff] %v4844
        %4973 = vst [vmem:[%s178 + $0x168] sm:$0xff] %v4845
        %4974 = vst [vmem:[%s178 + $0x170] sm:$0xff] %v4846
        %4975 = vst [vmem:[%s178 + $0x178] sm:$0xff] %v4847
        %4976 = vst [vmem:[%s178 + $0x180] sm:$0xff] %v4848
        %4977 = vst [vmem:[%s178 + $0x188] sm:$0xff] %v4849
        %4978 = vst [vmem:[%s178 + $0x190] sm:$0xff] %v4850
        %4979 = vst [vmem:[%s178 + $0x198] sm:$0xff] %v4851
        %4980 = vst [vmem:[%s178 + $0x1a0] sm:$0xff] %v4852
        %4981 = vst [vmem:[%s178 + $0x1a8] sm:$0xff] %v4853
        %4982 = vst [vmem:[%s178 + $0x1b0] sm:$0xff] %v4854
        %4983 = vst [vmem:[%s178 + $0x1b8] sm:$0xff] %v4855
        %4984 = vst [vmem:[%s178 + $0x1c0] sm:$0xff] %v4856
        %4985 = vst [vmem:[%s178 + $0x1c8] sm:$0xff] %v4857
        %4986 = vst [vmem:[%s178 + $0x1d0] sm:$0xff] %v4858
        %4987 = vst [vmem:[%s178 + $0x1d8] sm:$0xff] %v4859
        %4988 = vst [vmem:[%s178 + $0x1e0] sm:$0xff] %v4860
        %4989 = vst [vmem:[%s178 + $0x1e8] sm:$0xff] %v4861
        %4990 = vst [vmem:[%s178 + $0x1f0] sm:$0xff] %v4862
        %4991 = vst [vmem:[%s178 + $0x1f8] sm:$0xff] %v4863
        %4992 = vst [vmem:[%s178 + $0x200] sm:$0xff] %v4864
        %4993 = vst [vmem:[%s178 + $0x208] sm:$0xff] %v4865
        %4994 = vst [vmem:[%s178 + $0x210] sm:$0xff] %v4866
        %4995 = vst [vmem:[%s178 + $0x218] sm:$0xff] %v4867
        %4996 = vst [vmem:[%s178 + $0x220] sm:$0xff] %v4868
        %4997 = vst [vmem:[%s178 + $0x228] sm:$0xff] %v4869
        %4998 = vst [vmem:[%s178 + $0x230] sm:$0xff] %v4870
        %4999 = vst [vmem:[%s178 + $0x238] sm:$0xff] %v4871
        %5000 = vst [vmem:[%s178 + $0x240] sm:$0xff] %v4872
        %5001 = vst [vmem:[%s178 + $0x248] sm:$0xff] %v4873
        %5002 = vst [vmem:[%s178 + $0x250] sm:$0xff] %v4874
        %5003 = vst [vmem:[%s178 + $0x258] sm:$0xff] %v4875
        %5004 = vst [vmem:[%s178 + $0x260] sm:$0xff] %v4876
        %5005 = vst [vmem:[%s178 + $0x268] sm:$0xff] %v4877
        %5006 = vst [vmem:[%s178 + $0x270] sm:$0xff] %v4878
        %5007 = vst [vmem:[%s178 + $0x278] sm:$0xff] %v4879
        %5008 = vst [vmem:[%s178 + $0x280] sm:$0xff] %v4880
        %5009 = vst [vmem:[%s178 + $0x288] sm:$0xff] %v4881
        %5010 = vst [vmem:[%s178 + $0x290] sm:$0xff] %v4882
        %5011 = vst [vmem:[%s178 + $0x298] sm:$0xff] %v4883
        %5012 = vst [vmem:[%s178 + $0x2a0] sm:$0xff] %v4884
        %5013 = vst [vmem:[%s178 + $0x2a8] sm:$0xff] %v4885
        %5014 = vst [vmem:[%s178 + $0x2b0] sm:$0xff] %v4886
        %5015 = vst [vmem:[%s178 + $0x2b8] sm:$0xff] %v4887
        %5016 = vst [vmem:[%s178 + $0x2c0] sm:$0xff] %v4888
        %5017 = vst [vmem:[%s178 + $0x2c8] sm:$0xff] %v4889
        %5018 = vst [vmem:[%s178 + $0x2d0] sm:$0xff] %v4890
        %5019 = vst [vmem:[%s178 + $0x2d8] sm:$0xff] %v4891
        %5020 = vst [vmem:[%s178 + $0x2e0] sm:$0xff] %v4892
        %5021 = vst [vmem:[%s178 + $0x2e8] sm:$0xff] %v4893
        %5022 = vst [vmem:[%s178 + $0x2f0] sm:$0xff] %v4894
        %5023 = vst [vmem:[%s178 + $0x2f8] sm:$0xff] %v4895
        %5024 = vst [vmem:[%s178 + $0x300] sm:$0xff] %v4896
        %5025 = vst [vmem:[%s178 + $0x308] sm:$0xff] %v4897
        %5026 = vst [vmem:[%s178 + $0x310] sm:$0xff] %v4898
        %5027 = vst [vmem:[%s178 + $0x318] sm:$0xff] %v4899
        %5028 = vst [vmem:[%s178 + $0x320] sm:$0xff] %v4900
        %5029 = vst [vmem:[%s178 + $0x328] sm:$0xff] %v4901
        %5030 = vst [vmem:[%s178 + $0x330] sm:$0xff] %v4902
        %5031 = vst [vmem:[%s178 + $0x338] sm:$0xff] %v4903
        %5032 = vst [vmem:[%s178 + $0x340] sm:$0xff] %v4904
        %5033 = vst [vmem:[%s178 + $0x348] sm:$0xff] %v4905
        %5034 = vst [vmem:[%s178 + $0x350] sm:$0xff] %v4906
        %5035 = vst [vmem:[%s178 + $0x358] sm:$0xff] %v4907
        %5036 = vst [vmem:[%s178 + $0x360] sm:$0xff] %v4908
        %5037 = vst [vmem:[%s178 + $0x368] sm:$0xff] %v4909
        %5038 = vst [vmem:[%s178 + $0x370] sm:$0xff] %v4910
        %5039 = vst [vmem:[%s178 + $0x378] sm:$0xff] %v4911
        %5040 = vst [vmem:[%s178 + $0x380] sm:$0xff] %v4912
        %5041 = vst [vmem:[%s178 + $0x388] sm:$0xff] %v4913
        %5042 = vst [vmem:[%s178 + $0x390] sm:$0xff] %v4914
        %5043 = vst [vmem:[%s178 + $0x398] sm:$0xff] %v4915
        %5044 = vst [vmem:[%s178 + $0x3a0] sm:$0xff] %v4916
        %5045 = vst [vmem:[%s178 + $0x3a8] sm:$0xff] %v4917
        %5046 = vst [vmem:[%s178 + $0x3b0] sm:$0xff] %v4918
        %5047 = vst [vmem:[%s178 + $0x3b8] sm:$0xff] %v4919
        %5048 = vst [vmem:[%s178 + $0x3c0] sm:$0xff] %v4920
        %5049 = vst [vmem:[%s178 + $0x3c8] sm:$0xff] %v4921
        %5050 = vst [vmem:[%s178 + $0x3d0] sm:$0xff] %v4922
        %5051 = vst [vmem:[%s178 + $0x3d8] sm:$0xff] %v4923
        %5052 = vst [vmem:[%s178 + $0x3e0] sm:$0xff] %v4924
        %5053 = vst [vmem:[%s178 + $0x3e8] sm:$0xff] %v4925
        %5054 = vst [vmem:[%s178 + $0x3f0] sm:$0xff] %v4926
        %5055 = vst [vmem:[%s178 + $0x3f8] sm:$0xff] %v4927
        %s5056 = sand.u32 %s75, 1
        %s5057 = scalar_lea.sflag [#allocation4], %s5056
        %s5058 = sand.u32 %s75, 1
        %s5059 = smul.addr %s5058, 1024
        %s5060 = scalar_lea.vmem [#allocation7], %s5059
        // Predicated region
        $region37: #{tpu_custom_call.1} parent=27 // pred_check
          %p5061 = pneg %p85
        $region38: #{tpu_custom_call.1} parent=27 // pred_check_branch
          %5063 = sbr.rel (%p5061) target = $region40
        $region39: #{tpu_custom_call.1} parent=27 // pred_region
          %s5064 = smul.u32 128, %s20
          %5066 = vsyncadd %s5057, 0
          %s5067 = smul.addr %s5064, 8
          %s5068 = scalar_lea.hbm %s2, %s5067
          %s5069 = sshll.u32 %s5060, 4
          %s5070 = int_to_ptr.vmem [resolvable:$true] %s5069
          %s5071 = sshll.u32 %s5068, 4
          %s5072 = int_to_ptr.hbm [resolvable:$true] %s5071
          %5077 = dma.vmem_to_hbm [thread:$0]  %s5070, 16384, %s5072, %s5057, 128, 128, 8
        $region40: #{tpu_custom_call.1} parent=27 // pred_fallthru
          _
      $region28: #{tpu_custom_call.1} parent=5 // pred_fallthru
        _
      %p5078 = scmp.le.s32.totalorder 2, %s15
      // Predicated region
      $region41: #{tpu_custom_call.1} parent=5 // pred_check
        %p5079 = pneg %p5078
      $region42: #{tpu_custom_call.1} parent=5 // pred_check_branch
        %5081 = sbr.rel (%p5079) target = $region44
      $region43: #{tpu_custom_call.1} parent=5 // pred_region
        %s5082 = ssub.s32 %s15, 2
        // Predicated region
        $region45: #{tpu_custom_call.1} parent=43 // pred_check
          %p5083 = pneg %p91
        $region46: #{tpu_custom_call.1} parent=43 // pred_check_branch
          %5085 = sbr.rel (%p5083) target = $region48
        $region47: #{tpu_custom_call.1} parent=43 // pred_region
          %s5086 = sand.u32 %s76, 1
          %s5087 = scalar_lea.sflag [#allocation4], %s5086
          %s5088 = sand.u32 %s76, 1
          %s5089 = smul.addr %s5088, 1024
          %s5090 = scalar_lea.vmem [#allocation7], %s5089
          %5092 = dma.done %s5087, 16384
        $region48: #{tpu_custom_call.1} parent=43 // pred_fallthru
          _
      $region44: #{tpu_custom_call.1} parent=5 // pred_fallthru
        _
    $region6: #{tpu_custom_call.1} parent=1 // loop_footer
      %s19 = sadd.s32 1, %s15
    $region7: #{tpu_custom_call.1} parent=1 // loop_footer_branch
      %14 = sbr.rel target = $region3
    $region8: #{tpu_custom_call.1} parent=1 // loop_exit
      _
    %5093 = vsyncpa [#allocation3], 1
    %s5094 = scalar_lea.sflag [#allocation3], 1
    %5095 = vsyncpa %s5094, 1
    %5096 = vsyncpa [#allocation6], 1
    %5097 = vsyncpa [#allocation4], 1
    %s5098 = scalar_lea.sflag [#allocation4], 1
    %5099 = vsyncpa %s5098, 1

</llo_original>
